<compile_context>
chip_gen: v7x
topology: tpu7x:2x2x1
jax: 0.10.0
libtpu: 0.0.40
codegen_flags: <defaults>
</compile_context>

<pallas_src>
import functools

import jax
import jax.numpy as jnp
from jax.experimental import pallas as pl
from jax.experimental.pallas import tpu as pltpu

# ---- small model config (structure mirrors DistilBERT, sizes shrunk) ----
VOCAB = 100
MAX_POS = 16
HIDDEN = 64
N_HEADS = 4
D_HEAD = HIDDEN // N_HEADS
N_LAYERS = 2
FFN = 128
NUM_LABELS = 4
LORA_R = 8
LORA_ALPHA = 32
LORA_SCALING = float(LORA_ALPHA) / float(LORA_R)   # = 4.0
LN_EPS = 1e-12
MASK_NEG = -1e9            # finite even in bf16; avoids -inf - -inf = NaN on masked rows
MXU_DTYPE = jnp.bfloat16   # MXU operand dtype; accumulation stays f32

_VMEM = pl.BlockSpec(memory_space=pltpu.MemorySpace.VMEM)


# --------------------------- in-kernel helpers ---------------------------

def _mm(a, b):
    """(M,K)@(K,N) with bf16 MXU operands and f32 accumulation."""
    return jnp.dot(a.astype(MXU_DTYPE), b.astype(MXU_DTYPE),
                   preferred_element_type=jnp.float32)


def _mm_nt(a, b):
    """a @ b.T (contract last dims of both), bf16 operands, f32 accumulation."""
    return jax.lax.dot_general(
        a.astype(MXU_DTYPE), b.astype(MXU_DTYPE),
        (((1,), (1,)), ((), ())), preferred_element_type=jnp.float32)


def _layernorm(z, g, b, eps=LN_EPS):
    mu = jnp.mean(z, axis=-1, keepdims=True)
    zc = z - mu
    var = jnp.mean(zc * zc, axis=-1, keepdims=True)
    return zc * jax.lax.rsqrt(var + eps) * g + b


def _gelu(h):
    # TODO(synk): HF DistilBERT uses the exact erf GELU; tanh approximation keeps
    # transcendentals on the EUP (difference ~1e-3 relative).
    return 0.5 * h * (1.0 + jnp.tanh(0.7978845608028654 * (h + 0.044715 * h * h * h)))


# --------------------------- fused forward kernel ---------------------------

def _fused_forward_kernel(
        we_ref, pe_ref, mask_ref, emb_g_ref, emb_b_ref,
        qkv_w_ref, qkv_b_ref, o_w_ref, o_b_ref, sa_g_ref, sa_b_ref,
        ff1_w_ref, ff1_b_ref, ff2_w_ref, ff2_b_ref,
        out_g_ref, out_b_ref, cls_w_ref, cls_b_ref,
        logits_ref, *, batch, seq):
    H, D = HIDDEN, D_HEAD

    # Embeddings: word-emb gather result + broadcast positional rows, then LN.
    pe = pe_ref[...]                                            # (S, H)
    x = we_ref[...] + jnp.concatenate([pe] * batch, axis=0)     # (B*S, H)
    x = _layernorm(x, emb_g_ref[...], emb_b_ref[...])
    mask_bias = mask_ref[...]                                   # (B, S) additive bias
    # embedding / attention / ffn / classifier dropouts: eval mode -> identity

    for l in range(N_LAYERS):                                   # unrolled at trace time
        resid = x

        # Fused q/k/v projection. LoRA (scaling * B@A) and the 1/sqrt(d_head)
        # query scale are pre-merged into qkv_w / qkv_b on the host.
        qkv = _mm(x, qkv_w_ref[l]) + qkv_b_ref[l]               # (B*S, 3H) f32

        # Head column-slices hoisted out of the batch loop (4 lane slices/layer).
        q_h = [qkv[:, h * D:(h + 1) * D] for h in range(N_HEADS)]
        k_h = [qkv[:, H + h * D:H + (h + 1) * D] for h in range(N_HEADS)]
        v_h = [qkv[:, 2 * H + h * D:2 * H + (h + 1) * D] for h in range(N_HEADS)]

        # Attention: per-batch row slices are sublane aligned (seq == 8); per-head
        # contexts stay in vregs and are concatenated -> no scratch round-trip.
        ctx_rows = []
        for b in range(batch):
            r0 = b * seq
            bias_b = mask_bias[b:b + 1, :]                      # (1, S)
            ctx_heads = []
            for h in range(N_HEADS):
                qbh = q_h[h][r0:r0 + seq, :]                    # (S, D)
                kbh = k_h[h][r0:r0 + seq, :]
                vbh = v_h[h][r0:r0 + seq, :]
                scores = _mm_nt(qbh, kbh) + bias_b              # (S, S) f32
                m = jnp.max(scores, axis=-1, keepdims=True)
                e = jnp.exp(scores - m)
                p = e * pl.reciprocal(jnp.sum(e, axis=-1, keepdims=True), approx=True)
                ctx_heads.append(_mm(p, vbh))                   # (S, D)
            ctx_rows.append(jnp.concatenate(ctx_heads, axis=-1))   # (S, H)
        ctx = jnp.concatenate(ctx_rows, axis=0)                 # (B*S, H)

        attn_out = _mm(ctx, o_w_ref[l]) + o_b_ref[l]
        x = _layernorm(attn_out + resid, sa_g_ref[l], sa_b_ref[l])

        h1 = _gelu(_mm(x, ff1_w_ref[l]) + ff1_b_ref[l])
        ff = _mm(h1, ff2_w_ref[l]) + ff2_b_ref[l]
        x = _layernorm(ff + x, out_g_ref[l], out_b_ref[l])

    # CLS pooling + classifier: gather the B CLS rows, one matmul, one store.
    # TODO(synk): pad NUM_LABELS lane dim to 128 if output writeback ever matters.
    cls_rows = jnp.concatenate(
        [x[b * seq:b * seq + 1, :] for b in range(batch)], axis=0)   # (B, H)
    logits_ref[...] = _mm(cls_rows, cls_w_ref[...]) + cls_b_ref[...]


# --------------------------- parameters ---------------------------

def init_params(key):
    def nrm(k, shape, scale=0.02):
        return scale * jax.random.normal(k, shape, dtype=jnp.float32)

    keys = jax.random.split(key, 4 + N_LAYERS)
    params = {
        'word_emb': nrm(keys[0], (VOCAB, HIDDEN)),
        'pos_emb': nrm(keys[1], (MAX_POS, HIDDEN)),
        'emb_ln_g': jnp.ones((HIDDEN,), jnp.float32),
        'emb_ln_b': jnp.zeros((HIDDEN,), jnp.float32),
        'cls_w': nrm(keys[2], (NUM_LABELS, HIDDEN)),
        'cls_b': jnp.zeros((NUM_LABELS,), jnp.float32),
        'layers': [],
    }
    for l in range(N_LAYERS):
        lk = jax.random.split(keys[4 + l], 12)
        # NOTE: PEFT initializes lora_B to zeros; nonzero here so the LoRA path
        # actually contributes and is exercised.
        layer = {
            'q_w': nrm(lk[0], (HIDDEN, HIDDEN)), 'q_b': jnp.zeros((HIDDEN,), jnp.float32),
            'q_A': nrm(lk[1], (LORA_R, HIDDEN)), 'q_B': nrm(lk[2], (HIDDEN, LORA_R)),
            'k_w': nrm(lk[3], (HIDDEN, HIDDEN)), 'k_b': jnp.zeros((HIDDEN,), jnp.float32),
            'k_A': nrm(lk[4], (LORA_R, HIDDEN)), 'k_B': nrm(lk[5], (HIDDEN, LORA_R)),
            'v_w': nrm(lk[6], (HIDDEN, HIDDEN)), 'v_b': jnp.zeros((HIDDEN,), jnp.float32),
            'v_A': nrm(lk[7], (LORA_R, HIDDEN)), 'v_B': nrm(lk[8], (HIDDEN, LORA_R)),
            'o_w': nrm(lk[9], (HIDDEN, HIDDEN)), 'o_b': jnp.zeros((HIDDEN,), jnp.float32),
            'sa_ln_g': jnp.ones((HIDDEN,), jnp.float32),
            'sa_ln_b': jnp.zeros((HIDDEN,), jnp.float32),
            'ff1_w': nrm(lk[10], (FFN, HIDDEN)), 'ff1_b': jnp.zeros((FFN,), jnp.float32),
            'ff2_w': nrm(lk[11], (HIDDEN, FFN)), 'ff2_b': jnp.zeros((HIDDEN,), jnp.float32),
            'out_ln_g': jnp.ones((HIDDEN,), jnp.float32),
            'out_ln_b': jnp.zeros((HIDDEN,), jnp.float32),
        }
        params['layers'].append(layer)
    return params


def pack_params(params):
    """One-time host-side packing:
      * merge LoRA (eval mode: W_eff = W + scaling * B@A) into q/k/v weights,
      * fold the 1/sqrt(d_head) query scale into the q block,
      * pre-transpose so every in-kernel matmul is (M,K)@(K,N),
      * fuse q/k/v into one (H, 3H) matrix, stack per-layer tensors,
      * cast matmul weights to bf16 (biases / LN params stay f32)."""
    q_scale = 1.0 / (D_HEAD ** 0.5)

    def merged_t(layer, prefix, scale=1.0):
        w_eff = layer[prefix + '_w'] + LORA_SCALING * (layer[prefix + '_B'] @ layer[prefix + '_A'])
        return (w_eff.T * scale).astype(MXU_DTYPE)

    def stack(fn):
        return jnp.stack([fn(layer) for layer in params['layers']], axis=0)

    def qkv_w_t(layer):
        return jnp.concatenate([merged_t(layer, 'q', q_scale),
                                merged_t(layer, 'k'),
                                merged_t(layer, 'v')], axis=1)          # (H, 3H) bf16

    def qkv_b(layer):
        return jnp.concatenate([layer['q_b'] * q_scale,
                                layer['k_b'], layer['v_b']])[None, :]   # (1, 3H) f32

    return {
        'word_emb': params['word_emb'],
        'pos_emb': params['pos_emb'],
        'emb_ln_g': params['emb_ln_g'][None, :],
        'emb_ln_b': params['emb_ln_b'][None, :],
        'qkv_w': stack(qkv_w_t),                              # (L, H, 3H) bf16
        'qkv_b': stack(qkv_b),                                # (L, 1, 3H) f32
        'o_w': stack(lambda l: l['o_w'].T.astype(MXU_DTYPE)),
        'o_b': stack(lambda l: l['o_b'][None, :]),
        'sa_g': stack(lambda l: l['sa_ln_g'][None, :]),
        'sa_b': stack(lambda l: l['sa_ln_b'][None, :]),
        'ff1_w': stack(lambda l: l['ff1_w'].T.astype(MXU_DTYPE)),
        'ff1_b': stack(lambda l: l['ff1_b'][None, :]),
        'ff2_w': stack(lambda l: l['ff2_w'].T.astype(MXU_DTYPE)),
        'ff2_b': stack(lambda l: l['ff2_b'][None, :]),
        'out_g': stack(lambda l: l['out_ln_g'][None, :]),
        'out_b': stack(lambda l: l['out_ln_b'][None, :]),
        'cls_w': params['cls_w'].T.astype(MXU_DTYPE),          # (H, NUM_LABELS)
        'cls_b': params['cls_b'][None, :],                     # (1, NUM_LABELS)
    }


# --------------------------- forward pass ---------------------------

def forward(packed, input_ids, attention_mask):
    B, S = input_ids.shape
    H = HIDDEN

    # TODO(synk): the embedding-table gather has no tidy in-kernel equivalent at
    # this size; it stays in plain JAX, everything downstream is one fused kernel.
    we = packed['word_emb'][input_ids].reshape(B * S, H)        # (B*S, H)
    pe = packed['pos_emb'][:S]                                  # (S, H)
    mask_bias = jnp.where(attention_mask == 0, MASK_NEG, 0.0).astype(jnp.float32)

    kern = functools.partial(_fused_forward_kernel, batch=B, seq=S)
    return pl.pallas_call(
        kern,
        out_shape=jax.ShapeDtypeStruct((B, NUM_LABELS), jnp.float32),
        in_specs=[_VMEM] * 19,
        out_specs=_VMEM,
    )(we, pe, mask_bias, packed['emb_ln_g'], packed['emb_ln_b'],
      packed['qkv_w'], packed['qkv_b'], packed['o_w'], packed['o_b'],
      packed['sa_g'], packed['sa_b'], packed['ff1_w'], packed['ff1_b'],
      packed['ff2_w'], packed['ff2_b'], packed['out_g'], packed['out_b'],
      packed['cls_w'], packed['cls_b'])


if __name__ == "__main__":
    key = jax.random.PRNGKey(0)
    pkey, dkey = jax.random.split(key)
    params = init_params(pkey)
    packed = pack_params(params)          # merge LoRA / pre-transpose / fuse once

    B, S = 2, 8
    input_ids = jax.random.randint(dkey, (B, S), 0, VOCAB, dtype=jnp.int32)
    attention_mask = jnp.ones((B, S), dtype=jnp.int32)

    logits = jax.jit(forward)(packed, input_ids, attention_mask)
    jax.block_until_ready(logits)
    assert logits.shape == (B, NUM_LABELS)
    assert bool(jnp.all(jnp.isfinite(logits)))
    print("KERNEL_OK")
</pallas_src>

<mosaic_0001>
module attributes {stable_mosaic.version = 11 : i64} {
  func.func @_fused_forward_kernel(%arg0: memref<16x64xf32, #tpu.memory_space<vmem>>, %arg1: memref<8x64xf32, #tpu.memory_space<vmem>>, %arg2: memref<2x8xf32, #tpu.memory_space<vmem>>, %arg3: memref<1x64xf32, #tpu.memory_space<vmem>>, %arg4: memref<1x64xf32, #tpu.memory_space<vmem>>, %arg5: memref<2x64x192xbf16, #tpu.memory_space<vmem>>, %arg6: memref<2x1x192xf32, #tpu.memory_space<vmem>>, %arg7: memref<2x64x64xbf16, #tpu.memory_space<vmem>>, %arg8: memref<2x1x64xf32, #tpu.memory_space<vmem>>, %arg9: memref<2x1x64xf32, #tpu.memory_space<vmem>>, %arg10: memref<2x1x64xf32, #tpu.memory_space<vmem>>, %arg11: memref<2x64x128xbf16, #tpu.memory_space<vmem>>, %arg12: memref<2x1x128xf32, #tpu.memory_space<vmem>>, %arg13: memref<2x128x64xbf16, #tpu.memory_space<vmem>>, %arg14: memref<2x1x64xf32, #tpu.memory_space<vmem>>, %arg15: memref<2x1x64xf32, #tpu.memory_space<vmem>>, %arg16: memref<2x1x64xf32, #tpu.memory_space<vmem>>, %arg17: memref<64x4xbf16, #tpu.memory_space<vmem>>, %arg18: memref<1x4xf32, #tpu.memory_space<vmem>>, %arg19: memref<2x4xf32, #tpu.memory_space<vmem>>) attributes {dimension_semantics = [], scalar_prefetch = 0 : i64, scratch_operands = 0 : i64, tpu.core_type = #tpu.core_type<tc>} {
    %c0 = arith.constant 0 : index
    %c0_0 = arith.constant 0 : index
    %0 = vector.load %arg1[%c0, %c0_0] : memref<8x64xf32, #tpu.memory_space<vmem>>, vector<8x64xf32>
    %c0_1 = arith.constant 0 : index
    %c0_2 = arith.constant 0 : index
    %1 = vector.load %arg0[%c0_1, %c0_2] : memref<16x64xf32, #tpu.memory_space<vmem>>, vector<16x64xf32>
    %2 = tpu.concatenate %0, %0 in 0 : vector<8x64xf32>, vector<8x64xf32> -> vector<16x64xf32>
    %3 = arith.addf %1, %2 : vector<16x64xf32>
    %c0_3 = arith.constant 0 : index
    %c0_4 = arith.constant 0 : index
    %4 = vector.load %arg3[%c0_3, %c0_4] : memref<1x64xf32, #tpu.memory_space<vmem>>, vector<1x64xf32>
    %c0_5 = arith.constant 0 : index
    %c0_6 = arith.constant 0 : index
    %5 = vector.load %arg4[%c0_5, %c0_6] : memref<1x64xf32, #tpu.memory_space<vmem>>, vector<1x64xf32>
    %cst = arith.constant dense<0.000000e+00> : vector<16xf32>
    %6 = vector.multi_reduction <add>, %3, %cst [1] : vector<16x64xf32> to vector<16xf32>
    %7 = vector.shape_cast %6 : vector<16xf32> to vector<16x1xf32>
    %cst_7 = arith.constant 6.400000e+01 : f32
    %8 = vector.broadcast %cst_7 : f32 to vector<16x1xf32>
    %9 = arith.divf %7, %8 : vector<16x1xf32>
    %10 = vector.broadcast %9 : vector<16x1xf32> to vector<16x64xf32>
    %11 = arith.subf %3, %10 : vector<16x64xf32>
    %12 = arith.mulf %11, %11 : vector<16x64xf32>
    %cst_8 = arith.constant dense<0.000000e+00> : vector<16xf32>
    %13 = vector.multi_reduction <add>, %12, %cst_8 [1] : vector<16x64xf32> to vector<16xf32>
    %14 = vector.shape_cast %13 : vector<16xf32> to vector<16x1xf32>
    %cst_9 = arith.constant 6.400000e+01 : f32
    %15 = vector.broadcast %cst_9 : f32 to vector<16x1xf32>
    %16 = arith.divf %14, %15 : vector<16x1xf32>
    %cst_10 = arith.constant 9.99999996E-13 : f32
    %17 = vector.broadcast %cst_10 : f32 to vector<16x1xf32>
    %18 = arith.addf %16, %17 : vector<16x1xf32>
    %19 = math.rsqrt %18 : vector<16x1xf32>
    %20 = vector.broadcast %19 : vector<16x1xf32> to vector<16x64xf32>
    %21 = arith.mulf %11, %20 : vector<16x64xf32>
    %22 = vector.broadcast %4 : vector<1x64xf32> to vector<16x64xf32>
    %23 = arith.mulf %21, %22 : vector<16x64xf32>
    %24 = vector.broadcast %5 : vector<1x64xf32> to vector<16x64xf32>
    %25 = arith.addf %23, %24 : vector<16x64xf32>
    %c0_11 = arith.constant 0 : index
    %c0_12 = arith.constant 0 : index
    %26 = vector.load %arg2[%c0_11, %c0_12] : memref<2x8xf32, #tpu.memory_space<vmem>>, vector<2x8xf32>
    %c0_13 = arith.constant 0 : index
    %c0_14 = arith.constant 0 : index
    %c0_15 = arith.constant 0 : index
    %27 = vector.load %arg5[%c0_13, %c0_14, %c0_15] : memref<2x64x192xbf16, #tpu.memory_space<vmem>>, vector<1x64x192xbf16>
    %28 = vector.shape_cast %27 : vector<1x64x192xbf16> to vector<64x192xbf16>
    %29 = arith.truncf %25 : vector<16x64xf32> to vector<16x64xbf16>
    %cst_16 = arith.constant dense<0.000000e+00> : vector<16x192xf32>
    %30 = tpu.matmul %29, %28, %cst_16 {dimension_numbers = #tpu.dot_dimension_numbers<[1], [0], [0], [1], [0, 0, 1, 1], [], []>} : vector<16x64xbf16>, vector<64x192xbf16>, vector<16x192xf32> -> vector<16x192xf32>
    %c0_17 = arith.constant 0 : index
    %c0_18 = arith.constant 0 : index
    %c0_19 = arith.constant 0 : index
    %31 = vector.load %arg6[%c0_17, %c0_18, %c0_19] : memref<2x1x192xf32, #tpu.memory_space<vmem>>, vector<1x1x192xf32>
    %32 = vector.shape_cast %31 : vector<1x1x192xf32> to vector<1x192xf32>
    %33 = vector.broadcast %32 : vector<1x192xf32> to vector<16x192xf32>
    %34 = arith.addf %30, %33 : vector<16x192xf32>
    %35 = vector.extract_strided_slice %34 {offsets = [0, 0], sizes = [16, 16], strides = [1, 1]} : vector<16x192xf32> to vector<16x16xf32>
    %36 = vector.extract_strided_slice %34 {offsets = [0, 16], sizes = [16, 16], strides = [1, 1]} : vector<16x192xf32> to vector<16x16xf32>
    %37 = vector.extract_strided_slice %34 {offsets = [0, 32], sizes = [16, 16], strides = [1, 1]} : vector<16x192xf32> to vector<16x16xf32>
    %38 = vector.extract_strided_slice %34 {offsets = [0, 48], sizes = [16, 16], strides = [1, 1]} : vector<16x192xf32> to vector<16x16xf32>
    %39 = vector.extract_strided_slice %34 {offsets = [0, 64], sizes = [16, 16], strides = [1, 1]} : vector<16x192xf32> to vector<16x16xf32>
    %40 = vector.extract_strided_slice %34 {offsets = [0, 80], sizes = [16, 16], strides = [1, 1]} : vector<16x192xf32> to vector<16x16xf32>
    %41 = vector.extract_strided_slice %34 {offsets = [0, 96], sizes = [16, 16], strides = [1, 1]} : vector<16x192xf32> to vector<16x16xf32>
    %42 = vector.extract_strided_slice %34 {offsets = [0, 112], sizes = [16, 16], strides = [1, 1]} : vector<16x192xf32> to vector<16x16xf32>
    %43 = vector.extract_strided_slice %34 {offsets = [0, 128], sizes = [16, 16], strides = [1, 1]} : vector<16x192xf32> to vector<16x16xf32>
    %44 = vector.extract_strided_slice %34 {offsets = [0, 144], sizes = [16, 16], strides = [1, 1]} : vector<16x192xf32> to vector<16x16xf32>
    %45 = vector.extract_strided_slice %34 {offsets = [0, 160], sizes = [16, 16], strides = [1, 1]} : vector<16x192xf32> to vector<16x16xf32>
    %46 = vector.extract_strided_slice %34 {offsets = [0, 176], sizes = [16, 16], strides = [1, 1]} : vector<16x192xf32> to vector<16x16xf32>
    %47 = vector.extract_strided_slice %26 {offsets = [0, 0], sizes = [1, 8], strides = [1, 1]} : vector<2x8xf32> to vector<1x8xf32>
    %48 = vector.extract_strided_slice %35 {offsets = [0, 0], sizes = [8, 16], strides = [1, 1]} : vector<16x16xf32> to vector<8x16xf32>
    %49 = vector.extract_strided_slice %39 {offsets = [0, 0], sizes = [8, 16], strides = [1, 1]} : vector<16x16xf32> to vector<8x16xf32>
    %50 = vector.extract_strided_slice %43 {offsets = [0, 0], sizes = [8, 16], strides = [1, 1]} : vector<16x16xf32> to vector<8x16xf32>
    %51 = arith.truncf %48 : vector<8x16xf32> to vector<8x16xbf16>
    %52 = arith.truncf %49 : vector<8x16xf32> to vector<8x16xbf16>
    %cst_20 = arith.constant dense<0.000000e+00> : vector<8x8xf32>
    %53 = tpu.matmul %51, %52, %cst_20 {dimension_numbers = #tpu.dot_dimension_numbers<[1], [1], [0], [0], [0, 0, 1, 0], [], []>} : vector<8x16xbf16>, vector<8x16xbf16>, vector<8x8xf32> -> vector<8x8xf32>
    %54 = vector.broadcast %47 : vector<1x8xf32> to vector<8x8xf32>
    %55 = arith.addf %53, %54 : vector<8x8xf32>
    %cst_21 = arith.constant dense<0xFF800000> : vector<8xf32>
    %56 = vector.multi_reduction <maximumf>, %55, %cst_21 [1] : vector<8x8xf32> to vector<8xf32>
    %57 = vector.shape_cast %56 : vector<8xf32> to vector<8x1xf32>
    %58 = vector.broadcast %57 : vector<8x1xf32> to vector<8x8xf32>
    %59 = arith.subf %55, %58 : vector<8x8xf32>
    %60 = math.exp %59 : vector<8x8xf32>
    %cst_22 = arith.constant dense<0.000000e+00> : vector<8xf32>
    %61 = vector.multi_reduction <add>, %60, %cst_22 [1] : vector<8x8xf32> to vector<8xf32>
    %62 = vector.shape_cast %61 : vector<8xf32> to vector<8x1xf32>
    %63 = tpu.reciprocal %62 {approx = true} : vector<8x1xf32> -> vector<8x1xf32>
    %64 = vector.broadcast %63 : vector<8x1xf32> to vector<8x8xf32>
    %65 = arith.mulf %60, %64 : vector<8x8xf32>
    %66 = arith.truncf %65 : vector<8x8xf32> to vector<8x8xbf16>
    %67 = arith.truncf %50 : vector<8x16xf32> to vector<8x16xbf16>
    %cst_23 = arith.constant dense<0.000000e+00> : vector<8x16xf32>
    %68 = tpu.matmul %66, %67, %cst_23 {dimension_numbers = #tpu.dot_dimension_numbers<[1], [0], [0], [1], [0, 0, 1, 1], [], []>} : vector<8x8xbf16>, vector<8x16xbf16>, vector<8x16xf32> -> vector<8x16xf32>
    %69 = vector.extract_strided_slice %36 {offsets = [0, 0], sizes = [8, 16], strides = [1, 1]} : vector<16x16xf32> to vector<8x16xf32>
    %70 = vector.extract_strided_slice %40 {offsets = [0, 0], sizes = [8, 16], strides = [1, 1]} : vector<16x16xf32> to vector<8x16xf32>
    %71 = vector.extract_strided_slice %44 {offsets = [0, 0], sizes = [8, 16], strides = [1, 1]} : vector<16x16xf32> to vector<8x16xf32>
    %72 = arith.truncf %69 : vector<8x16xf32> to vector<8x16xbf16>
    %73 = arith.truncf %70 : vector<8x16xf32> to vector<8x16xbf16>
    %cst_24 = arith.constant dense<0.000000e+00> : vector<8x8xf32>
    %74 = tpu.matmul %72, %73, %cst_24 {dimension_numbers = #tpu.dot_dimension_numbers<[1], [1], [0], [0], [0, 0, 1, 0], [], []>} : vector<8x16xbf16>, vector<8x16xbf16>, vector<8x8xf32> -> vector<8x8xf32>
    %75 = vector.broadcast %47 : vector<1x8xf32> to vector<8x8xf32>
    %76 = arith.addf %74, %75 : vector<8x8xf32>
    %cst_25 = arith.constant dense<0xFF800000> : vector<8xf32>
    %77 = vector.multi_reduction <maximumf>, %76, %cst_25 [1] : vector<8x8xf32> to vector<8xf32>
    %78 = vector.shape_cast %77 : vector<8xf32> to vector<8x1xf32>
    %79 = vector.broadcast %78 : vector<8x1xf32> to vector<8x8xf32>
    %80 = arith.subf %76, %79 : vector<8x8xf32>
    %81 = math.exp %80 : vector<8x8xf32>
    %cst_26 = arith.constant dense<0.000000e+00> : vector<8xf32>
    %82 = vector.multi_reduction <add>, %81, %cst_26 [1] : vector<8x8xf32> to vector<8xf32>
    %83 = vector.shape_cast %82 : vector<8xf32> to vector<8x1xf32>
    %84 = tpu.reciprocal %83 {approx = true} : vector<8x1xf32> -> vector<8x1xf32>
    %85 = vector.broadcast %84 : vector<8x1xf32> to vector<8x8xf32>
    %86 = arith.mulf %81, %85 : vector<8x8xf32>
    %87 = arith.truncf %86 : vector<8x8xf32> to vector<8x8xbf16>
    %88 = arith.truncf %71 : vector<8x16xf32> to vector<8x16xbf16>
    %cst_27 = arith.constant dense<0.000000e+00> : vector<8x16xf32>
    %89 = tpu.matmul %87, %88, %cst_27 {dimension_numbers = #tpu.dot_dimension_numbers<[1], [0], [0], [1], [0, 0, 1, 1], [], []>} : vector<8x8xbf16>, vector<8x16xbf16>, vector<8x16xf32> -> vector<8x16xf32>
    %90 = vector.extract_strided_slice %37 {offsets = [0, 0], sizes = [8, 16], strides = [1, 1]} : vector<16x16xf32> to vector<8x16xf32>
    %91 = vector.extract_strided_slice %41 {offsets = [0, 0], sizes = [8, 16], strides = [1, 1]} : vector<16x16xf32> to vector<8x16xf32>
    %92 = vector.extract_strided_slice %45 {offsets = [0, 0], sizes = [8, 16], strides = [1, 1]} : vector<16x16xf32> to vector<8x16xf32>
    %93 = arith.truncf %90 : vector<8x16xf32> to vector<8x16xbf16>
    %94 = arith.truncf %91 : vector<8x16xf32> to vector<8x16xbf16>
    %cst_28 = arith.constant dense<0.000000e+00> : vector<8x8xf32>
    %95 = tpu.matmul %93, %94, %cst_28 {dimension_numbers = #tpu.dot_dimension_numbers<[1], [1], [0], [0], [0, 0, 1, 0], [], []>} : vector<8x16xbf16>, vector<8x16xbf16>, vector<8x8xf32> -> vector<8x8xf32>
    %96 = vector.broadcast %47 : vector<1x8xf32> to vector<8x8xf32>
    %97 = arith.addf %95, %96 : vector<8x8xf32>
    %cst_29 = arith.constant dense<0xFF800000> : vector<8xf32>
    %98 = vector.multi_reduction <maximumf>, %97, %cst_29 [1] : vector<8x8xf32> to vector<8xf32>
    %99 = vector.shape_cast %98 : vector<8xf32> to vector<8x1xf32>
    %100 = vector.broadcast %99 : vector<8x1xf32> to vector<8x8xf32>
    %101 = arith.subf %97, %100 : vector<8x8xf32>
    %102 = math.exp %101 : vector<8x8xf32>
    %cst_30 = arith.constant dense<0.000000e+00> : vector<8xf32>
    %103 = vector.multi_reduction <add>, %102, %cst_30 [1] : vector<8x8xf32> to vector<8xf32>
    %104 = vector.shape_cast %103 : vector<8xf32> to vector<8x1xf32>
    %105 = tpu.reciprocal %104 {approx = true} : vector<8x1xf32> -> vector<8x1xf32>
    %106 = vector.broadcast %105 : vector<8x1xf32> to vector<8x8xf32>
    %107 = arith.mulf %102, %106 : vector<8x8xf32>
    %108 = arith.truncf %107 : vector<8x8xf32> to vector<8x8xbf16>
    %109 = arith.truncf %92 : vector<8x16xf32> to vector<8x16xbf16>
    %cst_31 = arith.constant dense<0.000000e+00> : vector<8x16xf32>
    %110 = tpu.matmul %108, %109, %cst_31 {dimension_numbers = #tpu.dot_dimension_numbers<[1], [0], [0], [1], [0, 0, 1, 1], [], []>} : vector<8x8xbf16>, vector<8x16xbf16>, vector<8x16xf32> -> vector<8x16xf32>
    %111 = vector.extract_strided_slice %38 {offsets = [0, 0], sizes = [8, 16], strides = [1, 1]} : vector<16x16xf32> to vector<8x16xf32>
    %112 = vector.extract_strided_slice %42 {offsets = [0, 0], sizes = [8, 16], strides = [1, 1]} : vector<16x16xf32> to vector<8x16xf32>
    %113 = vector.extract_strided_slice %46 {offsets = [0, 0], sizes = [8, 16], strides = [1, 1]} : vector<16x16xf32> to vector<8x16xf32>
    %114 = arith.truncf %111 : vector<8x16xf32> to vector<8x16xbf16>
    %115 = arith.truncf %112 : vector<8x16xf32> to vector<8x16xbf16>
    %cst_32 = arith.constant dense<0.000000e+00> : vector<8x8xf32>
    %116 = tpu.matmul %114, %115, %cst_32 {dimension_numbers = #tpu.dot_dimension_numbers<[1], [1], [0], [0], [0, 0, 1, 0], [], []>} : vector<8x16xbf16>, vector<8x16xbf16>, vector<8x8xf32> -> vector<8x8xf32>
    %117 = vector.broadcast %47 : vector<1x8xf32> to vector<8x8xf32>
    %118 = arith.addf %116, %117 : vector<8x8xf32>
    %cst_33 = arith.constant dense<0xFF800000> : vector<8xf32>
    %119 = vector.multi_reduction <maximumf>, %118, %cst_33 [1] : vector<8x8xf32> to vector<8xf32>
    %120 = vector.shape_cast %119 : vector<8xf32> to vector<8x1xf32>
    %121 = vector.broadcast %120 : vector<8x1xf32> to vector<8x8xf32>
    %122 = arith.subf %118, %121 : vector<8x8xf32>
    %123 = math.exp %122 : vector<8x8xf32>
    %cst_34 = arith.constant dense<0.000000e+00> : vector<8xf32>
    %124 = vector.multi_reduction <add>, %123, %cst_34 [1] : vector<8x8xf32> to vector<8xf32>
    %125 = vector.shape_cast %124 : vector<8xf32> to vector<8x1xf32>
    %126 = tpu.reciprocal %125 {approx = true} : vector<8x1xf32> -> vector<8x1xf32>
    %127 = vector.broadcast %126 : vector<8x1xf32> to vector<8x8xf32>
    %128 = arith.mulf %123, %127 : vector<8x8xf32>
    %129 = arith.truncf %128 : vector<8x8xf32> to vector<8x8xbf16>
    %130 = arith.truncf %113 : vector<8x16xf32> to vector<8x16xbf16>
    %cst_35 = arith.constant dense<0.000000e+00> : vector<8x16xf32>
    %131 = tpu.matmul %129, %130, %cst_35 {dimension_numbers = #tpu.dot_dimension_numbers<[1], [0], [0], [1], [0, 0, 1, 1], [], []>} : vector<8x8xbf16>, vector<8x16xbf16>, vector<8x16xf32> -> vector<8x16xf32>
    %132 = tpu.concatenate %68, %89, %110, %131 in 1 : vector<8x16xf32>, vector<8x16xf32>, vector<8x16xf32>, vector<8x16xf32> -> vector<8x64xf32>
    %133 = vector.extract_strided_slice %26 {offsets = [1, 0], sizes = [1, 8], strides = [1, 1]} : vector<2x8xf32> to vector<1x8xf32>
    %134 = vector.extract_strided_slice %35 {offsets = [8, 0], sizes = [8, 16], strides = [1, 1]} : vector<16x16xf32> to vector<8x16xf32>
    %135 = vector.extract_strided_slice %39 {offsets = [8, 0], sizes = [8, 16], strides = [1, 1]} : vector<16x16xf32> to vector<8x16xf32>
    %136 = vector.extract_strided_slice %43 {offsets = [8, 0], sizes = [8, 16], strides = [1, 1]} : vector<16x16xf32> to vector<8x16xf32>
    %137 = arith.truncf %134 : vector<8x16xf32> to vector<8x16xbf16>
    %138 = arith.truncf %135 : vector<8x16xf32> to vector<8x16xbf16>
    %cst_36 = arith.constant dense<0.000000e+00> : vector<8x8xf32>
    %139 = tpu.matmul %137, %138, %cst_36 {dimension_numbers = #tpu.dot_dimension_numbers<[1], [1], [0], [0], [0, 0, 1, 0], [], []>} : vector<8x16xbf16>, vector<8x16xbf16>, vector<8x8xf32> -> vector<8x8xf32>
    %140 = vector.broadcast %133 : vector<1x8xf32> to vector<8x8xf32>
    %141 = arith.addf %139, %140 : vector<8x8xf32>
    %cst_37 = arith.constant dense<0xFF800000> : vector<8xf32>
    %142 = vector.multi_reduction <maximumf>, %141, %cst_37 [1] : vector<8x8xf32> to vector<8xf32>
    %143 = vector.shape_cast %142 : vector<8xf32> to vector<8x1xf32>
    %144 = vector.broadcast %143 : vector<8x1xf32> to vector<8x8xf32>
    %145 = arith.subf %141, %144 : vector<8x8xf32>
    %146 = math.exp %145 : vector<8x8xf32>
    %cst_38 = arith.constant dense<0.000000e+00> : vector<8xf32>
    %147 = vector.multi_reduction <add>, %146, %cst_38 [1] : vector<8x8xf32> to vector<8xf32>
    %148 = vector.shape_cast %147 : vector<8xf32> to vector<8x1xf32>
    %149 = tpu.reciprocal %148 {approx = true} : vector<8x1xf32> -> vector<8x1xf32>
    %150 = vector.broadcast %149 : vector<8x1xf32> to vector<8x8xf32>
    %151 = arith.mulf %146, %150 : vector<8x8xf32>
    %152 = arith.truncf %151 : vector<8x8xf32> to vector<8x8xbf16>
    %153 = arith.truncf %136 : vector<8x16xf32> to vector<8x16xbf16>
    %cst_39 = arith.constant dense<0.000000e+00> : vector<8x16xf32>
    %154 = tpu.matmul %152, %153, %cst_39 {dimension_numbers = #tpu.dot_dimension_numbers<[1], [0], [0], [1], [0, 0, 1, 1], [], []>} : vector<8x8xbf16>, vector<8x16xbf16>, vector<8x16xf32> -> vector<8x16xf32>
    %155 = vector.extract_strided_slice %36 {offsets = [8, 0], sizes = [8, 16], strides = [1, 1]} : vector<16x16xf32> to vector<8x16xf32>
    %156 = vector.extract_strided_slice %40 {offsets = [8, 0], sizes = [8, 16], strides = [1, 1]} : vector<16x16xf32> to vector<8x16xf32>
    %157 = vector.extract_strided_slice %44 {offsets = [8, 0], sizes = [8, 16], strides = [1, 1]} : vector<16x16xf32> to vector<8x16xf32>
    %158 = arith.truncf %155 : vector<8x16xf32> to vector<8x16xbf16>
    %159 = arith.truncf %156 : vector<8x16xf32> to vector<8x16xbf16>
    %cst_40 = arith.constant dense<0.000000e+00> : vector<8x8xf32>
    %160 = tpu.matmul %158, %159, %cst_40 {dimension_numbers = #tpu.dot_dimension_numbers<[1], [1], [0], [0], [0, 0, 1, 0], [], []>} : vector<8x16xbf16>, vector<8x16xbf16>, vector<8x8xf32> -> vector<8x8xf32>
    %161 = vector.broadcast %133 : vector<1x8xf32> to vector<8x8xf32>
    %162 = arith.addf %160, %161 : vector<8x8xf32>
    %cst_41 = arith.constant dense<0xFF800000> : vector<8xf32>
    %163 = vector.multi_reduction <maximumf>, %162, %cst_41 [1] : vector<8x8xf32> to vector<8xf32>
    %164 = vector.shape_cast %163 : vector<8xf32> to vector<8x1xf32>
    %165 = vector.broadcast %164 : vector<8x1xf32> to vector<8x8xf32>
    %166 = arith.subf %162, %165 : vector<8x8xf32>
    %167 = math.exp %166 : vector<8x8xf32>
    %cst_42 = arith.constant dense<0.000000e+00> : vector<8xf32>
    %168 = vector.multi_reduction <add>, %167, %cst_42 [1] : vector<8x8xf32> to vector<8xf32>
    %169 = vector.shape_cast %168 : vector<8xf32> to vector<8x1xf32>
    %170 = tpu.reciprocal %169 {approx = true} : vector<8x1xf32> -> vector<8x1xf32>
    %171 = vector.broadcast %170 : vector<8x1xf32> to vector<8x8xf32>
    %172 = arith.mulf %167, %171 : vector<8x8xf32>
    %173 = arith.truncf %172 : vector<8x8xf32> to vector<8x8xbf16>
    %174 = arith.truncf %157 : vector<8x16xf32> to vector<8x16xbf16>
    %cst_43 = arith.constant dense<0.000000e+00> : vector<8x16xf32>
    %175 = tpu.matmul %173, %174, %cst_43 {dimension_numbers = #tpu.dot_dimension_numbers<[1], [0], [0], [1], [0, 0, 1, 1], [], []>} : vector<8x8xbf16>, vector<8x16xbf16>, vector<8x16xf32> -> vector<8x16xf32>
    %176 = vector.extract_strided_slice %37 {offsets = [8, 0], sizes = [8, 16], strides = [1, 1]} : vector<16x16xf32> to vector<8x16xf32>
    %177 = vector.extract_strided_slice %41 {offsets = [8, 0], sizes = [8, 16], strides = [1, 1]} : vector<16x16xf32> to vector<8x16xf32>
    %178 = vector.extract_strided_slice %45 {offsets = [8, 0], sizes = [8, 16], strides = [1, 1]} : vector<16x16xf32> to vector<8x16xf32>
    %179 = arith.truncf %176 : vector<8x16xf32> to vector<8x16xbf16>
    %180 = arith.truncf %177 : vector<8x16xf32> to vector<8x16xbf16>
    %cst_44 = arith.constant dense<0.000000e+00> : vector<8x8xf32>
    %181 = tpu.matmul %179, %180, %cst_44 {dimension_numbers = #tpu.dot_dimension_numbers<[1], [1], [0], [0], [0, 0, 1, 0], [], []>} : vector<8x16xbf16>, vector<8x16xbf16>, vector<8x8xf32> -> vector<8x8xf32>
    %182 = vector.broadcast %133 : vector<1x8xf32> to vector<8x8xf32>
    %183 = arith.addf %181, %182 : vector<8x8xf32>
    %cst_45 = arith.constant dense<0xFF800000> : vector<8xf32>
    %184 = vector.multi_reduction <maximumf>, %183, %cst_45 [1] : vector<8x8xf32> to vector<8xf32>
    %185 = vector.shape_cast %184 : vector<8xf32> to vector<8x1xf32>
    %186 = vector.broadcast %185 : vector<8x1xf32> to vector<8x8xf32>
    %187 = arith.subf %183, %186 : vector<8x8xf32>
    %188 = math.exp %187 : vector<8x8xf32>
    %cst_46 = arith.constant dense<0.000000e+00> : vector<8xf32>
    %189 = vector.multi_reduction <add>, %188, %cst_46 [1] : vector<8x8xf32> to vector<8xf32>
    %190 = vector.shape_cast %189 : vector<8xf32> to vector<8x1xf32>
    %191 = tpu.reciprocal %190 {approx = true} : vector<8x1xf32> -> vector<8x1xf32>
    %192 = vector.broadcast %191 : vector<8x1xf32> to vector<8x8xf32>
    %193 = arith.mulf %188, %192 : vector<8x8xf32>
    %194 = arith.truncf %193 : vector<8x8xf32> to vector<8x8xbf16>
    %195 = arith.truncf %178 : vector<8x16xf32> to vector<8x16xbf16>
    %cst_47 = arith.constant dense<0.000000e+00> : vector<8x16xf32>
    %196 = tpu.matmul %194, %195, %cst_47 {dimension_numbers = #tpu.dot_dimension_numbers<[1], [0], [0], [1], [0, 0, 1, 1], [], []>} : vector<8x8xbf16>, vector<8x16xbf16>, vector<8x16xf32> -> vector<8x16xf32>
    %197 = vector.extract_strided_slice %38 {offsets = [8, 0], sizes = [8, 16], strides = [1, 1]} : vector<16x16xf32> to vector<8x16xf32>
    %198 = vector.extract_strided_slice %42 {offsets = [8, 0], sizes = [8, 16], strides = [1, 1]} : vector<16x16xf32> to vector<8x16xf32>
    %199 = vector.extract_strided_slice %46 {offsets = [8, 0], sizes = [8, 16], strides = [1, 1]} : vector<16x16xf32> to vector<8x16xf32>
    %200 = arith.truncf %197 : vector<8x16xf32> to vector<8x16xbf16>
    %201 = arith.truncf %198 : vector<8x16xf32> to vector<8x16xbf16>
    %cst_48 = arith.constant dense<0.000000e+00> : vector<8x8xf32>
    %202 = tpu.matmul %200, %201, %cst_48 {dimension_numbers = #tpu.dot_dimension_numbers<[1], [1], [0], [0], [0, 0, 1, 0], [], []>} : vector<8x16xbf16>, vector<8x16xbf16>, vector<8x8xf32> -> vector<8x8xf32>
    %203 = vector.broadcast %133 : vector<1x8xf32> to vector<8x8xf32>
    %204 = arith.addf %202, %203 : vector<8x8xf32>
    %cst_49 = arith.constant dense<0xFF800000> : vector<8xf32>
    %205 = vector.multi_reduction <maximumf>, %204, %cst_49 [1] : vector<8x8xf32> to vector<8xf32>
    %206 = vector.shape_cast %205 : vector<8xf32> to vector<8x1xf32>
    %207 = vector.broadcast %206 : vector<8x1xf32> to vector<8x8xf32>
    %208 = arith.subf %204, %207 : vector<8x8xf32>
    %209 = math.exp %208 : vector<8x8xf32>
    %cst_50 = arith.constant dense<0.000000e+00> : vector<8xf32>
    %210 = vector.multi_reduction <add>, %209, %cst_50 [1] : vector<8x8xf32> to vector<8xf32>
    %211 = vector.shape_cast %210 : vector<8xf32> to vector<8x1xf32>
    %212 = tpu.reciprocal %211 {approx = true} : vector<8x1xf32> -> vector<8x1xf32>
    %213 = vector.broadcast %212 : vector<8x1xf32> to vector<8x8xf32>
    %214 = arith.mulf %209, %213 : vector<8x8xf32>
    %215 = arith.truncf %214 : vector<8x8xf32> to vector<8x8xbf16>
    %216 = arith.truncf %199 : vector<8x16xf32> to vector<8x16xbf16>
    %cst_51 = arith.constant dense<0.000000e+00> : vector<8x16xf32>
    %217 = tpu.matmul %215, %216, %cst_51 {dimension_numbers = #tpu.dot_dimension_numbers<[1], [0], [0], [1], [0, 0, 1, 1], [], []>} : vector<8x8xbf16>, vector<8x16xbf16>, vector<8x16xf32> -> vector<8x16xf32>
    %218 = tpu.concatenate %154, %175, %196, %217 in 1 : vector<8x16xf32>, vector<8x16xf32>, vector<8x16xf32>, vector<8x16xf32> -> vector<8x64xf32>
    %219 = tpu.concatenate %132, %218 in 0 : vector<8x64xf32>, vector<8x64xf32> -> vector<16x64xf32>
    %c0_52 = arith.constant 0 : index
    %c0_53 = arith.constant 0 : index
    %c0_54 = arith.constant 0 : index
    %220 = vector.load %arg7[%c0_52, %c0_53, %c0_54] : memref<2x64x64xbf16, #tpu.memory_space<vmem>>, vector<1x64x64xbf16>
    %221 = vector.shape_cast %220 : vector<1x64x64xbf16> to vector<64x64xbf16>
    %222 = arith.truncf %219 : vector<16x64xf32> to vector<16x64xbf16>
    %cst_55 = arith.constant dense<0.000000e+00> : vector<16x64xf32>
    %223 = tpu.matmul %222, %221, %cst_55 {dimension_numbers = #tpu.dot_dimension_numbers<[1], [0], [0], [1], [0, 0, 1, 1], [], []>} : vector<16x64xbf16>, vector<64x64xbf16>, vector<16x64xf32> -> vector<16x64xf32>
    %c0_56 = arith.constant 0 : index
    %c0_57 = arith.constant 0 : index
    %c0_58 = arith.constant 0 : index
    %224 = vector.load %arg8[%c0_56, %c0_57, %c0_58] : memref<2x1x64xf32, #tpu.memory_space<vmem>>, vector<1x1x64xf32>
    %225 = vector.shape_cast %224 : vector<1x1x64xf32> to vector<1x64xf32>
    %226 = vector.broadcast %225 : vector<1x64xf32> to vector<16x64xf32>
    %227 = arith.addf %223, %226 : vector<16x64xf32>
    %228 = arith.addf %227, %25 : vector<16x64xf32>
    %c0_59 = arith.constant 0 : index
    %c0_60 = arith.constant 0 : index
    %c0_61 = arith.constant 0 : index
    %229 = vector.load %arg9[%c0_59, %c0_60, %c0_61] : memref<2x1x64xf32, #tpu.memory_space<vmem>>, vector<1x1x64xf32>
    %230 = vector.shape_cast %229 : vector<1x1x64xf32> to vector<1x64xf32>
    %c0_62 = arith.constant 0 : index
    %c0_63 = arith.constant 0 : index
    %c0_64 = arith.constant 0 : index
    %231 = vector.load %arg10[%c0_62, %c0_63, %c0_64] : memref<2x1x64xf32, #tpu.memory_space<vmem>>, vector<1x1x64xf32>
    %232 = vector.shape_cast %231 : vector<1x1x64xf32> to vector<1x64xf32>
    %cst_65 = arith.constant dense<0.000000e+00> : vector<16xf32>
    %233 = vector.multi_reduction <add>, %228, %cst_65 [1] : vector<16x64xf32> to vector<16xf32>
    %234 = vector.shape_cast %233 : vector<16xf32> to vector<16x1xf32>
    %cst_66 = arith.constant 6.400000e+01 : f32
    %235 = vector.broadcast %cst_66 : f32 to vector<16x1xf32>
    %236 = arith.divf %234, %235 : vector<16x1xf32>
    %237 = vector.broadcast %236 : vector<16x1xf32> to vector<16x64xf32>
    %238 = arith.subf %228, %237 : vector<16x64xf32>
    %239 = arith.mulf %238, %238 : vector<16x64xf32>
    %cst_67 = arith.constant dense<0.000000e+00> : vector<16xf32>
    %240 = vector.multi_reduction <add>, %239, %cst_67 [1] : vector<16x64xf32> to vector<16xf32>
    %241 = vector.shape_cast %240 : vector<16xf32> to vector<16x1xf32>
    %cst_68 = arith.constant 6.400000e+01 : f32
    %242 = vector.broadcast %cst_68 : f32 to vector<16x1xf32>
    %243 = arith.divf %241, %242 : vector<16x1xf32>
    %cst_69 = arith.constant 9.99999996E-13 : f32
    %244 = vector.broadcast %cst_69 : f32 to vector<16x1xf32>
    %245 = arith.addf %243, %244 : vector<16x1xf32>
    %246 = math.rsqrt %245 : vector<16x1xf32>
    %247 = vector.broadcast %246 : vector<16x1xf32> to vector<16x64xf32>
    %248 = arith.mulf %238, %247 : vector<16x64xf32>
    %249 = vector.broadcast %230 : vector<1x64xf32> to vector<16x64xf32>
    %250 = arith.mulf %248, %249 : vector<16x64xf32>
    %251 = vector.broadcast %232 : vector<1x64xf32> to vector<16x64xf32>
    %252 = arith.addf %250, %251 : vector<16x64xf32>
    %c0_70 = arith.constant 0 : index
    %c0_71 = arith.constant 0 : index
    %c0_72 = arith.constant 0 : index
    %253 = vector.load %arg11[%c0_70, %c0_71, %c0_72] : memref<2x64x128xbf16, #tpu.memory_space<vmem>>, vector<1x64x128xbf16>
    %254 = vector.shape_cast %253 : vector<1x64x128xbf16> to vector<64x128xbf16>
    %255 = arith.truncf %252 : vector<16x64xf32> to vector<16x64xbf16>
    %cst_73 = arith.constant dense<0.000000e+00> : vector<16x128xf32>
    %256 = tpu.matmul %255, %254, %cst_73 {dimension_numbers = #tpu.dot_dimension_numbers<[1], [0], [0], [1], [0, 0, 1, 1], [], []>} : vector<16x64xbf16>, vector<64x128xbf16>, vector<16x128xf32> -> vector<16x128xf32>
    %c0_74 = arith.constant 0 : index
    %c0_75 = arith.constant 0 : index
    %c0_76 = arith.constant 0 : index
    %257 = vector.load %arg12[%c0_74, %c0_75, %c0_76] : memref<2x1x128xf32, #tpu.memory_space<vmem>>, vector<1x1x128xf32>
    %258 = vector.shape_cast %257 : vector<1x1x128xf32> to vector<1x128xf32>
    %259 = vector.broadcast %258 : vector<1x128xf32> to vector<16x128xf32>
    %260 = arith.addf %256, %259 : vector<16x128xf32>
    %cst_77 = arith.constant 5.000000e-01 : f32
    %261 = vector.broadcast %cst_77 : f32 to vector<16x128xf32>
    %262 = arith.mulf %261, %260 : vector<16x128xf32>
    %cst_78 = arith.constant 4.471500e-02 : f32
    %263 = vector.broadcast %cst_78 : f32 to vector<16x128xf32>
    %264 = arith.mulf %263, %260 : vector<16x128xf32>
    %265 = arith.mulf %264, %260 : vector<16x128xf32>
    %266 = arith.mulf %265, %260 : vector<16x128xf32>
    %267 = arith.addf %260, %266 : vector<16x128xf32>
    %cst_79 = arith.constant 0.797884583 : f32
    %268 = vector.broadcast %cst_79 : f32 to vector<16x128xf32>
    %269 = arith.mulf %268, %267 : vector<16x128xf32>
    %270 = math.tanh %269 : vector<16x128xf32>
    %cst_80 = arith.constant 1.000000e+00 : f32
    %271 = vector.broadcast %cst_80 : f32 to vector<16x128xf32>
    %272 = arith.addf %271, %270 : vector<16x128xf32>
    %273 = arith.mulf %262, %272 : vector<16x128xf32>
    %c0_81 = arith.constant 0 : index
    %c0_82 = arith.constant 0 : index
    %c0_83 = arith.constant 0 : index
    %274 = vector.load %arg13[%c0_81, %c0_82, %c0_83] : memref<2x128x64xbf16, #tpu.memory_space<vmem>>, vector<1x128x64xbf16>
    %275 = vector.shape_cast %274 : vector<1x128x64xbf16> to vector<128x64xbf16>
    %276 = arith.truncf %273 : vector<16x128xf32> to vector<16x128xbf16>
    %cst_84 = arith.constant dense<0.000000e+00> : vector<16x64xf32>
    %277 = tpu.matmul %276, %275, %cst_84 {dimension_numbers = #tpu.dot_dimension_numbers<[1], [0], [0], [1], [0, 0, 1, 1], [], []>} : vector<16x128xbf16>, vector<128x64xbf16>, vector<16x64xf32> -> vector<16x64xf32>
    %c0_85 = arith.constant 0 : index
    %c0_86 = arith.constant 0 : index
    %c0_87 = arith.constant 0 : index
    %278 = vector.load %arg14[%c0_85, %c0_86, %c0_87] : memref<2x1x64xf32, #tpu.memory_space<vmem>>, vector<1x1x64xf32>
    %279 = vector.shape_cast %278 : vector<1x1x64xf32> to vector<1x64xf32>
    %280 = vector.broadcast %279 : vector<1x64xf32> to vector<16x64xf32>
    %281 = arith.addf %277, %280 : vector<16x64xf32>
    %282 = arith.addf %281, %252 : vector<16x64xf32>
    %c0_88 = arith.constant 0 : index
    %c0_89 = arith.constant 0 : index
    %c0_90 = arith.constant 0 : index
    %283 = vector.load %arg15[%c0_88, %c0_89, %c0_90] : memref<2x1x64xf32, #tpu.memory_space<vmem>>, vector<1x1x64xf32>
    %284 = vector.shape_cast %283 : vector<1x1x64xf32> to vector<1x64xf32>
    %c0_91 = arith.constant 0 : index
    %c0_92 = arith.constant 0 : index
    %c0_93 = arith.constant 0 : index
    %285 = vector.load %arg16[%c0_91, %c0_92, %c0_93] : memref<2x1x64xf32, #tpu.memory_space<vmem>>, vector<1x1x64xf32>
    %286 = vector.shape_cast %285 : vector<1x1x64xf32> to vector<1x64xf32>
    %cst_94 = arith.constant dense<0.000000e+00> : vector<16xf32>
    %287 = vector.multi_reduction <add>, %282, %cst_94 [1] : vector<16x64xf32> to vector<16xf32>
    %288 = vector.shape_cast %287 : vector<16xf32> to vector<16x1xf32>
    %cst_95 = arith.constant 6.400000e+01 : f32
    %289 = vector.broadcast %cst_95 : f32 to vector<16x1xf32>
    %290 = arith.divf %288, %289 : vector<16x1xf32>
    %291 = vector.broadcast %290 : vector<16x1xf32> to vector<16x64xf32>
    %292 = arith.subf %282, %291 : vector<16x64xf32>
    %293 = arith.mulf %292, %292 : vector<16x64xf32>
    %cst_96 = arith.constant dense<0.000000e+00> : vector<16xf32>
    %294 = vector.multi_reduction <add>, %293, %cst_96 [1] : vector<16x64xf32> to vector<16xf32>
    %295 = vector.shape_cast %294 : vector<16xf32> to vector<16x1xf32>
    %cst_97 = arith.constant 6.400000e+01 : f32
    %296 = vector.broadcast %cst_97 : f32 to vector<16x1xf32>
    %297 = arith.divf %295, %296 : vector<16x1xf32>
    %cst_98 = arith.constant 9.99999996E-13 : f32
    %298 = vector.broadcast %cst_98 : f32 to vector<16x1xf32>
    %299 = arith.addf %297, %298 : vector<16x1xf32>
    %300 = math.rsqrt %299 : vector<16x1xf32>
    %301 = vector.broadcast %300 : vector<16x1xf32> to vector<16x64xf32>
    %302 = arith.mulf %292, %301 : vector<16x64xf32>
    %303 = vector.broadcast %284 : vector<1x64xf32> to vector<16x64xf32>
    %304 = arith.mulf %302, %303 : vector<16x64xf32>
    %305 = vector.broadcast %286 : vector<1x64xf32> to vector<16x64xf32>
    %306 = arith.addf %304, %305 : vector<16x64xf32>
    %c1 = arith.constant 1 : index
    %c0_99 = arith.constant 0 : index
    %c0_100 = arith.constant 0 : index
    %307 = vector.load %arg5[%c1, %c0_99, %c0_100] : memref<2x64x192xbf16, #tpu.memory_space<vmem>>, vector<1x64x192xbf16>
    %308 = vector.shape_cast %307 : vector<1x64x192xbf16> to vector<64x192xbf16>
    %309 = arith.truncf %306 : vector<16x64xf32> to vector<16x64xbf16>
    %cst_101 = arith.constant dense<0.000000e+00> : vector<16x192xf32>
    %310 = tpu.matmul %309, %308, %cst_101 {dimension_numbers = #tpu.dot_dimension_numbers<[1], [0], [0], [1], [0, 0, 1, 1], [], []>} : vector<16x64xbf16>, vector<64x192xbf16>, vector<16x192xf32> -> vector<16x192xf32>
    %c1_102 = arith.constant 1 : index
    %c0_103 = arith.constant 0 : index
    %c0_104 = arith.constant 0 : index
    %311 = vector.load %arg6[%c1_102, %c0_103, %c0_104] : memref<2x1x192xf32, #tpu.memory_space<vmem>>, vector<1x1x192xf32>
    %312 = vector.shape_cast %311 : vector<1x1x192xf32> to vector<1x192xf32>
    %313 = vector.broadcast %312 : vector<1x192xf32> to vector<16x192xf32>
    %314 = arith.addf %310, %313 : vector<16x192xf32>
    %315 = vector.extract_strided_slice %314 {offsets = [0, 0], sizes = [16, 16], strides = [1, 1]} : vector<16x192xf32> to vector<16x16xf32>
    %316 = vector.extract_strided_slice %314 {offsets = [0, 16], sizes = [16, 16], strides = [1, 1]} : vector<16x192xf32> to vector<16x16xf32>
    %317 = vector.extract_strided_slice %314 {offsets = [0, 32], sizes = [16, 16], strides = [1, 1]} : vector<16x192xf32> to vector<16x16xf32>
    %318 = vector.extract_strided_slice %314 {offsets = [0, 48], sizes = [16, 16], strides = [1, 1]} : vector<16x192xf32> to vector<16x16xf32>
    %319 = vector.extract_strided_slice %314 {offsets = [0, 64], sizes = [16, 16], strides = [1, 1]} : vector<16x192xf32> to vector<16x16xf32>
    %320 = vector.extract_strided_slice %314 {offsets = [0, 80], sizes = [16, 16], strides = [1, 1]} : vector<16x192xf32> to vector<16x16xf32>
    %321 = vector.extract_strided_slice %314 {offsets = [0, 96], sizes = [16, 16], strides = [1, 1]} : vector<16x192xf32> to vector<16x16xf32>
    %322 = vector.extract_strided_slice %314 {offsets = [0, 112], sizes = [16, 16], strides = [1, 1]} : vector<16x192xf32> to vector<16x16xf32>
    %323 = vector.extract_strided_slice %314 {offsets = [0, 128], sizes = [16, 16], strides = [1, 1]} : vector<16x192xf32> to vector<16x16xf32>
    %324 = vector.extract_strided_slice %314 {offsets = [0, 144], sizes = [16, 16], strides = [1, 1]} : vector<16x192xf32> to vector<16x16xf32>
    %325 = vector.extract_strided_slice %314 {offsets = [0, 160], sizes = [16, 16], strides = [1, 1]} : vector<16x192xf32> to vector<16x16xf32>
    %326 = vector.extract_strided_slice %314 {offsets = [0, 176], sizes = [16, 16], strides = [1, 1]} : vector<16x192xf32> to vector<16x16xf32>
    %327 = vector.extract_strided_slice %26 {offsets = [0, 0], sizes = [1, 8], strides = [1, 1]} : vector<2x8xf32> to vector<1x8xf32>
    %328 = vector.extract_strided_slice %315 {offsets = [0, 0], sizes = [8, 16], strides = [1, 1]} : vector<16x16xf32> to vector<8x16xf32>
    %329 = vector.extract_strided_slice %319 {offsets = [0, 0], sizes = [8, 16], strides = [1, 1]} : vector<16x16xf32> to vector<8x16xf32>
    %330 = vector.extract_strided_slice %323 {offsets = [0, 0], sizes = [8, 16], strides = [1, 1]} : vector<16x16xf32> to vector<8x16xf32>
    %331 = arith.truncf %328 : vector<8x16xf32> to vector<8x16xbf16>
    %332 = arith.truncf %329 : vector<8x16xf32> to vector<8x16xbf16>
    %cst_105 = arith.constant dense<0.000000e+00> : vector<8x8xf32>
    %333 = tpu.matmul %331, %332, %cst_105 {dimension_numbers = #tpu.dot_dimension_numbers<[1], [1], [0], [0], [0, 0, 1, 0], [], []>} : vector<8x16xbf16>, vector<8x16xbf16>, vector<8x8xf32> -> vector<8x8xf32>
    %334 = vector.broadcast %327 : vector<1x8xf32> to vector<8x8xf32>
    %335 = arith.addf %333, %334 : vector<8x8xf32>
    %cst_106 = arith.constant dense<0xFF800000> : vector<8xf32>
    %336 = vector.multi_reduction <maximumf>, %335, %cst_106 [1] : vector<8x8xf32> to vector<8xf32>
    %337 = vector.shape_cast %336 : vector<8xf32> to vector<8x1xf32>
    %338 = vector.broadcast %337 : vector<8x1xf32> to vector<8x8xf32>
    %339 = arith.subf %335, %338 : vector<8x8xf32>
    %340 = math.exp %339 : vector<8x8xf32>
    %cst_107 = arith.constant dense<0.000000e+00> : vector<8xf32>
    %341 = vector.multi_reduction <add>, %340, %cst_107 [1] : vector<8x8xf32> to vector<8xf32>
    %342 = vector.shape_cast %341 : vector<8xf32> to vector<8x1xf32>
    %343 = tpu.reciprocal %342 {approx = true} : vector<8x1xf32> -> vector<8x1xf32>
    %344 = vector.broadcast %343 : vector<8x1xf32> to vector<8x8xf32>
    %345 = arith.mulf %340, %344 : vector<8x8xf32>
    %346 = arith.truncf %345 : vector<8x8xf32> to vector<8x8xbf16>
    %347 = arith.truncf %330 : vector<8x16xf32> to vector<8x16xbf16>
    %cst_108 = arith.constant dense<0.000000e+00> : vector<8x16xf32>
    %348 = tpu.matmul %346, %347, %cst_108 {dimension_numbers = #tpu.dot_dimension_numbers<[1], [0], [0], [1], [0, 0, 1, 1], [], []>} : vector<8x8xbf16>, vector<8x16xbf16>, vector<8x16xf32> -> vector<8x16xf32>
    %349 = vector.extract_strided_slice %316 {offsets = [0, 0], sizes = [8, 16], strides = [1, 1]} : vector<16x16xf32> to vector<8x16xf32>
    %350 = vector.extract_strided_slice %320 {offsets = [0, 0], sizes = [8, 16], strides = [1, 1]} : vector<16x16xf32> to vector<8x16xf32>
    %351 = vector.extract_strided_slice %324 {offsets = [0, 0], sizes = [8, 16], strides = [1, 1]} : vector<16x16xf32> to vector<8x16xf32>
    %352 = arith.truncf %349 : vector<8x16xf32> to vector<8x16xbf16>
    %353 = arith.truncf %350 : vector<8x16xf32> to vector<8x16xbf16>
    %cst_109 = arith.constant dense<0.000000e+00> : vector<8x8xf32>
    %354 = tpu.matmul %352, %353, %cst_109 {dimension_numbers = #tpu.dot_dimension_numbers<[1], [1], [0], [0], [0, 0, 1, 0], [], []>} : vector<8x16xbf16>, vector<8x16xbf16>, vector<8x8xf32> -> vector<8x8xf32>
    %355 = vector.broadcast %327 : vector<1x8xf32> to vector<8x8xf32>
    %356 = arith.addf %354, %355 : vector<8x8xf32>
    %cst_110 = arith.constant dense<0xFF800000> : vector<8xf32>
    %357 = vector.multi_reduction <maximumf>, %356, %cst_110 [1] : vector<8x8xf32> to vector<8xf32>
    %358 = vector.shape_cast %357 : vector<8xf32> to vector<8x1xf32>
    %359 = vector.broadcast %358 : vector<8x1xf32> to vector<8x8xf32>
    %360 = arith.subf %356, %359 : vector<8x8xf32>
    %361 = math.exp %360 : vector<8x8xf32>
    %cst_111 = arith.constant dense<0.000000e+00> : vector<8xf32>
    %362 = vector.multi_reduction <add>, %361, %cst_111 [1] : vector<8x8xf32> to vector<8xf32>
    %363 = vector.shape_cast %362 : vector<8xf32> to vector<8x1xf32>
    %364 = tpu.reciprocal %363 {approx = true} : vector<8x1xf32> -> vector<8x1xf32>
    %365 = vector.broadcast %364 : vector<8x1xf32> to vector<8x8xf32>
    %366 = arith.mulf %361, %365 : vector<8x8xf32>
    %367 = arith.truncf %366 : vector<8x8xf32> to vector<8x8xbf16>
    %368 = arith.truncf %351 : vector<8x16xf32> to vector<8x16xbf16>
    %cst_112 = arith.constant dense<0.000000e+00> : vector<8x16xf32>
    %369 = tpu.matmul %367, %368, %cst_112 {dimension_numbers = #tpu.dot_dimension_numbers<[1], [0], [0], [1], [0, 0, 1, 1], [], []>} : vector<8x8xbf16>, vector<8x16xbf16>, vector<8x16xf32> -> vector<8x16xf32>
    %370 = vector.extract_strided_slice %317 {offsets = [0, 0], sizes = [8, 16], strides = [1, 1]} : vector<16x16xf32> to vector<8x16xf32>
    %371 = vector.extract_strided_slice %321 {offsets = [0, 0], sizes = [8, 16], strides = [1, 1]} : vector<16x16xf32> to vector<8x16xf32>
    %372 = vector.extract_strided_slice %325 {offsets = [0, 0], sizes = [8, 16], strides = [1, 1]} : vector<16x16xf32> to vector<8x16xf32>
    %373 = arith.truncf %370 : vector<8x16xf32> to vector<8x16xbf16>
    %374 = arith.truncf %371 : vector<8x16xf32> to vector<8x16xbf16>
    %cst_113 = arith.constant dense<0.000000e+00> : vector<8x8xf32>
    %375 = tpu.matmul %373, %374, %cst_113 {dimension_numbers = #tpu.dot_dimension_numbers<[1], [1], [0], [0], [0, 0, 1, 0], [], []>} : vector<8x16xbf16>, vector<8x16xbf16>, vector<8x8xf32> -> vector<8x8xf32>
    %376 = vector.broadcast %327 : vector<1x8xf32> to vector<8x8xf32>
    %377 = arith.addf %375, %376 : vector<8x8xf32>
    %cst_114 = arith.constant dense<0xFF800000> : vector<8xf32>
    %378 = vector.multi_reduction <maximumf>, %377, %cst_114 [1] : vector<8x8xf32> to vector<8xf32>
    %379 = vector.shape_cast %378 : vector<8xf32> to vector<8x1xf32>
    %380 = vector.broadcast %379 : vector<8x1xf32> to vector<8x8xf32>
    %381 = arith.subf %377, %380 : vector<8x8xf32>
    %382 = math.exp %381 : vector<8x8xf32>
    %cst_115 = arith.constant dense<0.000000e+00> : vector<8xf32>
    %383 = vector.multi_reduction <add>, %382, %cst_115 [1] : vector<8x8xf32> to vector<8xf32>
    %384 = vector.shape_cast %383 : vector<8xf32> to vector<8x1xf32>
    %385 = tpu.reciprocal %384 {approx = true} : vector<8x1xf32> -> vector<8x1xf32>
    %386 = vector.broadcast %385 : vector<8x1xf32> to vector<8x8xf32>
    %387 = arith.mulf %382, %386 : vector<8x8xf32>
    %388 = arith.truncf %387 : vector<8x8xf32> to vector<8x8xbf16>
    %389 = arith.truncf %372 : vector<8x16xf32> to vector<8x16xbf16>
    %cst_116 = arith.constant dense<0.000000e+00> : vector<8x16xf32>
    %390 = tpu.matmul %388, %389, %cst_116 {dimension_numbers = #tpu.dot_dimension_numbers<[1], [0], [0], [1], [0, 0, 1, 1], [], []>} : vector<8x8xbf16>, vector<8x16xbf16>, vector<8x16xf32> -> vector<8x16xf32>
    %391 = vector.extract_strided_slice %318 {offsets = [0, 0], sizes = [8, 16], strides = [1, 1]} : vector<16x16xf32> to vector<8x16xf32>
    %392 = vector.extract_strided_slice %322 {offsets = [0, 0], sizes = [8, 16], strides = [1, 1]} : vector<16x16xf32> to vector<8x16xf32>
    %393 = vector.extract_strided_slice %326 {offsets = [0, 0], sizes = [8, 16], strides = [1, 1]} : vector<16x16xf32> to vector<8x16xf32>
    %394 = arith.truncf %391 : vector<8x16xf32> to vector<8x16xbf16>
    %395 = arith.truncf %392 : vector<8x16xf32> to vector<8x16xbf16>
    %cst_117 = arith.constant dense<0.000000e+00> : vector<8x8xf32>
    %396 = tpu.matmul %394, %395, %cst_117 {dimension_numbers = #tpu.dot_dimension_numbers<[1], [1], [0], [0], [0, 0, 1, 0], [], []>} : vector<8x16xbf16>, vector<8x16xbf16>, vector<8x8xf32> -> vector<8x8xf32>
    %397 = vector.broadcast %327 : vector<1x8xf32> to vector<8x8xf32>
    %398 = arith.addf %396, %397 : vector<8x8xf32>
    %cst_118 = arith.constant dense<0xFF800000> : vector<8xf32>
    %399 = vector.multi_reduction <maximumf>, %398, %cst_118 [1] : vector<8x8xf32> to vector<8xf32>
    %400 = vector.shape_cast %399 : vector<8xf32> to vector<8x1xf32>
    %401 = vector.broadcast %400 : vector<8x1xf32> to vector<8x8xf32>
    %402 = arith.subf %398, %401 : vector<8x8xf32>
    %403 = math.exp %402 : vector<8x8xf32>
    %cst_119 = arith.constant dense<0.000000e+00> : vector<8xf32>
    %404 = vector.multi_reduction <add>, %403, %cst_119 [1] : vector<8x8xf32> to vector<8xf32>
    %405 = vector.shape_cast %404 : vector<8xf32> to vector<8x1xf32>
    %406 = tpu.reciprocal %405 {approx = true} : vector<8x1xf32> -> vector<8x1xf32>
    %407 = vector.broadcast %406 : vector<8x1xf32> to vector<8x8xf32>
    %408 = arith.mulf %403, %407 : vector<8x8xf32>
    %409 = arith.truncf %408 : vector<8x8xf32> to vector<8x8xbf16>
    %410 = arith.truncf %393 : vector<8x16xf32> to vector<8x16xbf16>
    %cst_120 = arith.constant dense<0.000000e+00> : vector<8x16xf32>
    %411 = tpu.matmul %409, %410, %cst_120 {dimension_numbers = #tpu.dot_dimension_numbers<[1], [0], [0], [1], [0, 0, 1, 1], [], []>} : vector<8x8xbf16>, vector<8x16xbf16>, vector<8x16xf32> -> vector<8x16xf32>
    %412 = tpu.concatenate %348, %369, %390, %411 in 1 : vector<8x16xf32>, vector<8x16xf32>, vector<8x16xf32>, vector<8x16xf32> -> vector<8x64xf32>
    %413 = vector.extract_strided_slice %26 {offsets = [1, 0], sizes = [1, 8], strides = [1, 1]} : vector<2x8xf32> to vector<1x8xf32>
    %414 = vector.extract_strided_slice %315 {offsets = [8, 0], sizes = [8, 16], strides = [1, 1]} : vector<16x16xf32> to vector<8x16xf32>
    %415 = vector.extract_strided_slice %319 {offsets = [8, 0], sizes = [8, 16], strides = [1, 1]} : vector<16x16xf32> to vector<8x16xf32>
    %416 = vector.extract_strided_slice %323 {offsets = [8, 0], sizes = [8, 16], strides = [1, 1]} : vector<16x16xf32> to vector<8x16xf32>
    %417 = arith.truncf %414 : vector<8x16xf32> to vector<8x16xbf16>
    %418 = arith.truncf %415 : vector<8x16xf32> to vector<8x16xbf16>
    %cst_121 = arith.constant dense<0.000000e+00> : vector<8x8xf32>
    %419 = tpu.matmul %417, %418, %cst_121 {dimension_numbers = #tpu.dot_dimension_numbers<[1], [1], [0], [0], [0, 0, 1, 0], [], []>} : vector<8x16xbf16>, vector<8x16xbf16>, vector<8x8xf32> -> vector<8x8xf32>
    %420 = vector.broadcast %413 : vector<1x8xf32> to vector<8x8xf32>
    %421 = arith.addf %419, %420 : vector<8x8xf32>
    %cst_122 = arith.constant dense<0xFF800000> : vector<8xf32>
    %422 = vector.multi_reduction <maximumf>, %421, %cst_122 [1] : vector<8x8xf32> to vector<8xf32>
    %423 = vector.shape_cast %422 : vector<8xf32> to vector<8x1xf32>
    %424 = vector.broadcast %423 : vector<8x1xf32> to vector<8x8xf32>
    %425 = arith.subf %421, %424 : vector<8x8xf32>
    %426 = math.exp %425 : vector<8x8xf32>
    %cst_123 = arith.constant dense<0.000000e+00> : vector<8xf32>
    %427 = vector.multi_reduction <add>, %426, %cst_123 [1] : vector<8x8xf32> to vector<8xf32>
    %428 = vector.shape_cast %427 : vector<8xf32> to vector<8x1xf32>
    %429 = tpu.reciprocal %428 {approx = true} : vector<8x1xf32> -> vector<8x1xf32>
    %430 = vector.broadcast %429 : vector<8x1xf32> to vector<8x8xf32>
    %431 = arith.mulf %426, %430 : vector<8x8xf32>
    %432 = arith.truncf %431 : vector<8x8xf32> to vector<8x8xbf16>
    %433 = arith.truncf %416 : vector<8x16xf32> to vector<8x16xbf16>
    %cst_124 = arith.constant dense<0.000000e+00> : vector<8x16xf32>
    %434 = tpu.matmul %432, %433, %cst_124 {dimension_numbers = #tpu.dot_dimension_numbers<[1], [0], [0], [1], [0, 0, 1, 1], [], []>} : vector<8x8xbf16>, vector<8x16xbf16>, vector<8x16xf32> -> vector<8x16xf32>
    %435 = vector.extract_strided_slice %316 {offsets = [8, 0], sizes = [8, 16], strides = [1, 1]} : vector<16x16xf32> to vector<8x16xf32>
    %436 = vector.extract_strided_slice %320 {offsets = [8, 0], sizes = [8, 16], strides = [1, 1]} : vector<16x16xf32> to vector<8x16xf32>
    %437 = vector.extract_strided_slice %324 {offsets = [8, 0], sizes = [8, 16], strides = [1, 1]} : vector<16x16xf32> to vector<8x16xf32>
    %438 = arith.truncf %435 : vector<8x16xf32> to vector<8x16xbf16>
    %439 = arith.truncf %436 : vector<8x16xf32> to vector<8x16xbf16>
    %cst_125 = arith.constant dense<0.000000e+00> : vector<8x8xf32>
    %440 = tpu.matmul %438, %439, %cst_125 {dimension_numbers = #tpu.dot_dimension_numbers<[1], [1], [0], [0], [0, 0, 1, 0], [], []>} : vector<8x16xbf16>, vector<8x16xbf16>, vector<8x8xf32> -> vector<8x8xf32>
    %441 = vector.broadcast %413 : vector<1x8xf32> to vector<8x8xf32>
    %442 = arith.addf %440, %441 : vector<8x8xf32>
    %cst_126 = arith.constant dense<0xFF800000> : vector<8xf32>
    %443 = vector.multi_reduction <maximumf>, %442, %cst_126 [1] : vector<8x8xf32> to vector<8xf32>
    %444 = vector.shape_cast %443 : vector<8xf32> to vector<8x1xf32>
    %445 = vector.broadcast %444 : vector<8x1xf32> to vector<8x8xf32>
    %446 = arith.subf %442, %445 : vector<8x8xf32>
    %447 = math.exp %446 : vector<8x8xf32>
    %cst_127 = arith.constant dense<0.000000e+00> : vector<8xf32>
    %448 = vector.multi_reduction <add>, %447, %cst_127 [1] : vector<8x8xf32> to vector<8xf32>
    %449 = vector.shape_cast %448 : vector<8xf32> to vector<8x1xf32>
    %450 = tpu.reciprocal %449 {approx = true} : vector<8x1xf32> -> vector<8x1xf32>
    %451 = vector.broadcast %450 : vector<8x1xf32> to vector<8x8xf32>
    %452 = arith.mulf %447, %451 : vector<8x8xf32>
    %453 = arith.truncf %452 : vector<8x8xf32> to vector<8x8xbf16>
    %454 = arith.truncf %437 : vector<8x16xf32> to vector<8x16xbf16>
    %cst_128 = arith.constant dense<0.000000e+00> : vector<8x16xf32>
    %455 = tpu.matmul %453, %454, %cst_128 {dimension_numbers = #tpu.dot_dimension_numbers<[1], [0], [0], [1], [0, 0, 1, 1], [], []>} : vector<8x8xbf16>, vector<8x16xbf16>, vector<8x16xf32> -> vector<8x16xf32>
    %456 = vector.extract_strided_slice %317 {offsets = [8, 0], sizes = [8, 16], strides = [1, 1]} : vector<16x16xf32> to vector<8x16xf32>
    %457 = vector.extract_strided_slice %321 {offsets = [8, 0], sizes = [8, 16], strides = [1, 1]} : vector<16x16xf32> to vector<8x16xf32>
    %458 = vector.extract_strided_slice %325 {offsets = [8, 0], sizes = [8, 16], strides = [1, 1]} : vector<16x16xf32> to vector<8x16xf32>
    %459 = arith.truncf %456 : vector<8x16xf32> to vector<8x16xbf16>
    %460 = arith.truncf %457 : vector<8x16xf32> to vector<8x16xbf16>
    %cst_129 = arith.constant dense<0.000000e+00> : vector<8x8xf32>
    %461 = tpu.matmul %459, %460, %cst_129 {dimension_numbers = #tpu.dot_dimension_numbers<[1], [1], [0], [0], [0, 0, 1, 0], [], []>} : vector<8x16xbf16>, vector<8x16xbf16>, vector<8x8xf32> -> vector<8x8xf32>
    %462 = vector.broadcast %413 : vector<1x8xf32> to vector<8x8xf32>
    %463 = arith.addf %461, %462 : vector<8x8xf32>
    %cst_130 = arith.constant dense<0xFF800000> : vector<8xf32>
    %464 = vector.multi_reduction <maximumf>, %463, %cst_130 [1] : vector<8x8xf32> to vector<8xf32>
    %465 = vector.shape_cast %464 : vector<8xf32> to vector<8x1xf32>
    %466 = vector.broadcast %465 : vector<8x1xf32> to vector<8x8xf32>
    %467 = arith.subf %463, %466 : vector<8x8xf32>
    %468 = math.exp %467 : vector<8x8xf32>
    %cst_131 = arith.constant dense<0.000000e+00> : vector<8xf32>
    %469 = vector.multi_reduction <add>, %468, %cst_131 [1] : vector<8x8xf32> to vector<8xf32>
    %470 = vector.shape_cast %469 : vector<8xf32> to vector<8x1xf32>
    %471 = tpu.reciprocal %470 {approx = true} : vector<8x1xf32> -> vector<8x1xf32>
    %472 = vector.broadcast %471 : vector<8x1xf32> to vector<8x8xf32>
    %473 = arith.mulf %468, %472 : vector<8x8xf32>
    %474 = arith.truncf %473 : vector<8x8xf32> to vector<8x8xbf16>
    %475 = arith.truncf %458 : vector<8x16xf32> to vector<8x16xbf16>
    %cst_132 = arith.constant dense<0.000000e+00> : vector<8x16xf32>
    %476 = tpu.matmul %474, %475, %cst_132 {dimension_numbers = #tpu.dot_dimension_numbers<[1], [0], [0], [1], [0, 0, 1, 1], [], []>} : vector<8x8xbf16>, vector<8x16xbf16>, vector<8x16xf32> -> vector<8x16xf32>
    %477 = vector.extract_strided_slice %318 {offsets = [8, 0], sizes = [8, 16], strides = [1, 1]} : vector<16x16xf32> to vector<8x16xf32>
    %478 = vector.extract_strided_slice %322 {offsets = [8, 0], sizes = [8, 16], strides = [1, 1]} : vector<16x16xf32> to vector<8x16xf32>
    %479 = vector.extract_strided_slice %326 {offsets = [8, 0], sizes = [8, 16], strides = [1, 1]} : vector<16x16xf32> to vector<8x16xf32>
    %480 = arith.truncf %477 : vector<8x16xf32> to vector<8x16xbf16>
    %481 = arith.truncf %478 : vector<8x16xf32> to vector<8x16xbf16>
    %cst_133 = arith.constant dense<0.000000e+00> : vector<8x8xf32>
    %482 = tpu.matmul %480, %481, %cst_133 {dimension_numbers = #tpu.dot_dimension_numbers<[1], [1], [0], [0], [0, 0, 1, 0], [], []>} : vector<8x16xbf16>, vector<8x16xbf16>, vector<8x8xf32> -> vector<8x8xf32>
    %483 = vector.broadcast %413 : vector<1x8xf32> to vector<8x8xf32>
    %484 = arith.addf %482, %483 : vector<8x8xf32>
    %cst_134 = arith.constant dense<0xFF800000> : vector<8xf32>
    %485 = vector.multi_reduction <maximumf>, %484, %cst_134 [1] : vector<8x8xf32> to vector<8xf32>
    %486 = vector.shape_cast %485 : vector<8xf32> to vector<8x1xf32>
    %487 = vector.broadcast %486 : vector<8x1xf32> to vector<8x8xf32>
    %488 = arith.subf %484, %487 : vector<8x8xf32>
    %489 = math.exp %488 : vector<8x8xf32>
    %cst_135 = arith.constant dense<0.000000e+00> : vector<8xf32>
    %490 = vector.multi_reduction <add>, %489, %cst_135 [1] : vector<8x8xf32> to vector<8xf32>
    %491 = vector.shape_cast %490 : vector<8xf32> to vector<8x1xf32>
    %492 = tpu.reciprocal %491 {approx = true} : vector<8x1xf32> -> vector<8x1xf32>
    %493 = vector.broadcast %492 : vector<8x1xf32> to vector<8x8xf32>
    %494 = arith.mulf %489, %493 : vector<8x8xf32>
    %495 = arith.truncf %494 : vector<8x8xf32> to vector<8x8xbf16>
    %496 = arith.truncf %479 : vector<8x16xf32> to vector<8x16xbf16>
    %cst_136 = arith.constant dense<0.000000e+00> : vector<8x16xf32>
    %497 = tpu.matmul %495, %496, %cst_136 {dimension_numbers = #tpu.dot_dimension_numbers<[1], [0], [0], [1], [0, 0, 1, 1], [], []>} : vector<8x8xbf16>, vector<8x16xbf16>, vector<8x16xf32> -> vector<8x16xf32>
    %498 = tpu.concatenate %434, %455, %476, %497 in 1 : vector<8x16xf32>, vector<8x16xf32>, vector<8x16xf32>, vector<8x16xf32> -> vector<8x64xf32>
    %499 = tpu.concatenate %412, %498 in 0 : vector<8x64xf32>, vector<8x64xf32> -> vector<16x64xf32>
    %c1_137 = arith.constant 1 : index
    %c0_138 = arith.constant 0 : index
    %c0_139 = arith.constant 0 : index
    %500 = vector.load %arg7[%c1_137, %c0_138, %c0_139] : memref<2x64x64xbf16, #tpu.memory_space<vmem>>, vector<1x64x64xbf16>
    %501 = vector.shape_cast %500 : vector<1x64x64xbf16> to vector<64x64xbf16>
    %502 = arith.truncf %499 : vector<16x64xf32> to vector<16x64xbf16>
    %cst_140 = arith.constant dense<0.000000e+00> : vector<16x64xf32>
    %503 = tpu.matmul %502, %501, %cst_140 {dimension_numbers = #tpu.dot_dimension_numbers<[1], [0], [0], [1], [0, 0, 1, 1], [], []>} : vector<16x64xbf16>, vector<64x64xbf16>, vector<16x64xf32> -> vector<16x64xf32>
    %c1_141 = arith.constant 1 : index
    %c0_142 = arith.constant 0 : index
    %c0_143 = arith.constant 0 : index
    %504 = vector.load %arg8[%c1_141, %c0_142, %c0_143] : memref<2x1x64xf32, #tpu.memory_space<vmem>>, vector<1x1x64xf32>
    %505 = vector.shape_cast %504 : vector<1x1x64xf32> to vector<1x64xf32>
    %506 = vector.broadcast %505 : vector<1x64xf32> to vector<16x64xf32>
    %507 = arith.addf %503, %506 : vector<16x64xf32>
    %508 = arith.addf %507, %306 : vector<16x64xf32>
    %c1_144 = arith.constant 1 : index
    %c0_145 = arith.constant 0 : index
    %c0_146 = arith.constant 0 : index
    %509 = vector.load %arg9[%c1_144, %c0_145, %c0_146] : memref<2x1x64xf32, #tpu.memory_space<vmem>>, vector<1x1x64xf32>
    %510 = vector.shape_cast %509 : vector<1x1x64xf32> to vector<1x64xf32>
    %c1_147 = arith.constant 1 : index
    %c0_148 = arith.constant 0 : index
    %c0_149 = arith.constant 0 : index
    %511 = vector.load %arg10[%c1_147, %c0_148, %c0_149] : memref<2x1x64xf32, #tpu.memory_space<vmem>>, vector<1x1x64xf32>
    %512 = vector.shape_cast %511 : vector<1x1x64xf32> to vector<1x64xf32>
    %cst_150 = arith.constant dense<0.000000e+00> : vector<16xf32>
    %513 = vector.multi_reduction <add>, %508, %cst_150 [1] : vector<16x64xf32> to vector<16xf32>
    %514 = vector.shape_cast %513 : vector<16xf32> to vector<16x1xf32>
    %cst_151 = arith.constant 6.400000e+01 : f32
    %515 = vector.broadcast %cst_151 : f32 to vector<16x1xf32>
    %516 = arith.divf %514, %515 : vector<16x1xf32>
    %517 = vector.broadcast %516 : vector<16x1xf32> to vector<16x64xf32>
    %518 = arith.subf %508, %517 : vector<16x64xf32>
    %519 = arith.mulf %518, %518 : vector<16x64xf32>
    %cst_152 = arith.constant dense<0.000000e+00> : vector<16xf32>
    %520 = vector.multi_reduction <add>, %519, %cst_152 [1] : vector<16x64xf32> to vector<16xf32>
    %521 = vector.shape_cast %520 : vector<16xf32> to vector<16x1xf32>
    %cst_153 = arith.constant 6.400000e+01 : f32
    %522 = vector.broadcast %cst_153 : f32 to vector<16x1xf32>
    %523 = arith.divf %521, %522 : vector<16x1xf32>
    %cst_154 = arith.constant 9.99999996E-13 : f32
    %524 = vector.broadcast %cst_154 : f32 to vector<16x1xf32>
    %525 = arith.addf %523, %524 : vector<16x1xf32>
    %526 = math.rsqrt %525 : vector<16x1xf32>
    %527 = vector.broadcast %526 : vector<16x1xf32> to vector<16x64xf32>
    %528 = arith.mulf %518, %527 : vector<16x64xf32>
    %529 = vector.broadcast %510 : vector<1x64xf32> to vector<16x64xf32>
    %530 = arith.mulf %528, %529 : vector<16x64xf32>
    %531 = vector.broadcast %512 : vector<1x64xf32> to vector<16x64xf32>
    %532 = arith.addf %530, %531 : vector<16x64xf32>
    %c1_155 = arith.constant 1 : index
    %c0_156 = arith.constant 0 : index
    %c0_157 = arith.constant 0 : index
    %533 = vector.load %arg11[%c1_155, %c0_156, %c0_157] : memref<2x64x128xbf16, #tpu.memory_space<vmem>>, vector<1x64x128xbf16>
    %534 = vector.shape_cast %533 : vector<1x64x128xbf16> to vector<64x128xbf16>
    %535 = arith.truncf %532 : vector<16x64xf32> to vector<16x64xbf16>
    %cst_158 = arith.constant dense<0.000000e+00> : vector<16x128xf32>
    %536 = tpu.matmul %535, %534, %cst_158 {dimension_numbers = #tpu.dot_dimension_numbers<[1], [0], [0], [1], [0, 0, 1, 1], [], []>} : vector<16x64xbf16>, vector<64x128xbf16>, vector<16x128xf32> -> vector<16x128xf32>
    %c1_159 = arith.constant 1 : index
    %c0_160 = arith.constant 0 : index
    %c0_161 = arith.constant 0 : index
    %537 = vector.load %arg12[%c1_159, %c0_160, %c0_161] : memref<2x1x128xf32, #tpu.memory_space<vmem>>, vector<1x1x128xf32>
    %538 = vector.shape_cast %537 : vector<1x1x128xf32> to vector<1x128xf32>
    %539 = vector.broadcast %538 : vector<1x128xf32> to vector<16x128xf32>
    %540 = arith.addf %536, %539 : vector<16x128xf32>
    %cst_162 = arith.constant 5.000000e-01 : f32
    %541 = vector.broadcast %cst_162 : f32 to vector<16x128xf32>
    %542 = arith.mulf %541, %540 : vector<16x128xf32>
    %cst_163 = arith.constant 4.471500e-02 : f32
    %543 = vector.broadcast %cst_163 : f32 to vector<16x128xf32>
    %544 = arith.mulf %543, %540 : vector<16x128xf32>
    %545 = arith.mulf %544, %540 : vector<16x128xf32>
    %546 = arith.mulf %545, %540 : vector<16x128xf32>
    %547 = arith.addf %540, %546 : vector<16x128xf32>
    %cst_164 = arith.constant 0.797884583 : f32
    %548 = vector.broadcast %cst_164 : f32 to vector<16x128xf32>
    %549 = arith.mulf %548, %547 : vector<16x128xf32>
    %550 = math.tanh %549 : vector<16x128xf32>
    %cst_165 = arith.constant 1.000000e+00 : f32
    %551 = vector.broadcast %cst_165 : f32 to vector<16x128xf32>
    %552 = arith.addf %551, %550 : vector<16x128xf32>
    %553 = arith.mulf %542, %552 : vector<16x128xf32>
    %c1_166 = arith.constant 1 : index
    %c0_167 = arith.constant 0 : index
    %c0_168 = arith.constant 0 : index
    %554 = vector.load %arg13[%c1_166, %c0_167, %c0_168] : memref<2x128x64xbf16, #tpu.memory_space<vmem>>, vector<1x128x64xbf16>
    %555 = vector.shape_cast %554 : vector<1x128x64xbf16> to vector<128x64xbf16>
    %556 = arith.truncf %553 : vector<16x128xf32> to vector<16x128xbf16>
    %cst_169 = arith.constant dense<0.000000e+00> : vector<16x64xf32>
    %557 = tpu.matmul %556, %555, %cst_169 {dimension_numbers = #tpu.dot_dimension_numbers<[1], [0], [0], [1], [0, 0, 1, 1], [], []>} : vector<16x128xbf16>, vector<128x64xbf16>, vector<16x64xf32> -> vector<16x64xf32>
    %c1_170 = arith.constant 1 : index
    %c0_171 = arith.constant 0 : index
    %c0_172 = arith.constant 0 : index
    %558 = vector.load %arg14[%c1_170, %c0_171, %c0_172] : memref<2x1x64xf32, #tpu.memory_space<vmem>>, vector<1x1x64xf32>
    %559 = vector.shape_cast %558 : vector<1x1x64xf32> to vector<1x64xf32>
    %560 = vector.broadcast %559 : vector<1x64xf32> to vector<16x64xf32>
    %561 = arith.addf %557, %560 : vector<16x64xf32>
    %562 = arith.addf %561, %532 : vector<16x64xf32>
    %c1_173 = arith.constant 1 : index
    %c0_174 = arith.constant 0 : index
    %c0_175 = arith.constant 0 : index
    %563 = vector.load %arg15[%c1_173, %c0_174, %c0_175] : memref<2x1x64xf32, #tpu.memory_space<vmem>>, vector<1x1x64xf32>
    %564 = vector.shape_cast %563 : vector<1x1x64xf32> to vector<1x64xf32>
    %c1_176 = arith.constant 1 : index
    %c0_177 = arith.constant 0 : index
    %c0_178 = arith.constant 0 : index
    %565 = vector.load %arg16[%c1_176, %c0_177, %c0_178] : memref<2x1x64xf32, #tpu.memory_space<vmem>>, vector<1x1x64xf32>
    %566 = vector.shape_cast %565 : vector<1x1x64xf32> to vector<1x64xf32>
    %cst_179 = arith.constant dense<0.000000e+00> : vector<16xf32>
    %567 = vector.multi_reduction <add>, %562, %cst_179 [1] : vector<16x64xf32> to vector<16xf32>
    %568 = vector.shape_cast %567 : vector<16xf32> to vector<16x1xf32>
    %cst_180 = arith.constant 6.400000e+01 : f32
    %569 = vector.broadcast %cst_180 : f32 to vector<16x1xf32>
    %570 = arith.divf %568, %569 : vector<16x1xf32>
    %571 = vector.broadcast %570 : vector<16x1xf32> to vector<16x64xf32>
    %572 = arith.subf %562, %571 : vector<16x64xf32>
    %573 = arith.mulf %572, %572 : vector<16x64xf32>
    %cst_181 = arith.constant dense<0.000000e+00> : vector<16xf32>
    %574 = vector.multi_reduction <add>, %573, %cst_181 [1] : vector<16x64xf32> to vector<16xf32>
    %575 = vector.shape_cast %574 : vector<16xf32> to vector<16x1xf32>
    %cst_182 = arith.constant 6.400000e+01 : f32
    %576 = vector.broadcast %cst_182 : f32 to vector<16x1xf32>
    %577 = arith.divf %575, %576 : vector<16x1xf32>
    %cst_183 = arith.constant 9.99999996E-13 : f32
    %578 = vector.broadcast %cst_183 : f32 to vector<16x1xf32>
    %579 = arith.addf %577, %578 : vector<16x1xf32>
    %580 = math.rsqrt %579 : vector<16x1xf32>
    %581 = vector.broadcast %580 : vector<16x1xf32> to vector<16x64xf32>
    %582 = arith.mulf %572, %581 : vector<16x64xf32>
    %583 = vector.broadcast %564 : vector<1x64xf32> to vector<16x64xf32>
    %584 = arith.mulf %582, %583 : vector<16x64xf32>
    %585 = vector.broadcast %566 : vector<1x64xf32> to vector<16x64xf32>
    %586 = arith.addf %584, %585 : vector<16x64xf32>
    %587 = vector.extract_strided_slice %586 {offsets = [0, 0], sizes = [1, 64], strides = [1, 1]} : vector<16x64xf32> to vector<1x64xf32>
    %588 = vector.extract_strided_slice %586 {offsets = [8, 0], sizes = [1, 64], strides = [1, 1]} : vector<16x64xf32> to vector<1x64xf32>
    %589 = tpu.concatenate %587, %588 in 0 : vector<1x64xf32>, vector<1x64xf32> -> vector<2x64xf32>
    %c0_184 = arith.constant 0 : index
    %c0_185 = arith.constant 0 : index
    %590 = vector.load %arg17[%c0_184, %c0_185] : memref<64x4xbf16, #tpu.memory_space<vmem>>, vector<64x4xbf16>
    %591 = arith.truncf %589 : vector<2x64xf32> to vector<2x64xbf16>
    %cst_186 = arith.constant dense<0.000000e+00> : vector<2x4xf32>
    %592 = tpu.matmul %591, %590, %cst_186 {dimension_numbers = #tpu.dot_dimension_numbers<[1], [0], [0], [1], [0, 0, 1, 1], [], []>} : vector<2x64xbf16>, vector<64x4xbf16>, vector<2x4xf32> -> vector<2x4xf32>
    %c0_187 = arith.constant 0 : index
    %c0_188 = arith.constant 0 : index
    %593 = vector.load %arg18[%c0_187, %c0_188] : memref<1x4xf32, #tpu.memory_space<vmem>>, vector<1x4xf32>
    %594 = vector.broadcast %593 : vector<1x4xf32> to vector<2x4xf32>
    %595 = arith.addf %592, %594 : vector<2x4xf32>
    %c0_189 = arith.constant 0 : index
    %c0_190 = arith.constant 0 : index
    %596 = vector.load %arg19[%c0_189, %c0_190] : memref<2x4xf32, #tpu.memory_space<vmem>>, vector<2x4xf32>
    tpu.vector_store %arg19[%c0_189, %c0_190], %595 {strides = array<i32>} : memref<2x4xf32, #tpu.memory_space<vmem>>, vector<2x4xf32>,
    return
  }
}

</mosaic_0001>

<llo_original>
// kernel: forward.1
$region0: #{forward.1}
  #allocation0 [shape = 'u32[]', space=smem, size = 0x4, offset = 0x4, fixed_abs, tag = 'smem constant byte address 0x4 - core index']
  #allocation1 [shape = 'u32[144,128]{1,0:T(1,128)}', space=vmem, size = 0x12000, scoped, tag = 'internal scratch']
  %s0 = inlined_call_operand.vmem [shape: f32[16,64], index: 0, kind: input, shape index: {}]
  %s1 = inlined_call_operand.vmem [shape: f32[8,64], index: 1, kind: input, shape index: {}]
  %s2 = inlined_call_operand.vmem [shape: f32[2,8], index: 2, kind: input, shape index: {}]
  %s3 = inlined_call_operand.vmem [shape: f32[1,64], index: 3, kind: input, shape index: {}]
  %s4 = inlined_call_operand.vmem [shape: f32[1,64], index: 4, kind: input, shape index: {}]
  %s5 = inlined_call_operand.vmem [shape: bf16[2,64,192], index: 5, kind: input, shape index: {}]
  %s6 = inlined_call_operand.vmem [shape: f32[2,1,192], index: 6, kind: input, shape index: {}]
  %s7 = inlined_call_operand.vmem [shape: bf16[2,64,64], index: 7, kind: input, shape index: {}]
  %s8 = inlined_call_operand.vmem [shape: f32[2,1,64], index: 8, kind: input, shape index: {}]
  %s9 = inlined_call_operand.vmem [shape: f32[2,1,64], index: 9, kind: input, shape index: {}]
  %s10 = inlined_call_operand.vmem [shape: f32[2,1,64], index: 10, kind: input, shape index: {}]
  %s11 = inlined_call_operand.vmem [shape: bf16[2,64,128], index: 11, kind: input, shape index: {}]
  %s12 = inlined_call_operand.vmem [shape: f32[2,1,128], index: 12, kind: input, shape index: {}]
  %s13 = inlined_call_operand.vmem [shape: bf16[2,128,64], index: 13, kind: input, shape index: {}]
  %s14 = inlined_call_operand.vmem [shape: f32[2,1,64], index: 14, kind: input, shape index: {}]
  %s15 = inlined_call_operand.vmem [shape: f32[2,1,64], index: 15, kind: input, shape index: {}]
  %s16 = inlined_call_operand.vmem [shape: f32[2,1,64], index: 16, kind: input, shape index: {}]
  %s17 = inlined_call_operand.vmem [shape: bf16[64,4], index: 17, kind: input, shape index: {}]
  %s18 = inlined_call_operand.vmem [shape: f32[1,4], index: 18, kind: input, shape index: {}]
  %s19 = inlined_call_operand.hbm [shape: f32[2,4], index: 19, kind: output, shape index: {}]
  %s20 = sld [smem:[#allocation0]]
  $region86: #{forward.1} parent=0
    _
  %s22 = ssub.s32 1, %s20
  %s23 = scalar_select 0, %s22, %s20
  $region1: #{forward.1} parent=0
    #allocation2 [shape = 'u8[1024]{0}', space=vmem, size = 0x400, scoped, tag = 'output window, operand 0, single buffered']
    #allocation3 [shape = 's32[1]{0}', space=sflag, size = 0x4, scoped, tag = 'scoped memory for forward.1']
    %24 = vsyncpa [#allocation3], 0
    // Predicated region
    $region2: #{forward.1} parent=1 // pred_check
      _
    $region3: #{forward.1} parent=1 // pred_check_branch
      %26 = sbr.rel (0) target = $region5
    $region4: #{forward.1} parent=1 // pred_region
      _
    $region5: #{forward.1} parent=1 // pred_fallthru
      _
    // Predicated region
    $region6: #{forward.1} parent=1 // pred_check
      _
    $region7: #{forward.1} parent=1 // pred_check_branch
      %28 = sbr.rel (0) target = $region9
    $region8: #{forward.1} parent=1 // pred_region
      _
    $region9: #{forward.1} parent=1 // pred_fallthru
      _
    // Predicated region
    $region10: #{forward.1} parent=1 // pred_check
      _
    $region11: #{forward.1} parent=1 // pred_check_branch
      %30 = sbr.rel (0) target = $region13
    $region12: #{forward.1} parent=1 // pred_region
      _
    $region13: #{forward.1} parent=1 // pred_fallthru
      _
    // Predicated region
    $region14: #{forward.1} parent=1 // pred_check
      _
    $region15: #{forward.1} parent=1 // pred_check_branch
      %32 = sbr.rel (0) target = $region17
    $region16: #{forward.1} parent=1 // pred_region
      _
    $region17: #{forward.1} parent=1 // pred_fallthru
      _
    // Predicated region
    $region18: #{forward.1} parent=1 // pred_check
      _
    $region19: #{forward.1} parent=1 // pred_check_branch
      %34 = sbr.rel (0) target = $region21
    $region20: #{forward.1} parent=1 // pred_region
      _
    $region21: #{forward.1} parent=1 // pred_fallthru
      _
    // Predicated region
    $region22: #{forward.1} parent=1 // pred_check
      _
    $region23: #{forward.1} parent=1 // pred_check_branch
      %36 = sbr.rel (0) target = $region25
    $region24: #{forward.1} parent=1 // pred_region
      _
    $region25: #{forward.1} parent=1 // pred_fallthru
      _
    // Predicated region
    $region26: #{forward.1} parent=1 // pred_check
      _
    $region27: #{forward.1} parent=1 // pred_check_branch
      %38 = sbr.rel (0) target = $region29
    $region28: #{forward.1} parent=1 // pred_region
      _
    $region29: #{forward.1} parent=1 // pred_fallthru
      _
    // Predicated region
    $region30: #{forward.1} parent=1 // pred_check
      _
    $region31: #{forward.1} parent=1 // pred_check_branch
      %40 = sbr.rel (0) target = $region33
    $region32: #{forward.1} parent=1 // pred_region
      _
    $region33: #{forward.1} parent=1 // pred_fallthru
      _
    // Predicated region
    $region34: #{forward.1} parent=1 // pred_check
      _
    $region35: #{forward.1} parent=1 // pred_check_branch
      %42 = sbr.rel (0) target = $region37
    $region36: #{forward.1} parent=1 // pred_region
      _
    $region37: #{forward.1} parent=1 // pred_fallthru
      _
    // Predicated region
    $region38: #{forward.1} parent=1 // pred_check
      _
    $region39: #{forward.1} parent=1 // pred_check_branch
      %44 = sbr.rel (0) target = $region41
    $region40: #{forward.1} parent=1 // pred_region
      _
    $region41: #{forward.1} parent=1 // pred_fallthru
      _
    // Predicated region
    $region42: #{forward.1} parent=1 // pred_check
      _
    $region43: #{forward.1} parent=1 // pred_check_branch
      %46 = sbr.rel (0) target = $region45
    $region44: #{forward.1} parent=1 // pred_region
      _
    $region45: #{forward.1} parent=1 // pred_fallthru
      _
    // Predicated region
    $region46: #{forward.1} parent=1 // pred_check
      _
    $region47: #{forward.1} parent=1 // pred_check_branch
      %48 = sbr.rel (0) target = $region49
    $region48: #{forward.1} parent=1 // pred_region
      _
    $region49: #{forward.1} parent=1 // pred_fallthru
      _
    // Predicated region
    $region50: #{forward.1} parent=1 // pred_check
      _
    $region51: #{forward.1} parent=1 // pred_check_branch
      %50 = sbr.rel (0) target = $region53
    $region52: #{forward.1} parent=1 // pred_region
      _
    $region53: #{forward.1} parent=1 // pred_fallthru
      _
    // Predicated region
    $region54: #{forward.1} parent=1 // pred_check
      _
    $region55: #{forward.1} parent=1 // pred_check_branch
      %52 = sbr.rel (0) target = $region57
    $region56: #{forward.1} parent=1 // pred_region
      _
    $region57: #{forward.1} parent=1 // pred_fallthru
      _
    // Predicated region
    $region58: #{forward.1} parent=1 // pred_check
      _
    $region59: #{forward.1} parent=1 // pred_check_branch
      %54 = sbr.rel (0) target = $region61
    $region60: #{forward.1} parent=1 // pred_region
      _
    $region61: #{forward.1} parent=1 // pred_fallthru
      _
    // Predicated region
    $region62: #{forward.1} parent=1 // pred_check
      _
    $region63: #{forward.1} parent=1 // pred_check_branch
      %56 = sbr.rel (0) target = $region65
    $region64: #{forward.1} parent=1 // pred_region
      _
    $region65: #{forward.1} parent=1 // pred_fallthru
      _
    // Predicated region
    $region66: #{forward.1} parent=1 // pred_check
      _
    $region67: #{forward.1} parent=1 // pred_check_branch
      %58 = sbr.rel (0) target = $region69
    $region68: #{forward.1} parent=1 // pred_region
      _
    $region69: #{forward.1} parent=1 // pred_fallthru
      _
    // Predicated region
    $region70: #{forward.1} parent=1 // pred_check
      _
    $region71: #{forward.1} parent=1 // pred_check_branch
      %60 = sbr.rel (0) target = $region73
    $region72: #{forward.1} parent=1 // pred_region
      _
    $region73: #{forward.1} parent=1 // pred_fallthru
      _
    // Predicated region
    $region74: #{forward.1} parent=1 // pred_check
      _
    $region75: #{forward.1} parent=1 // pred_check_branch
      %62 = sbr.rel (0) target = $region77
    $region76: #{forward.1} parent=1 // pred_region
      _
    $region77: #{forward.1} parent=1 // pred_fallthru
      _
    %v64 = vld [vmem:[%s1] sm:$0xff]
    %v65 = vld [vmem:[%s0] sm:$0xff]
    %v66 = vld [vmem:[%s0 + $0x8] sm:$0xff]
    %v67 = vadd.f32 %v65, %v64
    %v68 = vadd.f32 %v66, %v64
    %v69 = vld [vmem:[%s3] sm:$0x1]
    %v70 = vld [vmem:[%s4] sm:$0x1]
    %vm71 = vcmask 523264
    %v72 = vsel %vm71, %v67, 0.0
    %73 = vadd.xlane.f32.xlu0 %v72
    %v74 = vpop.xlane.xlu0 %73
    %v75 = vsel %vm71, %v68, 0.0
    %76 = vadd.xlane.f32.xlu0 %v75
    %v77 = vpop.xlane.xlu0 %76
    %v78 = vrcp.pop 64.0
    %v79 = vmul.f32 %v74, %v78
    %v80 = vmul.f32 %v77, %v78
    %v81 = vsub.f32 %v67, %v79
    %v82 = vsub.f32 %v68, %v80
    %v83 = vmul.f32 %v81, %v81
    %v84 = vmul.f32 %v82, %v82
    %v85 = vsel %vm71, %v83, 0.0
    %86 = vadd.xlane.f32.xlu0 %v85
    %v87 = vpop.xlane.xlu0 %86
    %v88 = vsel %vm71, %v84, 0.0
    %89 = vadd.xlane.f32.xlu0 %v88
    %v90 = vpop.xlane.xlu0 %89
    %v91 = vmul.f32 %v87, %v78
    %v92 = vmul.f32 %v90, %v78
    %v93 = vadd.f32 %v91, 1e-12
    %v94 = vadd.f32 %v92, 1e-12
    %v95 = vrsqrt.pop %v93
    %v96 = vrsqrt.pop %v94
    %v97 = vmul.f32 %v81, %v95
    %v98 = vmul.f32 %v82, %v96
    %v100 = vlaneseq
    %v101 = vshrl.u32 %v100, 7
    %v102 = vsub.s32 0, %v101
    %v103 = vrot.slane %v69, %v102
    %v105 = vmul.f32 %v97, %v103
    %v106 = vmul.f32 %v98, %v103
    %v108 = vlaneseq
    %v109 = vshrl.u32 %v108, 7
    %v110 = vsub.s32 0, %v109
    %v111 = vrot.slane %v70, %v110
    %v113 = vadd.f32 %v105, %v111
    %v114 = vadd.f32 %v106, %v111
    %v115 = vld [vmem:[%s2] sm:$0x3]
    %v116 = vld [vmem:[%s5] sm:$0xff]
    %v117 = vld [vmem:[%s5 + $0x8] sm:$0xff]
    %v118 = vld [vmem:[%s5 + $0x10] sm:$0xff]
    %v119 = vld [vmem:[%s5 + $0x18] sm:$0xff]
    %v120 = vld [vmem:[%s5 + $0x20] sm:$0xff]
    %v121 = vld [vmem:[%s5 + $0x28] sm:$0xff]
    %v122 = vld [vmem:[%s5 + $0x30] sm:$0xff]
    %v123 = vld [vmem:[%s5 + $0x38] sm:$0xff]
    %v124 = vpack.c.bf16 %v114, %v113
    %v125 = vld [vmem:[%s6] sm:$0x3]
    %v127 = vlaneseq
    %v128 = vshrl.u32 %v127, 7
    %v129 = vsub.s32 0, %v128
    %v130 = vrot.slane %v125, %v129
    %v131 = vlaneseq
    %v132 = vshrl.u32 %v131, 7
    %v133 = vsub.s32 1, %v132
    %v134 = vrot.slane %v125, %v133
    %v145 = vunpack.c.l.b16 %v116
    %v146 = vunpack.c.h.b16 %v116
    %v147 = vunpack.c.l.b16 %v117
    %v148 = vunpack.c.h.b16 %v117
    %v149 = vunpack.c.l.b16 %v118
    %v150 = vunpack.c.h.b16 %v118
    %v151 = vunpack.c.l.b16 %v119
    %v152 = vunpack.c.h.b16 %v119
    %v153 = vunpack.c.l.b16 %v120
    %v154 = vunpack.c.h.b16 %v120
    %v155 = vunpack.c.l.b16 %v121
    %v156 = vunpack.c.h.b16 %v121
    %v157 = vunpack.c.l.b16 %v122
    %v158 = vunpack.c.h.b16 %v122
    %v159 = vunpack.c.l.b16 %v123
    %v160 = vunpack.c.h.b16 %v123
    %v161 = vpack.c.b16 %v147, %v145
    %v162 = vpack.c.b16 %v148, %v146
    %v163 = vpack.c.b16 %v151, %v149
    %v164 = vpack.c.b16 %v152, %v150
    %v165 = vpack.c.b16 %v155, %v153
    %v166 = vpack.c.b16 %v156, %v154
    %v167 = vpack.c.b16 %v159, %v157
    %v168 = vpack.c.b16 %v160, %v158
    %v178 = vsel %vm71, %v124, 0
    %180 = vmatprep.subr.bf16.mxu0 %v162
    %181 = vmatpush1.bf16.msra.mxu0 %v161
    %182 = vmatprep.subr.bf16.mxu0 %v164
    %183 = vmatpush1.bf16.msra.mxu0 %v163
    %184 = vmatprep.subr.bf16.mxu0 %v166
    %185 = vmatpush1.bf16.msra.mxu0 %v165
    %186 = vmatprep.subr.bf16.mxu0 %v168
    %187 = vmatpush1.bf16.msra.mxu0 %v167
    %188 = vmatprep.subr.bf16.mxu0 0
    %189 = vmatpush1.bf16.msra.mxu0 0
    %190 = vmatprep.subr.bf16.mxu0 0
    %191 = vmatpush1.bf16.msra.mxu0 0
    %192 = vmatprep.subr.bf16.mxu0 0
    %193 = vmatpush1.bf16.msra.mxu0 0
    %194 = vmatprep.subr.bf16.mxu0 0
    %195 = vmatpush1.bf16.msra.mxu0 0
    %196 = vmatprep.subr.bf16.mxu0 0
    %197 = vmatpush1.bf16.msra.mxu0 0
    %198 = vmatprep.subr.bf16.mxu0 0
    %199 = vmatpush1.bf16.msra.mxu0 0
    %200 = vmatprep.subr.bf16.mxu0 0
    %201 = vmatpush1.bf16.msra.mxu0 0
    %202 = vmatprep.subr.bf16.mxu0 0
    %203 = vmatpush1.bf16.msra.mxu0 0
    %204 = vmatprep.subr.bf16.mxu0 0
    %205 = vmatpush1.bf16.msra.mxu0 0
    %206 = vmatprep.subr.bf16.mxu0 0
    %207 = vmatpush1.bf16.msra.mxu0 0
    %208 = vmatprep.subr.bf16.mxu0 0
    %209 = vmatpush1.bf16.msra.mxu0 0
    %210 = vmatprep.subr.bf16.mxu0 0
    %211 = vmatpush1.bf16.msra.mxu0 0
    %212 = vmatprep.mubr.bf16.mxu0 0
    %213 = vmatmul.mubr.bf16.gmra.mrb[0].mxu0 %v178
    %v214 = vpop.f32.mrb[0].mxu0
    %v215 = vadd.f32 %v130, %v214
    %v216 = vpop.f32.mrb[0].mxu0
    %v217 = vadd.f32 %v134, %v216
    %v218 = vpop.f32.mrb[0].mxu0
    %v219 = vadd.f32 %v130, %v218
    %v220 = vpop.f32.mrb[0].mxu0
    %v221 = vadd.f32 %v134, %v220
    %222 = vdwg.mxu0
    %v223 = vpack.c.bf16 %v215, %v215
    %v224 = vlaneseq
    %v225 = vshrl.u32 %v224, 7
    %v226 = vsub.s32 0, %v225
    %v227 = vrot.slane %v115, %v226
    %229 = vrot.lane.b32.xlu0 %v223, 64
    %v230 = vpop.permute.xlu0 %229
    %vm231 = vcmask 130048
    %v233 = vsel %vm231, %v223, 0
    %v236 = vsel %vm231, %v230, 0
    %238 = vmatprep.subr.bf16.mxu0 0
    %239 = vmatpush1.bf16.xpose.msra.mxu0 %v236
    %240 = vmatprep.subr.bf16.mxu0 0
    %241 = vmatpush1.bf16.xpose.msra.mxu0 0
    %242 = vmatprep.subr.bf16.mxu0 0
    %243 = vmatpush1.bf16.xpose.msra.mxu0 0
    %244 = vmatprep.subr.bf16.mxu0 0
    %245 = vmatpush1.bf16.xpose.msra.mxu0 0
    %246 = vmatprep.subr.bf16.mxu0 0
    %247 = vmatpush1.bf16.xpose.msra.mxu0 0
    %248 = vmatprep.subr.bf16.mxu0 0
    %249 = vmatpush1.bf16.xpose.msra.mxu0 0
    %250 = vmatprep.subr.bf16.mxu0 0
    %251 = vmatpush1.bf16.xpose.msra.mxu0 0
    %252 = vmatprep.subr.bf16.mxu0 0
    %253 = vmatpush1.bf16.xpose.msra.mxu0 0
    %254 = vmatprep.subr.bf16.mxu0 0
    %255 = vmatpush1.bf16.xpose.msra.mxu0 0
    %256 = vmatprep.subr.bf16.mxu0 0
    %257 = vmatpush1.bf16.xpose.msra.mxu0 0
    %258 = vmatprep.subr.bf16.mxu0 0
    %259 = vmatpush1.bf16.xpose.msra.mxu0 0
    %260 = vmatprep.subr.bf16.mxu0 0
    %261 = vmatpush1.bf16.xpose.msra.mxu0 0
    %262 = vmatprep.subr.bf16.mxu0 0
    %263 = vmatpush1.bf16.xpose.msra.mxu0 0
    %264 = vmatprep.subr.bf16.mxu0 0
    %265 = vmatpush1.bf16.xpose.msra.mxu0 0
    %266 = vmatprep.subr.bf16.mxu0 0
    %267 = vmatpush1.bf16.xpose.msra.mxu0 0
    %268 = vmatprep.subr.bf16.mxu0 0
    %269 = vmatpush1.bf16.xpose.msra.mxu0 0
    %270 = vmatprep.mubr.bf16.mxu0 0
    %271 = vmatmul.mubr.bf16.gmra.mrb[0].mxu0 %v233
    %v272 = vpop.f32.mrb[0].mxu0
    %v273 = vadd.f32 %v227, %v272
    %v274 = vpop.f32.mrb[0].mxu0
    %v275 = vpop.f32.mrb[0].mxu0
    %v276 = vpop.f32.mrb[0].mxu0
    %277 = vdwg.mxu0
    %vm278 = vcmask 64512
    %v279 = vsel %vm278, %v273, -inf
    %280 = vmax.xlane.f32.xlu0 %v279
    %v281 = vpop.xlane.xlu0 %280
    %v282 = vsub.f32 %v273, %v281
    %v283 = vmul.f32 %v282, 1.442695
    %v284 = vpow.pop %v283
    %v285 = vsel %vm278, %v284, 0.0
    %286 = vadd.xlane.f32.xlu0 %v285
    %v287 = vpop.xlane.xlu0 %286
    %v288 = vrcp.pop %v287
    %v289 = vmul.f32 %v284, %v288
    %v290 = vpack.c.bf16 %v289, %v289
    %v291 = vpack.c.bf16 %v217, %v217
    %v293 = vsel %vm278, %v290, 0
    %vm295 = vcmask 1043456
    %v297 = vsel %vm295, %v291, 0
    %299 = vmatprep.subr.bf16.mxu0 0
    %300 = vmatpush1.bf16.msra.mxu0 %v297
    %301 = vmatprep.subr.bf16.mxu0 0
    %302 = vmatpush1.bf16.msra.mxu0 0
    %303 = vmatprep.subr.bf16.mxu0 0
    %304 = vmatpush1.bf16.msra.mxu0 0
    %305 = vmatprep.subr.bf16.mxu0 0
    %306 = vmatpush1.bf16.msra.mxu0 0
    %307 = vmatprep.subr.bf16.mxu0 0
    %308 = vmatpush1.bf16.msra.mxu0 0
    %309 = vmatprep.subr.bf16.mxu0 0
    %310 = vmatpush1.bf16.msra.mxu0 0
    %311 = vmatprep.subr.bf16.mxu0 0
    %312 = vmatpush1.bf16.msra.mxu0 0
    %313 = vmatprep.subr.bf16.mxu0 0
    %314 = vmatpush1.bf16.msra.mxu0 0
    %315 = vmatprep.subr.bf16.mxu0 0
    %316 = vmatpush1.bf16.msra.mxu0 0
    %317 = vmatprep.subr.bf16.mxu0 0
    %318 = vmatpush1.bf16.msra.mxu0 0
    %319 = vmatprep.subr.bf16.mxu0 0
    %320 = vmatpush1.bf16.msra.mxu0 0
    %321 = vmatprep.subr.bf16.mxu0 0
    %322 = vmatpush1.bf16.msra.mxu0 0
    %323 = vmatprep.subr.bf16.mxu0 0
    %324 = vmatpush1.bf16.msra.mxu0 0
    %325 = vmatprep.subr.bf16.mxu0 0
    %326 = vmatpush1.bf16.msra.mxu0 0
    %327 = vmatprep.subr.bf16.mxu0 0
    %328 = vmatpush1.bf16.msra.mxu0 0
    %329 = vmatprep.subr.bf16.mxu0 0
    %330 = vmatpush1.bf16.msra.mxu0 0
    %331 = vmatprep.mubr.bf16.mxu0 0
    %332 = vmatmul.mubr.bf16.gmra.mrb[0].mxu0 %v293
    %v333 = vpop.f32.mrb[0].mxu0
    %v334 = vadd.f32 0.0, %v333
    %v335 = vpop.f32.mrb[0].mxu0
    %v336 = vpop.f32.mrb[0].mxu0
    %v337 = vpop.f32.mrb[0].mxu0
    %338 = vdwg.mxu0
    %339 = vrot.lane.b32.xlu0 %v223, 112
    %v340 = vpop.permute.xlu0 %339
    %341 = vrot.lane.b32.xlu0 %v223, 48
    %v342 = vpop.permute.xlu0 %341
    %v344 = vsel %vm231, %v340, 0
    %v347 = vsel %vm231, %v342, 0
    %349 = vmatprep.subr.bf16.mxu0 0
    %350 = vmatpush1.bf16.xpose.msra.mxu0 %v347
    %351 = vmatprep.subr.bf16.mxu0 0
    %352 = vmatpush1.bf16.xpose.msra.mxu0 0
    %353 = vmatprep.subr.bf16.mxu0 0
    %354 = vmatpush1.bf16.xpose.msra.mxu0 0
    %355 = vmatprep.subr.bf16.mxu0 0
    %356 = vmatpush1.bf16.xpose.msra.mxu0 0
    %357 = vmatprep.subr.bf16.mxu0 0
    %358 = vmatpush1.bf16.xpose.msra.mxu0 0
    %359 = vmatprep.subr.bf16.mxu0 0
    %360 = vmatpush1.bf16.xpose.msra.mxu0 0
    %361 = vmatprep.subr.bf16.mxu0 0
    %362 = vmatpush1.bf16.xpose.msra.mxu0 0
    %363 = vmatprep.subr.bf16.mxu0 0
    %364 = vmatpush1.bf16.xpose.msra.mxu0 0
    %365 = vmatprep.subr.bf16.mxu0 0
    %366 = vmatpush1.bf16.xpose.msra.mxu0 0
    %367 = vmatprep.subr.bf16.mxu0 0
    %368 = vmatpush1.bf16.xpose.msra.mxu0 0
    %369 = vmatprep.subr.bf16.mxu0 0
    %370 = vmatpush1.bf16.xpose.msra.mxu0 0
    %371 = vmatprep.subr.bf16.mxu0 0
    %372 = vmatpush1.bf16.xpose.msra.mxu0 0
    %373 = vmatprep.subr.bf16.mxu0 0
    %374 = vmatpush1.bf16.xpose.msra.mxu0 0
    %375 = vmatprep.subr.bf16.mxu0 0
    %376 = vmatpush1.bf16.xpose.msra.mxu0 0
    %377 = vmatprep.subr.bf16.mxu0 0
    %378 = vmatpush1.bf16.xpose.msra.mxu0 0
    %379 = vmatprep.subr.bf16.mxu0 0
    %380 = vmatpush1.bf16.xpose.msra.mxu0 0
    %381 = vmatprep.mubr.bf16.mxu0 0
    %382 = vmatmul.mubr.bf16.gmra.mrb[0].mxu0 %v344
    %v383 = vpop.f32.mrb[0].mxu0
    %v384 = vadd.f32 %v227, %v383
    %v385 = vpop.f32.mrb[0].mxu0
    %v386 = vpop.f32.mrb[0].mxu0
    %v387 = vpop.f32.mrb[0].mxu0
    %388 = vdwg.mxu0
    %v389 = vsel %vm278, %v384, -inf
    %390 = vmax.xlane.f32.xlu0 %v389
    %v391 = vpop.xlane.xlu0 %390
    %v392 = vsub.f32 %v384, %v391
    %v393 = vmul.f32 %v392, 1.442695
    %v394 = vpow.pop %v393
    %v395 = vsel %vm278, %v394, 0.0
    %396 = vadd.xlane.f32.xlu0 %v395
    %v397 = vpop.xlane.xlu0 %396
    %v398 = vrcp.pop %v397
    %v399 = vmul.f32 %v394, %v398
    %v400 = vpack.c.bf16 %v399, %v399
    %402 = vrot.lane.b32.xlu0 %v291, 112
    %v403 = vpop.permute.xlu0 %402
    %v405 = vsel %vm278, %v400, 0
    %v408 = vsel %vm295, %v403, 0
    %410 = vmatprep.subr.bf16.mxu0 0
    %411 = vmatpush1.bf16.msra.mxu0 %v408
    %412 = vmatprep.subr.bf16.mxu0 0
    %413 = vmatpush1.bf16.msra.mxu0 0
    %414 = vmatprep.subr.bf16.mxu0 0
    %415 = vmatpush1.bf16.msra.mxu0 0
    %416 = vmatprep.subr.bf16.mxu0 0
    %417 = vmatpush1.bf16.msra.mxu0 0
    %418 = vmatprep.subr.bf16.mxu0 0
    %419 = vmatpush1.bf16.msra.mxu0 0
    %420 = vmatprep.subr.bf16.mxu0 0
    %421 = vmatpush1.bf16.msra.mxu0 0
    %422 = vmatprep.subr.bf16.mxu0 0
    %423 = vmatpush1.bf16.msra.mxu0 0
    %424 = vmatprep.subr.bf16.mxu0 0
    %425 = vmatpush1.bf16.msra.mxu0 0
    %426 = vmatprep.subr.bf16.mxu0 0
    %427 = vmatpush1.bf16.msra.mxu0 0
    %428 = vmatprep.subr.bf16.mxu0 0
    %429 = vmatpush1.bf16.msra.mxu0 0
    %430 = vmatprep.subr.bf16.mxu0 0
    %431 = vmatpush1.bf16.msra.mxu0 0
    %432 = vmatprep.subr.bf16.mxu0 0
    %433 = vmatpush1.bf16.msra.mxu0 0
    %434 = vmatprep.subr.bf16.mxu0 0
    %435 = vmatpush1.bf16.msra.mxu0 0
    %436 = vmatprep.subr.bf16.mxu0 0
    %437 = vmatpush1.bf16.msra.mxu0 0
    %438 = vmatprep.subr.bf16.mxu0 0
    %439 = vmatpush1.bf16.msra.mxu0 0
    %440 = vmatprep.subr.bf16.mxu0 0
    %441 = vmatpush1.bf16.msra.mxu0 0
    %442 = vmatprep.mubr.bf16.mxu0 0
    %443 = vmatmul.mubr.bf16.gmra.mrb[0].mxu0 %v405
    %v444 = vpop.f32.mrb[0].mxu0
    %v445 = vadd.f32 0.0, %v444
    %v446 = vpop.f32.mrb[0].mxu0
    %v447 = vpop.f32.mrb[0].mxu0
    %v448 = vpop.f32.mrb[0].mxu0
    %449 = vdwg.mxu0
    %450 = vrot.lane.b32.xlu0 %v223, 96
    %v451 = vpop.permute.xlu0 %450
    %452 = vrot.lane.b32.xlu0 %v223, 32
    %v453 = vpop.permute.xlu0 %452
    %v455 = vsel %vm231, %v451, 0
    %v458 = vsel %vm231, %v453, 0
    %460 = vmatprep.subr.bf16.mxu0 0
    %461 = vmatpush1.bf16.xpose.msra.mxu0 %v458
    %462 = vmatprep.subr.bf16.mxu0 0
    %463 = vmatpush1.bf16.xpose.msra.mxu0 0
    %464 = vmatprep.subr.bf16.mxu0 0
    %465 = vmatpush1.bf16.xpose.msra.mxu0 0
    %466 = vmatprep.subr.bf16.mxu0 0
    %467 = vmatpush1.bf16.xpose.msra.mxu0 0
    %468 = vmatprep.subr.bf16.mxu0 0
    %469 = vmatpush1.bf16.xpose.msra.mxu0 0
    %470 = vmatprep.subr.bf16.mxu0 0
    %471 = vmatpush1.bf16.xpose.msra.mxu0 0
    %472 = vmatprep.subr.bf16.mxu0 0
    %473 = vmatpush1.bf16.xpose.msra.mxu0 0
    %474 = vmatprep.subr.bf16.mxu0 0
    %475 = vmatpush1.bf16.xpose.msra.mxu0 0
    %476 = vmatprep.subr.bf16.mxu0 0
    %477 = vmatpush1.bf16.xpose.msra.mxu0 0
    %478 = vmatprep.subr.bf16.mxu0 0
    %479 = vmatpush1.bf16.xpose.msra.mxu0 0
    %480 = vmatprep.subr.bf16.mxu0 0
    %481 = vmatpush1.bf16.xpose.msra.mxu0 0
    %482 = vmatprep.subr.bf16.mxu0 0
    %483 = vmatpush1.bf16.xpose.msra.mxu0 0
    %484 = vmatprep.subr.bf16.mxu0 0
    %485 = vmatpush1.bf16.xpose.msra.mxu0 0
    %486 = vmatprep.subr.bf16.mxu0 0
    %487 = vmatpush1.bf16.xpose.msra.mxu0 0
    %488 = vmatprep.subr.bf16.mxu0 0
    %489 = vmatpush1.bf16.xpose.msra.mxu0 0
    %490 = vmatprep.subr.bf16.mxu0 0
    %491 = vmatpush1.bf16.xpose.msra.mxu0 0
    %492 = vmatprep.mubr.bf16.mxu0 0
    %493 = vmatmul.mubr.bf16.gmra.mrb[0].mxu0 %v455
    %v494 = vpop.f32.mrb[0].mxu0
    %v495 = vadd.f32 %v227, %v494
    %v496 = vpop.f32.mrb[0].mxu0
    %v497 = vpop.f32.mrb[0].mxu0
    %v498 = vpop.f32.mrb[0].mxu0
    %499 = vdwg.mxu0
    %v500 = vsel %vm278, %v495, -inf
    %501 = vmax.xlane.f32.xlu0 %v500
    %v502 = vpop.xlane.xlu0 %501
    %v503 = vsub.f32 %v495, %v502
    %v504 = vmul.f32 %v503, 1.442695
    %v505 = vpow.pop %v504
    %v506 = vsel %vm278, %v505, 0.0
    %507 = vadd.xlane.f32.xlu0 %v506
    %v508 = vpop.xlane.xlu0 %507
    %v509 = vrcp.pop %v508
    %v510 = vmul.f32 %v505, %v509
    %v511 = vpack.c.bf16 %v510, %v510
    %512 = vrot.lane.b32.xlu0 %v291, 96
    %v513 = vpop.permute.xlu0 %512
    %v515 = vsel %vm278, %v511, 0
    %v518 = vsel %vm295, %v513, 0
    %520 = vmatprep.subr.bf16.mxu0 0
    %521 = vmatpush1.bf16.msra.mxu0 %v518
    %522 = vmatprep.subr.bf16.mxu0 0
    %523 = vmatpush1.bf16.msra.mxu0 0
    %524 = vmatprep.subr.bf16.mxu0 0
    %525 = vmatpush1.bf16.msra.mxu0 0
    %526 = vmatprep.subr.bf16.mxu0 0
    %527 = vmatpush1.bf16.msra.mxu0 0
    %528 = vmatprep.subr.bf16.mxu0 0
    %529 = vmatpush1.bf16.msra.mxu0 0
    %530 = vmatprep.subr.bf16.mxu0 0
    %531 = vmatpush1.bf16.msra.mxu0 0
    %532 = vmatprep.subr.bf16.mxu0 0
    %533 = vmatpush1.bf16.msra.mxu0 0
    %534 = vmatprep.subr.bf16.mxu0 0
    %535 = vmatpush1.bf16.msra.mxu0 0
    %536 = vmatprep.subr.bf16.mxu0 0
    %537 = vmatpush1.bf16.msra.mxu0 0
    %538 = vmatprep.subr.bf16.mxu0 0
    %539 = vmatpush1.bf16.msra.mxu0 0
    %540 = vmatprep.subr.bf16.mxu0 0
    %541 = vmatpush1.bf16.msra.mxu0 0
    %542 = vmatprep.subr.bf16.mxu0 0
    %543 = vmatpush1.bf16.msra.mxu0 0
    %544 = vmatprep.subr.bf16.mxu0 0
    %545 = vmatpush1.bf16.msra.mxu0 0
    %546 = vmatprep.subr.bf16.mxu0 0
    %547 = vmatpush1.bf16.msra.mxu0 0
    %548 = vmatprep.subr.bf16.mxu0 0
    %549 = vmatpush1.bf16.msra.mxu0 0
    %550 = vmatprep.subr.bf16.mxu0 0
    %551 = vmatpush1.bf16.msra.mxu0 0
    %552 = vmatprep.mubr.bf16.mxu0 0
    %553 = vmatmul.mubr.bf16.gmra.mrb[0].mxu0 %v515
    %v554 = vpop.f32.mrb[0].mxu0
    %v555 = vadd.f32 0.0, %v554
    %v556 = vpop.f32.mrb[0].mxu0
    %v557 = vpop.f32.mrb[0].mxu0
    %v558 = vpop.f32.mrb[0].mxu0
    %559 = vdwg.mxu0
    %560 = vrot.lane.b32.xlu0 %v223, 80
    %v561 = vpop.permute.xlu0 %560
    %562 = vrot.lane.b32.xlu0 %v223, 16
    %v563 = vpop.permute.xlu0 %562
    %v565 = vsel %vm231, %v561, 0
    %v568 = vsel %vm231, %v563, 0
    %570 = vmatprep.subr.bf16.mxu0 0
    %571 = vmatpush1.bf16.xpose.msra.mxu0 %v568
    %572 = vmatprep.subr.bf16.mxu0 0
    %573 = vmatpush1.bf16.xpose.msra.mxu0 0
    %574 = vmatprep.subr.bf16.mxu0 0
    %575 = vmatpush1.bf16.xpose.msra.mxu0 0
    %576 = vmatprep.subr.bf16.mxu0 0
    %577 = vmatpush1.bf16.xpose.msra.mxu0 0
    %578 = vmatprep.subr.bf16.mxu0 0
    %579 = vmatpush1.bf16.xpose.msra.mxu0 0
    %580 = vmatprep.subr.bf16.mxu0 0
    %581 = vmatpush1.bf16.xpose.msra.mxu0 0
    %582 = vmatprep.subr.bf16.mxu0 0
    %583 = vmatpush1.bf16.xpose.msra.mxu0 0
    %584 = vmatprep.subr.bf16.mxu0 0
    %585 = vmatpush1.bf16.xpose.msra.mxu0 0
    %586 = vmatprep.subr.bf16.mxu0 0
    %587 = vmatpush1.bf16.xpose.msra.mxu0 0
    %588 = vmatprep.subr.bf16.mxu0 0
    %589 = vmatpush1.bf16.xpose.msra.mxu0 0
    %590 = vmatprep.subr.bf16.mxu0 0
    %591 = vmatpush1.bf16.xpose.msra.mxu0 0
    %592 = vmatprep.subr.bf16.mxu0 0
    %593 = vmatpush1.bf16.xpose.msra.mxu0 0
    %594 = vmatprep.subr.bf16.mxu0 0
    %595 = vmatpush1.bf16.xpose.msra.mxu0 0
    %596 = vmatprep.subr.bf16.mxu0 0
    %597 = vmatpush1.bf16.xpose.msra.mxu0 0
    %598 = vmatprep.subr.bf16.mxu0 0
    %599 = vmatpush1.bf16.xpose.msra.mxu0 0
    %600 = vmatprep.subr.bf16.mxu0 0
    %601 = vmatpush1.bf16.xpose.msra.mxu0 0
    %602 = vmatprep.mubr.bf16.mxu0 0
    %603 = vmatmul.mubr.bf16.gmra.mrb[0].mxu0 %v565
    %v604 = vpop.f32.mrb[0].mxu0
    %v605 = vadd.f32 %v227, %v604
    %v606 = vpop.f32.mrb[0].mxu0
    %v607 = vpop.f32.mrb[0].mxu0
    %v608 = vpop.f32.mrb[0].mxu0
    %609 = vdwg.mxu0
    %v610 = vsel %vm278, %v605, -inf
    %611 = vmax.xlane.f32.xlu0 %v610
    %v612 = vpop.xlane.xlu0 %611
    %v613 = vsub.f32 %v605, %v612
    %v614 = vmul.f32 %v613, 1.442695
    %v615 = vpow.pop %v614
    %v616 = vsel %vm278, %v615, 0.0
    %617 = vadd.xlane.f32.xlu0 %v616
    %v618 = vpop.xlane.xlu0 %617
    %v619 = vrcp.pop %v618
    %v620 = vmul.f32 %v615, %v619
    %v621 = vpack.c.bf16 %v620, %v620
    %622 = vrot.lane.b32.xlu0 %v291, 80
    %v623 = vpop.permute.xlu0 %622
    %v625 = vsel %vm278, %v621, 0
    %v628 = vsel %vm295, %v623, 0
    %630 = vmatprep.subr.bf16.mxu0 0
    %631 = vmatpush1.bf16.msra.mxu0 %v628
    %632 = vmatprep.subr.bf16.mxu0 0
    %633 = vmatpush1.bf16.msra.mxu0 0
    %634 = vmatprep.subr.bf16.mxu0 0
    %635 = vmatpush1.bf16.msra.mxu0 0
    %636 = vmatprep.subr.bf16.mxu0 0
    %637 = vmatpush1.bf16.msra.mxu0 0
    %638 = vmatprep.subr.bf16.mxu0 0
    %639 = vmatpush1.bf16.msra.mxu0 0
    %640 = vmatprep.subr.bf16.mxu0 0
    %641 = vmatpush1.bf16.msra.mxu0 0
    %642 = vmatprep.subr.bf16.mxu0 0
    %643 = vmatpush1.bf16.msra.mxu0 0
    %644 = vmatprep.subr.bf16.mxu0 0
    %645 = vmatpush1.bf16.msra.mxu0 0
    %646 = vmatprep.subr.bf16.mxu0 0
    %647 = vmatpush1.bf16.msra.mxu0 0
    %648 = vmatprep.subr.bf16.mxu0 0
    %649 = vmatpush1.bf16.msra.mxu0 0
    %650 = vmatprep.subr.bf16.mxu0 0
    %651 = vmatpush1.bf16.msra.mxu0 0
    %652 = vmatprep.subr.bf16.mxu0 0
    %653 = vmatpush1.bf16.msra.mxu0 0
    %654 = vmatprep.subr.bf16.mxu0 0
    %655 = vmatpush1.bf16.msra.mxu0 0
    %656 = vmatprep.subr.bf16.mxu0 0
    %657 = vmatpush1.bf16.msra.mxu0 0
    %658 = vmatprep.subr.bf16.mxu0 0
    %659 = vmatpush1.bf16.msra.mxu0 0
    %660 = vmatprep.subr.bf16.mxu0 0
    %661 = vmatpush1.bf16.msra.mxu0 0
    %662 = vmatprep.mubr.bf16.mxu0 0
    %663 = vmatmul.mubr.bf16.gmra.mrb[0].mxu0 %v625
    %v664 = vpop.f32.mrb[0].mxu0
    %v665 = vadd.f32 0.0, %v664
    %v666 = vpop.f32.mrb[0].mxu0
    %v667 = vpop.f32.mrb[0].mxu0
    %v668 = vpop.f32.mrb[0].mxu0
    %669 = vdwg.mxu0
    %671 = vrot.lane.b32.xlu0 %v445, 16
    %v672 = vpop.permute.xlu0 %671
    %675 = vrot.lane.b32.xlu0 %v555, 32
    %v676 = vpop.permute.xlu0 %675
    %679 = vrot.lane.b32.xlu0 %v665, 48
    %v680 = vpop.permute.xlu0 %679
    %v682 = vsel %vm231, %v334, %v672
    %vm683 = vcmask 261120
    %v684 = vsel %vm683, %v682, %v676
    %vm685 = vcmask 392192
    %v686 = vsel %vm685, %v684, %v680
    %v687 = vpack.c.bf16 %v219, %v219
    %v688 = vlaneseq
    %v689 = vshrl.u32 %v688, 7
    %v690 = vsub.s32 1, %v689
    %v691 = vrot.slane %v115, %v690
    %693 = vrot.lane.b32.xlu0 %v687, 64
    %v694 = vpop.permute.xlu0 %693
    %v696 = vsel %vm231, %v687, 0
    %v699 = vsel %vm231, %v694, 0
    %701 = vmatprep.subr.bf16.mxu0 0
    %702 = vmatpush1.bf16.xpose.msra.mxu0 %v699
    %703 = vmatprep.subr.bf16.mxu0 0
    %704 = vmatpush1.bf16.xpose.msra.mxu0 0
    %705 = vmatprep.subr.bf16.mxu0 0
    %706 = vmatpush1.bf16.xpose.msra.mxu0 0
    %707 = vmatprep.subr.bf16.mxu0 0
    %708 = vmatpush1.bf16.xpose.msra.mxu0 0
    %709 = vmatprep.subr.bf16.mxu0 0
    %710 = vmatpush1.bf16.xpose.msra.mxu0 0
    %711 = vmatprep.subr.bf16.mxu0 0
    %712 = vmatpush1.bf16.xpose.msra.mxu0 0
    %713 = vmatprep.subr.bf16.mxu0 0
    %714 = vmatpush1.bf16.xpose.msra.mxu0 0
    %715 = vmatprep.subr.bf16.mxu0 0
    %716 = vmatpush1.bf16.xpose.msra.mxu0 0
    %717 = vmatprep.subr.bf16.mxu0 0
    %718 = vmatpush1.bf16.xpose.msra.mxu0 0
    %719 = vmatprep.subr.bf16.mxu0 0
    %720 = vmatpush1.bf16.xpose.msra.mxu0 0
    %721 = vmatprep.subr.bf16.mxu0 0
    %722 = vmatpush1.bf16.xpose.msra.mxu0 0
    %723 = vmatprep.subr.bf16.mxu0 0
    %724 = vmatpush1.bf16.xpose.msra.mxu0 0
    %725 = vmatprep.subr.bf16.mxu0 0
    %726 = vmatpush1.bf16.xpose.msra.mxu0 0
    %727 = vmatprep.subr.bf16.mxu0 0
    %728 = vmatpush1.bf16.xpose.msra.mxu0 0
    %729 = vmatprep.subr.bf16.mxu0 0
    %730 = vmatpush1.bf16.xpose.msra.mxu0 0
    %731 = vmatprep.subr.bf16.mxu0 0
    %732 = vmatpush1.bf16.xpose.msra.mxu0 0
    %733 = vmatprep.mubr.bf16.mxu0 0
    %734 = vmatmul.mubr.bf16.gmra.mrb[0].mxu0 %v696
    %v735 = vpop.f32.mrb[0].mxu0
    %v736 = vadd.f32 %v691, %v735
    %v737 = vpop.f32.mrb[0].mxu0
    %v738 = vpop.f32.mrb[0].mxu0
    %v739 = vpop.f32.mrb[0].mxu0
    %740 = vdwg.mxu0
    %v741 = vsel %vm278, %v736, -inf
    %742 = vmax.xlane.f32.xlu0 %v741
    %v743 = vpop.xlane.xlu0 %742
    %v744 = vsub.f32 %v736, %v743
    %v745 = vmul.f32 %v744, 1.442695
    %v746 = vpow.pop %v745
    %v747 = vsel %vm278, %v746, 0.0
    %748 = vadd.xlane.f32.xlu0 %v747
    %v749 = vpop.xlane.xlu0 %748
    %v750 = vrcp.pop %v749
    %v751 = vmul.f32 %v746, %v750
    %v752 = vpack.c.bf16 %v751, %v751
    %v753 = vpack.c.bf16 %v221, %v221
    %v755 = vsel %vm278, %v752, 0
    %v758 = vsel %vm295, %v753, 0
    %760 = vmatprep.subr.bf16.mxu0 0
    %761 = vmatpush1.bf16.msra.mxu0 %v758
    %762 = vmatprep.subr.bf16.mxu0 0
    %763 = vmatpush1.bf16.msra.mxu0 0
    %764 = vmatprep.subr.bf16.mxu0 0
    %765 = vmatpush1.bf16.msra.mxu0 0
    %766 = vmatprep.subr.bf16.mxu0 0
    %767 = vmatpush1.bf16.msra.mxu0 0
    %768 = vmatprep.subr.bf16.mxu0 0
    %769 = vmatpush1.bf16.msra.mxu0 0
    %770 = vmatprep.subr.bf16.mxu0 0
    %771 = vmatpush1.bf16.msra.mxu0 0
    %772 = vmatprep.subr.bf16.mxu0 0
    %773 = vmatpush1.bf16.msra.mxu0 0
    %774 = vmatprep.subr.bf16.mxu0 0
    %775 = vmatpush1.bf16.msra.mxu0 0
    %776 = vmatprep.subr.bf16.mxu0 0
    %777 = vmatpush1.bf16.msra.mxu0 0
    %778 = vmatprep.subr.bf16.mxu0 0
    %779 = vmatpush1.bf16.msra.mxu0 0
    %780 = vmatprep.subr.bf16.mxu0 0
    %781 = vmatpush1.bf16.msra.mxu0 0
    %782 = vmatprep.subr.bf16.mxu0 0
    %783 = vmatpush1.bf16.msra.mxu0 0
    %784 = vmatprep.subr.bf16.mxu0 0
    %785 = vmatpush1.bf16.msra.mxu0 0
    %786 = vmatprep.subr.bf16.mxu0 0
    %787 = vmatpush1.bf16.msra.mxu0 0
    %788 = vmatprep.subr.bf16.mxu0 0
    %789 = vmatpush1.bf16.msra.mxu0 0
    %790 = vmatprep.subr.bf16.mxu0 0
    %791 = vmatpush1.bf16.msra.mxu0 0
    %792 = vmatprep.mubr.bf16.mxu0 0
    %793 = vmatmul.mubr.bf16.gmra.mrb[0].mxu0 %v755
    %v794 = vpop.f32.mrb[0].mxu0
    %v795 = vadd.f32 0.0, %v794
    %v796 = vpop.f32.mrb[0].mxu0
    %v797 = vpop.f32.mrb[0].mxu0
    %v798 = vpop.f32.mrb[0].mxu0
    %799 = vdwg.mxu0
    %800 = vrot.lane.b32.xlu0 %v687, 112
    %v801 = vpop.permute.xlu0 %800
    %802 = vrot.lane.b32.xlu0 %v687, 48
    %v803 = vpop.permute.xlu0 %802
    %v805 = vsel %vm231, %v801, 0
    %v808 = vsel %vm231, %v803, 0
    %810 = vmatprep.subr.bf16.mxu0 0
    %811 = vmatpush1.bf16.xpose.msra.mxu0 %v808
    %812 = vmatprep.subr.bf16.mxu0 0
    %813 = vmatpush1.bf16.xpose.msra.mxu0 0
    %814 = vmatprep.subr.bf16.mxu0 0
    %815 = vmatpush1.bf16.xpose.msra.mxu0 0
    %816 = vmatprep.subr.bf16.mxu0 0
    %817 = vmatpush1.bf16.xpose.msra.mxu0 0
    %818 = vmatprep.subr.bf16.mxu0 0
    %819 = vmatpush1.bf16.xpose.msra.mxu0 0
    %820 = vmatprep.subr.bf16.mxu0 0
    %821 = vmatpush1.bf16.xpose.msra.mxu0 0
    %822 = vmatprep.subr.bf16.mxu0 0
    %823 = vmatpush1.bf16.xpose.msra.mxu0 0
    %824 = vmatprep.subr.bf16.mxu0 0
    %825 = vmatpush1.bf16.xpose.msra.mxu0 0
    %826 = vmatprep.subr.bf16.mxu0 0
    %827 = vmatpush1.bf16.xpose.msra.mxu0 0
    %828 = vmatprep.subr.bf16.mxu0 0
    %829 = vmatpush1.bf16.xpose.msra.mxu0 0
    %830 = vmatprep.subr.bf16.mxu0 0
    %831 = vmatpush1.bf16.xpose.msra.mxu0 0
    %832 = vmatprep.subr.bf16.mxu0 0
    %833 = vmatpush1.bf16.xpose.msra.mxu0 0
    %834 = vmatprep.subr.bf16.mxu0 0
    %835 = vmatpush1.bf16.xpose.msra.mxu0 0
    %836 = vmatprep.subr.bf16.mxu0 0
    %837 = vmatpush1.bf16.xpose.msra.mxu0 0
    %838 = vmatprep.subr.bf16.mxu0 0
    %839 = vmatpush1.bf16.xpose.msra.mxu0 0
    %840 = vmatprep.subr.bf16.mxu0 0
    %841 = vmatpush1.bf16.xpose.msra.mxu0 0
    %842 = vmatprep.mubr.bf16.mxu0 0
    %843 = vmatmul.mubr.bf16.gmra.mrb[0].mxu0 %v805
    %v844 = vpop.f32.mrb[0].mxu0
    %v845 = vadd.f32 %v691, %v844
    %v846 = vpop.f32.mrb[0].mxu0
    %v847 = vpop.f32.mrb[0].mxu0
    %v848 = vpop.f32.mrb[0].mxu0
    %849 = vdwg.mxu0
    %v850 = vsel %vm278, %v845, -inf
    %851 = vmax.xlane.f32.xlu0 %v850
    %v852 = vpop.xlane.xlu0 %851
    %v853 = vsub.f32 %v845, %v852
    %v854 = vmul.f32 %v853, 1.442695
    %v855 = vpow.pop %v854
    %v856 = vsel %vm278, %v855, 0.0
    %857 = vadd.xlane.f32.xlu0 %v856
    %v858 = vpop.xlane.xlu0 %857
    %v859 = vrcp.pop %v858
    %v860 = vmul.f32 %v855, %v859
    %v861 = vpack.c.bf16 %v860, %v860
    %863 = vrot.lane.b32.xlu0 %v753, 112
    %v864 = vpop.permute.xlu0 %863
    %v866 = vsel %vm278, %v861, 0
    %v869 = vsel %vm295, %v864, 0
    %871 = vmatprep.subr.bf16.mxu0 0
    %872 = vmatpush1.bf16.msra.mxu0 %v869
    %873 = vmatprep.subr.bf16.mxu0 0
    %874 = vmatpush1.bf16.msra.mxu0 0
    %875 = vmatprep.subr.bf16.mxu0 0
    %876 = vmatpush1.bf16.msra.mxu0 0
    %877 = vmatprep.subr.bf16.mxu0 0
    %878 = vmatpush1.bf16.msra.mxu0 0
    %879 = vmatprep.subr.bf16.mxu0 0
    %880 = vmatpush1.bf16.msra.mxu0 0
    %881 = vmatprep.subr.bf16.mxu0 0
    %882 = vmatpush1.bf16.msra.mxu0 0
    %883 = vmatprep.subr.bf16.mxu0 0
    %884 = vmatpush1.bf16.msra.mxu0 0
    %885 = vmatprep.subr.bf16.mxu0 0
    %886 = vmatpush1.bf16.msra.mxu0 0
    %887 = vmatprep.subr.bf16.mxu0 0
    %888 = vmatpush1.bf16.msra.mxu0 0
    %889 = vmatprep.subr.bf16.mxu0 0
    %890 = vmatpush1.bf16.msra.mxu0 0
    %891 = vmatprep.subr.bf16.mxu0 0
    %892 = vmatpush1.bf16.msra.mxu0 0
    %893 = vmatprep.subr.bf16.mxu0 0
    %894 = vmatpush1.bf16.msra.mxu0 0
    %895 = vmatprep.subr.bf16.mxu0 0
    %896 = vmatpush1.bf16.msra.mxu0 0
    %897 = vmatprep.subr.bf16.mxu0 0
    %898 = vmatpush1.bf16.msra.mxu0 0
    %899 = vmatprep.subr.bf16.mxu0 0
    %900 = vmatpush1.bf16.msra.mxu0 0
    %901 = vmatprep.subr.bf16.mxu0 0
    %902 = vmatpush1.bf16.msra.mxu0 0
    %903 = vmatprep.mubr.bf16.mxu0 0
    %904 = vmatmul.mubr.bf16.gmra.mrb[0].mxu0 %v866
    %v905 = vpop.f32.mrb[0].mxu0
    %v906 = vadd.f32 0.0, %v905
    %v907 = vpop.f32.mrb[0].mxu0
    %v908 = vpop.f32.mrb[0].mxu0
    %v909 = vpop.f32.mrb[0].mxu0
    %910 = vdwg.mxu0
    %911 = vrot.lane.b32.xlu0 %v687, 96
    %v912 = vpop.permute.xlu0 %911
    %913 = vrot.lane.b32.xlu0 %v687, 32
    %v914 = vpop.permute.xlu0 %913
    %v916 = vsel %vm231, %v912, 0
    %v919 = vsel %vm231, %v914, 0
    %921 = vmatprep.subr.bf16.mxu0 0
    %922 = vmatpush1.bf16.xpose.msra.mxu0 %v919
    %923 = vmatprep.subr.bf16.mxu0 0
    %924 = vmatpush1.bf16.xpose.msra.mxu0 0
    %925 = vmatprep.subr.bf16.mxu0 0
    %926 = vmatpush1.bf16.xpose.msra.mxu0 0
    %927 = vmatprep.subr.bf16.mxu0 0
    %928 = vmatpush1.bf16.xpose.msra.mxu0 0
    %929 = vmatprep.subr.bf16.mxu0 0
    %930 = vmatpush1.bf16.xpose.msra.mxu0 0
    %931 = vmatprep.subr.bf16.mxu0 0
    %932 = vmatpush1.bf16.xpose.msra.mxu0 0
    %933 = vmatprep.subr.bf16.mxu0 0
    %934 = vmatpush1.bf16.xpose.msra.mxu0 0
    %935 = vmatprep.subr.bf16.mxu0 0
    %936 = vmatpush1.bf16.xpose.msra.mxu0 0
    %937 = vmatprep.subr.bf16.mxu0 0
    %938 = vmatpush1.bf16.xpose.msra.mxu0 0
    %939 = vmatprep.subr.bf16.mxu0 0
    %940 = vmatpush1.bf16.xpose.msra.mxu0 0
    %941 = vmatprep.subr.bf16.mxu0 0
    %942 = vmatpush1.bf16.xpose.msra.mxu0 0
    %943 = vmatprep.subr.bf16.mxu0 0
    %944 = vmatpush1.bf16.xpose.msra.mxu0 0
    %945 = vmatprep.subr.bf16.mxu0 0
    %946 = vmatpush1.bf16.xpose.msra.mxu0 0
    %947 = vmatprep.subr.bf16.mxu0 0
    %948 = vmatpush1.bf16.xpose.msra.mxu0 0
    %949 = vmatprep.subr.bf16.mxu0 0
    %950 = vmatpush1.bf16.xpose.msra.mxu0 0
    %951 = vmatprep.subr.bf16.mxu0 0
    %952 = vmatpush1.bf16.xpose.msra.mxu0 0
    %953 = vmatprep.mubr.bf16.mxu0 0
    %954 = vmatmul.mubr.bf16.gmra.mrb[0].mxu0 %v916
    %v955 = vpop.f32.mrb[0].mxu0
    %v956 = vadd.f32 %v691, %v955
    %v957 = vpop.f32.mrb[0].mxu0
    %v958 = vpop.f32.mrb[0].mxu0
    %v959 = vpop.f32.mrb[0].mxu0
    %960 = vdwg.mxu0
    %v961 = vsel %vm278, %v956, -inf
    %962 = vmax.xlane.f32.xlu0 %v961
    %v963 = vpop.xlane.xlu0 %962
    %v964 = vsub.f32 %v956, %v963
    %v965 = vmul.f32 %v964, 1.442695
    %v966 = vpow.pop %v965
    %v967 = vsel %vm278, %v966, 0.0
    %968 = vadd.xlane.f32.xlu0 %v967
    %v969 = vpop.xlane.xlu0 %968
    %v970 = vrcp.pop %v969
    %v971 = vmul.f32 %v966, %v970
    %v972 = vpack.c.bf16 %v971, %v971
    %973 = vrot.lane.b32.xlu0 %v753, 96
    %v974 = vpop.permute.xlu0 %973
    %v976 = vsel %vm278, %v972, 0
    %v979 = vsel %vm295, %v974, 0
    %981 = vmatprep.subr.bf16.mxu0 0
    %982 = vmatpush1.bf16.msra.mxu0 %v979
    %983 = vmatprep.subr.bf16.mxu0 0
    %984 = vmatpush1.bf16.msra.mxu0 0
    %985 = vmatprep.subr.bf16.mxu0 0
    %986 = vmatpush1.bf16.msra.mxu0 0
    %987 = vmatprep.subr.bf16.mxu0 0
    %988 = vmatpush1.bf16.msra.mxu0 0
    %989 = vmatprep.subr.bf16.mxu0 0
    %990 = vmatpush1.bf16.msra.mxu0 0
    %991 = vmatprep.subr.bf16.mxu0 0
    %992 = vmatpush1.bf16.msra.mxu0 0
    %993 = vmatprep.subr.bf16.mxu0 0
    %994 = vmatpush1.bf16.msra.mxu0 0
    %995 = vmatprep.subr.bf16.mxu0 0
    %996 = vmatpush1.bf16.msra.mxu0 0
    %997 = vmatprep.subr.bf16.mxu0 0
    %998 = vmatpush1.bf16.msra.mxu0 0
    %999 = vmatprep.subr.bf16.mxu0 0
    %1000 = vmatpush1.bf16.msra.mxu0 0
    %1001 = vmatprep.subr.bf16.mxu0 0
    %1002 = vmatpush1.bf16.msra.mxu0 0
    %1003 = vmatprep.subr.bf16.mxu0 0
    %1004 = vmatpush1.bf16.msra.mxu0 0
    %1005 = vmatprep.subr.bf16.mxu0 0
    %1006 = vmatpush1.bf16.msra.mxu0 0
    %1007 = vmatprep.subr.bf16.mxu0 0
    %1008 = vmatpush1.bf16.msra.mxu0 0
    %1009 = vmatprep.subr.bf16.mxu0 0
    %1010 = vmatpush1.bf16.msra.mxu0 0
    %1011 = vmatprep.subr.bf16.mxu0 0
    %1012 = vmatpush1.bf16.msra.mxu0 0
    %1013 = vmatprep.mubr.bf16.mxu0 0
    %1014 = vmatmul.mubr.bf16.gmra.mrb[0].mxu0 %v976
    %v1015 = vpop.f32.mrb[0].mxu0
    %v1016 = vadd.f32 0.0, %v1015
    %v1017 = vpop.f32.mrb[0].mxu0
    %v1018 = vpop.f32.mrb[0].mxu0
    %v1019 = vpop.f32.mrb[0].mxu0
    %1020 = vdwg.mxu0
    %1021 = vrot.lane.b32.xlu0 %v687, 80
    %v1022 = vpop.permute.xlu0 %1021
    %1023 = vrot.lane.b32.xlu0 %v687, 16
    %v1024 = vpop.permute.xlu0 %1023
    %v1026 = vsel %vm231, %v1022, 0
    %v1029 = vsel %vm231, %v1024, 0
    %1031 = vmatprep.subr.bf16.mxu0 0
    %1032 = vmatpush1.bf16.xpose.msra.mxu0 %v1029
    %1033 = vmatprep.subr.bf16.mxu0 0
    %1034 = vmatpush1.bf16.xpose.msra.mxu0 0
    %1035 = vmatprep.subr.bf16.mxu0 0
    %1036 = vmatpush1.bf16.xpose.msra.mxu0 0
    %1037 = vmatprep.subr.bf16.mxu0 0
    %1038 = vmatpush1.bf16.xpose.msra.mxu0 0
    %1039 = vmatprep.subr.bf16.mxu0 0
    %1040 = vmatpush1.bf16.xpose.msra.mxu0 0
    %1041 = vmatprep.subr.bf16.mxu0 0
    %1042 = vmatpush1.bf16.xpose.msra.mxu0 0
    %1043 = vmatprep.subr.bf16.mxu0 0
    %1044 = vmatpush1.bf16.xpose.msra.mxu0 0
    %1045 = vmatprep.subr.bf16.mxu0 0
    %1046 = vmatpush1.bf16.xpose.msra.mxu0 0
    %1047 = vmatprep.subr.bf16.mxu0 0
    %1048 = vmatpush1.bf16.xpose.msra.mxu0 0
    %1049 = vmatprep.subr.bf16.mxu0 0
    %1050 = vmatpush1.bf16.xpose.msra.mxu0 0
    %1051 = vmatprep.subr.bf16.mxu0 0
    %1052 = vmatpush1.bf16.xpose.msra.mxu0 0
    %1053 = vmatprep.subr.bf16.mxu0 0
    %1054 = vmatpush1.bf16.xpose.msra.mxu0 0
    %1055 = vmatprep.subr.bf16.mxu0 0
    %1056 = vmatpush1.bf16.xpose.msra.mxu0 0
    %1057 = vmatprep.subr.bf16.mxu0 0
    %1058 = vmatpush1.bf16.xpose.msra.mxu0 0
    %1059 = vmatprep.subr.bf16.mxu0 0
    %1060 = vmatpush1.bf16.xpose.msra.mxu0 0
    %1061 = vmatprep.subr.bf16.mxu0 0
    %1062 = vmatpush1.bf16.xpose.msra.mxu0 0
    %1063 = vmatprep.mubr.bf16.mxu0 0
    %1064 = vmatmul.mubr.bf16.gmra.mrb[0].mxu0 %v1026
    %v1065 = vpop.f32.mrb[0].mxu0
    %v1066 = vadd.f32 %v691, %v1065
    %v1067 = vpop.f32.mrb[0].mxu0
    %v1068 = vpop.f32.mrb[0].mxu0
    %v1069 = vpop.f32.mrb[0].mxu0
    %1070 = vdwg.mxu0
    %v1071 = vsel %vm278, %v1066, -inf
    %1072 = vmax.xlane.f32.xlu0 %v1071
    %v1073 = vpop.xlane.xlu0 %1072
    %v1074 = vsub.f32 %v1066, %v1073
    %v1075 = vmul.f32 %v1074, 1.442695
    %v1076 = vpow.pop %v1075
    %v1077 = vsel %vm278, %v1076, 0.0
    %1078 = vadd.xlane.f32.xlu0 %v1077
    %v1079 = vpop.xlane.xlu0 %1078
    %v1080 = vrcp.pop %v1079
    %v1081 = vmul.f32 %v1076, %v1080
    %v1082 = vpack.c.bf16 %v1081, %v1081
    %1083 = vrot.lane.b32.xlu0 %v753, 80
    %v1084 = vpop.permute.xlu0 %1083
    %v1086 = vsel %vm278, %v1082, 0
    %v1089 = vsel %vm295, %v1084, 0
    %1091 = vmatprep.subr.bf16.mxu0 0
    %1092 = vmatpush1.bf16.msra.mxu0 %v1089
    %1093 = vmatprep.subr.bf16.mxu0 0
    %1094 = vmatpush1.bf16.msra.mxu0 0
    %1095 = vmatprep.subr.bf16.mxu0 0
    %1096 = vmatpush1.bf16.msra.mxu0 0
    %1097 = vmatprep.subr.bf16.mxu0 0
    %1098 = vmatpush1.bf16.msra.mxu0 0
    %1099 = vmatprep.subr.bf16.mxu0 0
    %1100 = vmatpush1.bf16.msra.mxu0 0
    %1101 = vmatprep.subr.bf16.mxu0 0
    %1102 = vmatpush1.bf16.msra.mxu0 0
    %1103 = vmatprep.subr.bf16.mxu0 0
    %1104 = vmatpush1.bf16.msra.mxu0 0
    %1105 = vmatprep.subr.bf16.mxu0 0
    %1106 = vmatpush1.bf16.msra.mxu0 0
    %1107 = vmatprep.subr.bf16.mxu0 0
    %1108 = vmatpush1.bf16.msra.mxu0 0
    %1109 = vmatprep.subr.bf16.mxu0 0
    %1110 = vmatpush1.bf16.msra.mxu0 0
    %1111 = vmatprep.subr.bf16.mxu0 0
    %1112 = vmatpush1.bf16.msra.mxu0 0
    %1113 = vmatprep.subr.bf16.mxu0 0
    %1114 = vmatpush1.bf16.msra.mxu0 0
    %1115 = vmatprep.subr.bf16.mxu0 0
    %1116 = vmatpush1.bf16.msra.mxu0 0
    %1117 = vmatprep.subr.bf16.mxu0 0
    %1118 = vmatpush1.bf16.msra.mxu0 0
    %1119 = vmatprep.subr.bf16.mxu0 0
    %1120 = vmatpush1.bf16.msra.mxu0 0
    %1121 = vmatprep.subr.bf16.mxu0 0
    %1122 = vmatpush1.bf16.msra.mxu0 0
    %1123 = vmatprep.mubr.bf16.mxu0 0
    %1124 = vmatmul.mubr.bf16.gmra.mrb[0].mxu0 %v1086
    %v1125 = vpop.f32.mrb[0].mxu0
    %v1126 = vadd.f32 0.0, %v1125
    %v1127 = vpop.f32.mrb[0].mxu0
    %v1128 = vpop.f32.mrb[0].mxu0
    %v1129 = vpop.f32.mrb[0].mxu0
    %1130 = vdwg.mxu0
    %1132 = vrot.lane.b32.xlu0 %v906, 16
    %v1133 = vpop.permute.xlu0 %1132
    %1136 = vrot.lane.b32.xlu0 %v1016, 32
    %v1137 = vpop.permute.xlu0 %1136
    %1140 = vrot.lane.b32.xlu0 %v1126, 48
    %v1141 = vpop.permute.xlu0 %1140
    %v1143 = vsel %vm231, %v795, %v1133
    %v1144 = vsel %vm683, %v1143, %v1137
    %v1145 = vsel %vm685, %v1144, %v1141
    %v1146 = vld [vmem:[%s7] sm:$0xf]
    %v1147 = vld [vmem:[%s7 + $0x4] sm:$0xf]
    %v1148 = vld [vmem:[%s7 + $0x8] sm:$0xf]
    %v1149 = vld [vmem:[%s7 + $0xc] sm:$0xf]
    %v1150 = vld [vmem:[%s7 + $0x10] sm:$0xf]
    %v1151 = vld [vmem:[%s7 + $0x14] sm:$0xf]
    %v1152 = vld [vmem:[%s7 + $0x18] sm:$0xf]
    %v1153 = vld [vmem:[%s7 + $0x1c] sm:$0xf]
    %v1154 = vpack.c.bf16 %v1145, %v686
    %v1155 = vld [vmem:[%s8] sm:$0x1]
    %v1157 = vlaneseq
    %v1158 = vshrl.u32 %v1157, 7
    %v1159 = vsub.s32 0, %v1158
    %v1160 = vrot.slane %v1155, %v1159
    %v1170 = vunpack.c.l.b16 %v1146
    %v1171 = vunpack.c.l.b16 %v1147
    %v1172 = vunpack.c.l.b16 %v1148
    %v1173 = vunpack.c.l.b16 %v1149
    %v1174 = vunpack.c.l.b16 %v1150
    %v1175 = vunpack.c.l.b16 %v1151
    %v1176 = vunpack.c.l.b16 %v1152
    %v1177 = vunpack.c.l.b16 %v1153
    %v1178 = vpack.c.b16 %v1171, %v1170
    %v1179 = vpack.c.b16 %v1173, %v1172
    %v1180 = vpack.c.b16 %v1175, %v1174
    %v1181 = vpack.c.b16 %v1177, %v1176
    %v1187 = vsel %vm71, %v1154, 0
    %1189 = vmatprep.subr.bf16.mxu0 0
    %1190 = vmatpush1.bf16.msra.mxu0 %v1178
    %1191 = vmatprep.subr.bf16.mxu0 0
    %1192 = vmatpush1.bf16.msra.mxu0 %v1179
    %1193 = vmatprep.subr.bf16.mxu0 0
    %1194 = vmatpush1.bf16.msra.mxu0 %v1180
    %1195 = vmatprep.subr.bf16.mxu0 0
    %1196 = vmatpush1.bf16.msra.mxu0 %v1181
    %1197 = vmatprep.subr.bf16.mxu0 0
    %1198 = vmatpush1.bf16.msra.mxu0 0
    %1199 = vmatprep.subr.bf16.mxu0 0
    %1200 = vmatpush1.bf16.msra.mxu0 0
    %1201 = vmatprep.subr.bf16.mxu0 0
    %1202 = vmatpush1.bf16.msra.mxu0 0
    %1203 = vmatprep.subr.bf16.mxu0 0
    %1204 = vmatpush1.bf16.msra.mxu0 0
    %1205 = vmatprep.subr.bf16.mxu0 0
    %1206 = vmatpush1.bf16.msra.mxu0 0
    %1207 = vmatprep.subr.bf16.mxu0 0
    %1208 = vmatpush1.bf16.msra.mxu0 0
    %1209 = vmatprep.subr.bf16.mxu0 0
    %1210 = vmatpush1.bf16.msra.mxu0 0
    %1211 = vmatprep.subr.bf16.mxu0 0
    %1212 = vmatpush1.bf16.msra.mxu0 0
    %1213 = vmatprep.subr.bf16.mxu0 0
    %1214 = vmatpush1.bf16.msra.mxu0 0
    %1215 = vmatprep.subr.bf16.mxu0 0
    %1216 = vmatpush1.bf16.msra.mxu0 0
    %1217 = vmatprep.subr.bf16.mxu0 0
    %1218 = vmatpush1.bf16.msra.mxu0 0
    %1219 = vmatprep.subr.bf16.mxu0 0
    %1220 = vmatpush1.bf16.msra.mxu0 0
    %1221 = vmatprep.mubr.bf16.mxu0 0
    %1222 = vmatmul.mubr.bf16.gmra.mrb[0].mxu0 %v1187
    %v1223 = vpop.f32.mrb[0].mxu0
    %v1224 = vadd.f32 %v1160, %v1223
    %v1225 = vpop.f32.mrb[0].mxu0
    %v1226 = vpop.f32.mrb[0].mxu0
    %v1227 = vadd.f32 %v1160, %v1226
    %v1228 = vpop.f32.mrb[0].mxu0
    %1229 = vdwg.mxu0
    %v1230 = vadd.f32 %v1224, %v113
    %v1231 = vadd.f32 %v1227, %v114
    %v1232 = vld [vmem:[%s9] sm:$0x1]
    %v1233 = vld [vmem:[%s10] sm:$0x1]
    %v1234 = vsel %vm71, %v1230, 0.0
    %1235 = vadd.xlane.f32.xlu0 %v1234
    %v1236 = vpop.xlane.xlu0 %1235
    %v1237 = vsel %vm71, %v1231, 0.0
    %1238 = vadd.xlane.f32.xlu0 %v1237
    %v1239 = vpop.xlane.xlu0 %1238
    %v1240 = vmul.f32 %v1236, %v78
    %v1241 = vmul.f32 %v1239, %v78
    %v1242 = vsub.f32 %v1230, %v1240
    %v1243 = vsub.f32 %v1231, %v1241
    %v1244 = vmul.f32 %v1242, %v1242
    %v1245 = vmul.f32 %v1243, %v1243
    %v1246 = vsel %vm71, %v1244, 0.0
    %1247 = vadd.xlane.f32.xlu0 %v1246
    %v1248 = vpop.xlane.xlu0 %1247
    %v1249 = vsel %vm71, %v1245, 0.0
    %1250 = vadd.xlane.f32.xlu0 %v1249
    %v1251 = vpop.xlane.xlu0 %1250
    %v1252 = vmul.f32 %v1248, %v78
    %v1253 = vmul.f32 %v1251, %v78
    %v1254 = vadd.f32 %v1252, 1e-12
    %v1255 = vadd.f32 %v1253, 1e-12
    %v1256 = vrsqrt.pop %v1254
    %v1257 = vrsqrt.pop %v1255
    %v1258 = vmul.f32 %v1242, %v1256
    %v1259 = vmul.f32 %v1243, %v1257
    %v1261 = vlaneseq
    %v1262 = vshrl.u32 %v1261, 7
    %v1263 = vsub.s32 0, %v1262
    %v1264 = vrot.slane %v1232, %v1263
    %v1266 = vmul.f32 %v1258, %v1264
    %v1267 = vmul.f32 %v1259, %v1264
    %v1269 = vlaneseq
    %v1270 = vshrl.u32 %v1269, 7
    %v1271 = vsub.s32 0, %v1270
    %v1272 = vrot.slane %v1233, %v1271
    %v1274 = vadd.f32 %v1266, %v1272
    %v1275 = vadd.f32 %v1267, %v1272
    %v1276 = vld [vmem:[%s11] sm:$0xf]
    %v1277 = vld [vmem:[%s11 + $0x4] sm:$0xf]
    %v1278 = vld [vmem:[%s11 + $0x8] sm:$0xf]
    %v1279 = vld [vmem:[%s11 + $0xc] sm:$0xf]
    %v1280 = vld [vmem:[%s11 + $0x10] sm:$0xf]
    %v1281 = vld [vmem:[%s11 + $0x14] sm:$0xf]
    %v1282 = vld [vmem:[%s11 + $0x18] sm:$0xf]
    %v1283 = vld [vmem:[%s11 + $0x1c] sm:$0xf]
    %v1284 = vpack.c.bf16 %v1275, %v1274
    %v1285 = vld [vmem:[%s12] sm:$0x1]
    %v1287 = vlaneseq
    %v1288 = vshrl.u32 %v1287, 7
    %v1289 = vsub.s32 0, %v1288
    %v1290 = vrot.slane %v1285, %v1289
    %v1300 = vunpack.c.l.b16 %v1276
    %v1301 = vunpack.c.l.b16 %v1277
    %v1302 = vunpack.c.l.b16 %v1278
    %v1303 = vunpack.c.l.b16 %v1279
    %v1304 = vunpack.c.l.b16 %v1280
    %v1305 = vunpack.c.l.b16 %v1281
    %v1306 = vunpack.c.l.b16 %v1282
    %v1307 = vunpack.c.l.b16 %v1283
    %v1308 = vpack.c.b16 %v1301, %v1300
    %v1309 = vpack.c.b16 %v1303, %v1302
    %v1310 = vpack.c.b16 %v1305, %v1304
    %v1311 = vpack.c.b16 %v1307, %v1306
    %v1317 = vsel %vm71, %v1284, 0
    %1319 = vmatprep.subr.bf16.mxu0 0
    %1320 = vmatpush1.bf16.msra.mxu0 %v1308
    %1321 = vmatprep.subr.bf16.mxu0 0
    %1322 = vmatpush1.bf16.msra.mxu0 %v1309
    %1323 = vmatprep.subr.bf16.mxu0 0
    %1324 = vmatpush1.bf16.msra.mxu0 %v1310
    %1325 = vmatprep.subr.bf16.mxu0 0
    %1326 = vmatpush1.bf16.msra.mxu0 %v1311
    %1327 = vmatprep.subr.bf16.mxu0 0
    %1328 = vmatpush1.bf16.msra.mxu0 0
    %1329 = vmatprep.subr.bf16.mxu0 0
    %1330 = vmatpush1.bf16.msra.mxu0 0
    %1331 = vmatprep.subr.bf16.mxu0 0
    %1332 = vmatpush1.bf16.msra.mxu0 0
    %1333 = vmatprep.subr.bf16.mxu0 0
    %1334 = vmatpush1.bf16.msra.mxu0 0
    %1335 = vmatprep.subr.bf16.mxu0 0
    %1336 = vmatpush1.bf16.msra.mxu0 0
    %1337 = vmatprep.subr.bf16.mxu0 0
    %1338 = vmatpush1.bf16.msra.mxu0 0
    %1339 = vmatprep.subr.bf16.mxu0 0
    %1340 = vmatpush1.bf16.msra.mxu0 0
    %1341 = vmatprep.subr.bf16.mxu0 0
    %1342 = vmatpush1.bf16.msra.mxu0 0
    %1343 = vmatprep.subr.bf16.mxu0 0
    %1344 = vmatpush1.bf16.msra.mxu0 0
    %1345 = vmatprep.subr.bf16.mxu0 0
    %1346 = vmatpush1.bf16.msra.mxu0 0
    %1347 = vmatprep.subr.bf16.mxu0 0
    %1348 = vmatpush1.bf16.msra.mxu0 0
    %1349 = vmatprep.subr.bf16.mxu0 0
    %1350 = vmatpush1.bf16.msra.mxu0 0
    %1351 = vmatprep.mubr.bf16.mxu0 0
    %1352 = vmatmul.mubr.bf16.gmra.mrb[0].mxu0 %v1317
    %v1353 = vpop.f32.mrb[0].mxu0
    %v1354 = vadd.f32 %v1290, %v1353
    %v1355 = vpop.f32.mrb[0].mxu0
    %v1356 = vpop.f32.mrb[0].mxu0
    %v1357 = vadd.f32 %v1290, %v1356
    %v1358 = vpop.f32.mrb[0].mxu0
    %1359 = vdwg.mxu0
    %v1360 = vmul.f32 %v1354, 0.5
    %v1361 = vmul.f32 %v1357, 0.5
    %v1362 = vmul.f32 %v1354, 0.044715
    %v1363 = vmul.f32 %v1357, 0.044715
    %v1364 = vmul.f32 %v1362, %v1354
    %v1365 = vmul.f32 %v1363, %v1357
    %v1366 = vmul.f32 %v1364, %v1354
    %v1367 = vmul.f32 %v1365, %v1357
    %v1368 = vadd.f32 %v1354, %v1366
    %v1369 = vadd.f32 %v1357, %v1367
    %v1370 = vmul.f32 %v1368, 0.7978846
    %v1371 = vmul.f32 %v1369, 0.7978846
    %v1372 = vtanh.pop %v1370
    %v1373 = vtanh.pop %v1371
    %v1374 = vadd.f32 %v1372, 1.0
    %v1375 = vadd.f32 %v1373, 1.0
    %v1376 = vmul.f32 %v1360, %v1374
    %v1377 = vmul.f32 %v1361, %v1375
    %v1378 = vld [vmem:[%s13] sm:$0xf]
    %v1379 = vld [vmem:[%s13 + $0x4] sm:$0xf]
    %v1380 = vld [vmem:[%s13 + $0x8] sm:$0xf]
    %v1381 = vld [vmem:[%s13 + $0xc] sm:$0xf]
    %v1382 = vld [vmem:[%s13 + $0x10] sm:$0xf]
    %v1383 = vld [vmem:[%s13 + $0x14] sm:$0xf]
    %v1384 = vld [vmem:[%s13 + $0x18] sm:$0xf]
    %v1385 = vld [vmem:[%s13 + $0x1c] sm:$0xf]
    %v1386 = vld [vmem:[%s13 + $0x20] sm:$0xf]
    %v1387 = vld [vmem:[%s13 + $0x24] sm:$0xf]
    %v1388 = vld [vmem:[%s13 + $0x28] sm:$0xf]
    %v1389 = vld [vmem:[%s13 + $0x2c] sm:$0xf]
    %v1390 = vld [vmem:[%s13 + $0x30] sm:$0xf]
    %v1391 = vld [vmem:[%s13 + $0x34] sm:$0xf]
    %v1392 = vld [vmem:[%s13 + $0x38] sm:$0xf]
    %v1393 = vld [vmem:[%s13 + $0x3c] sm:$0xf]
    %v1394 = vpack.c.bf16 %v1377, %v1376
    %v1395 = vld [vmem:[%s14] sm:$0x1]
    %v1397 = vlaneseq
    %v1398 = vshrl.u32 %v1397, 7
    %v1399 = vsub.s32 0, %v1398
    %v1400 = vrot.slane %v1395, %v1399
    %v1418 = vunpack.c.l.b16 %v1378
    %v1419 = vunpack.c.l.b16 %v1379
    %v1420 = vunpack.c.l.b16 %v1380
    %v1421 = vunpack.c.l.b16 %v1381
    %v1422 = vunpack.c.l.b16 %v1382
    %v1423 = vunpack.c.l.b16 %v1383
    %v1424 = vunpack.c.l.b16 %v1384
    %v1425 = vunpack.c.l.b16 %v1385
    %v1426 = vunpack.c.l.b16 %v1386
    %v1427 = vunpack.c.l.b16 %v1387
    %v1428 = vunpack.c.l.b16 %v1388
    %v1429 = vunpack.c.l.b16 %v1389
    %v1430 = vunpack.c.l.b16 %v1390
    %v1431 = vunpack.c.l.b16 %v1391
    %v1432 = vunpack.c.l.b16 %v1392
    %v1433 = vunpack.c.l.b16 %v1393
    %v1434 = vpack.c.b16 %v1419, %v1418
    %v1435 = vpack.c.b16 %v1421, %v1420
    %v1436 = vpack.c.b16 %v1423, %v1422
    %v1437 = vpack.c.b16 %v1425, %v1424
    %v1438 = vpack.c.b16 %v1427, %v1426
    %v1439 = vpack.c.b16 %v1429, %v1428
    %v1440 = vpack.c.b16 %v1431, %v1430
    %v1441 = vpack.c.b16 %v1433, %v1432
    %1450 = vmatprep.subr.bf16.mxu0 0
    %1451 = vmatpush1.bf16.msra.mxu0 %v1434
    %1452 = vmatprep.subr.bf16.mxu0 0
    %1453 = vmatpush1.bf16.msra.mxu0 %v1435
    %1454 = vmatprep.subr.bf16.mxu0 0
    %1455 = vmatpush1.bf16.msra.mxu0 %v1436
    %1456 = vmatprep.subr.bf16.mxu0 0
    %1457 = vmatpush1.bf16.msra.mxu0 %v1437
    %1458 = vmatprep.subr.bf16.mxu0 0
    %1459 = vmatpush1.bf16.msra.mxu0 %v1438
    %1460 = vmatprep.subr.bf16.mxu0 0
    %1461 = vmatpush1.bf16.msra.mxu0 %v1439
    %1462 = vmatprep.subr.bf16.mxu0 0
    %1463 = vmatpush1.bf16.msra.mxu0 %v1440
    %1464 = vmatprep.subr.bf16.mxu0 0
    %1465 = vmatpush1.bf16.msra.mxu0 %v1441
    %1466 = vmatprep.subr.bf16.mxu0 0
    %1467 = vmatpush1.bf16.msra.mxu0 0
    %1468 = vmatprep.subr.bf16.mxu0 0
    %1469 = vmatpush1.bf16.msra.mxu0 0
    %1470 = vmatprep.subr.bf16.mxu0 0
    %1471 = vmatpush1.bf16.msra.mxu0 0
    %1472 = vmatprep.subr.bf16.mxu0 0
    %1473 = vmatpush1.bf16.msra.mxu0 0
    %1474 = vmatprep.subr.bf16.mxu0 0
    %1475 = vmatpush1.bf16.msra.mxu0 0
    %1476 = vmatprep.subr.bf16.mxu0 0
    %1477 = vmatpush1.bf16.msra.mxu0 0
    %1478 = vmatprep.subr.bf16.mxu0 0
    %1479 = vmatpush1.bf16.msra.mxu0 0
    %1480 = vmatprep.subr.bf16.mxu0 0
    %1481 = vmatpush1.bf16.msra.mxu0 0
    %1482 = vmatprep.mubr.bf16.mxu0 0
    %1483 = vmatmul.mubr.bf16.gmra.mrb[0].mxu0 %v1394
    %v1484 = vpop.f32.mrb[0].mxu0
    %v1485 = vadd.f32 %v1400, %v1484
    %v1486 = vpop.f32.mrb[0].mxu0
    %v1487 = vpop.f32.mrb[0].mxu0
    %v1488 = vadd.f32 %v1400, %v1487
    %v1489 = vpop.f32.mrb[0].mxu0
    %1490 = vdwg.mxu0
    %v1491 = vadd.f32 %v1485, %v1274
    %v1492 = vadd.f32 %v1488, %v1275
    %v1493 = vld [vmem:[%s15] sm:$0x1]
    %v1494 = vld [vmem:[%s16] sm:$0x1]
    %v1495 = vsel %vm71, %v1491, 0.0
    %1496 = vadd.xlane.f32.xlu0 %v1495
    %v1497 = vpop.xlane.xlu0 %1496
    %v1498 = vsel %vm71, %v1492, 0.0
    %1499 = vadd.xlane.f32.xlu0 %v1498
    %v1500 = vpop.xlane.xlu0 %1499
    %v1501 = vmul.f32 %v1497, %v78
    %v1502 = vmul.f32 %v1500, %v78
    %v1503 = vsub.f32 %v1491, %v1501
    %v1504 = vsub.f32 %v1492, %v1502
    %v1505 = vmul.f32 %v1503, %v1503
    %v1506 = vmul.f32 %v1504, %v1504
    %v1507 = vsel %vm71, %v1505, 0.0
    %1508 = vadd.xlane.f32.xlu0 %v1507
    %v1509 = vpop.xlane.xlu0 %1508
    %v1510 = vsel %vm71, %v1506, 0.0
    %1511 = vadd.xlane.f32.xlu0 %v1510
    %v1512 = vpop.xlane.xlu0 %1511
    %v1513 = vmul.f32 %v1509, %v78
    %v1514 = vmul.f32 %v1512, %v78
    %v1515 = vadd.f32 %v1513, 1e-12
    %v1516 = vadd.f32 %v1514, 1e-12
    %v1517 = vrsqrt.pop %v1515
    %v1518 = vrsqrt.pop %v1516
    %v1519 = vmul.f32 %v1503, %v1517
    %v1520 = vmul.f32 %v1504, %v1518
    %v1522 = vlaneseq
    %v1523 = vshrl.u32 %v1522, 7
    %v1524 = vsub.s32 0, %v1523
    %v1525 = vrot.slane %v1493, %v1524
    %v1527 = vmul.f32 %v1519, %v1525
    %v1528 = vmul.f32 %v1520, %v1525
    %v1530 = vlaneseq
    %v1531 = vshrl.u32 %v1530, 7
    %v1532 = vsub.s32 0, %v1531
    %v1533 = vrot.slane %v1494, %v1532
    %v1535 = vadd.f32 %v1527, %v1533
    %v1536 = vadd.f32 %v1528, %v1533
    %s1537 = scalar_lea.vmem %s5, 64
    %v1538 = vld [vmem:[%s1537] sm:$0xff]
    %v1539 = vld [vmem:[%s1537 + $0x8] sm:$0xff]
    %v1540 = vld [vmem:[%s1537 + $0x10] sm:$0xff]
    %v1541 = vld [vmem:[%s1537 + $0x18] sm:$0xff]
    %v1542 = vld [vmem:[%s1537 + $0x20] sm:$0xff]
    %v1543 = vld [vmem:[%s1537 + $0x28] sm:$0xff]
    %v1544 = vld [vmem:[%s1537 + $0x30] sm:$0xff]
    %v1545 = vld [vmem:[%s1537 + $0x38] sm:$0xff]
    %v1546 = vpack.c.bf16 %v1536, %v1535
    %s1547 = scalar_lea.vmem %s6, 2
    %v1548 = vld [vmem:[%s1547] sm:$0x3]
    %v1550 = vlaneseq
    %v1551 = vshrl.u32 %v1550, 7
    %v1552 = vsub.s32 0, %v1551
    %v1553 = vrot.slane %v1548, %v1552
    %v1554 = vlaneseq
    %v1555 = vshrl.u32 %v1554, 7
    %v1556 = vsub.s32 1, %v1555
    %v1557 = vrot.slane %v1548, %v1556
    %v1568 = vunpack.c.l.b16 %v1538
    %v1569 = vunpack.c.h.b16 %v1538
    %v1570 = vunpack.c.l.b16 %v1539
    %v1571 = vunpack.c.h.b16 %v1539
    %v1572 = vunpack.c.l.b16 %v1540
    %v1573 = vunpack.c.h.b16 %v1540
    %v1574 = vunpack.c.l.b16 %v1541
    %v1575 = vunpack.c.h.b16 %v1541
    %v1576 = vunpack.c.l.b16 %v1542
    %v1577 = vunpack.c.h.b16 %v1542
    %v1578 = vunpack.c.l.b16 %v1543
    %v1579 = vunpack.c.h.b16 %v1543
    %v1580 = vunpack.c.l.b16 %v1544
    %v1581 = vunpack.c.h.b16 %v1544
    %v1582 = vunpack.c.l.b16 %v1545
    %v1583 = vunpack.c.h.b16 %v1545
    %v1584 = vpack.c.b16 %v1570, %v1568
    %v1585 = vpack.c.b16 %v1571, %v1569
    %v1586 = vpack.c.b16 %v1574, %v1572
    %v1587 = vpack.c.b16 %v1575, %v1573
    %v1588 = vpack.c.b16 %v1578, %v1576
    %v1589 = vpack.c.b16 %v1579, %v1577
    %v1590 = vpack.c.b16 %v1582, %v1580
    %v1591 = vpack.c.b16 %v1583, %v1581
    %v1601 = vsel %vm71, %v1546, 0
    %1603 = vmatprep.subr.bf16.mxu0 %v1585
    %1604 = vmatpush1.bf16.msra.mxu0 %v1584
    %1605 = vmatprep.subr.bf16.mxu0 %v1587
    %1606 = vmatpush1.bf16.msra.mxu0 %v1586
    %1607 = vmatprep.subr.bf16.mxu0 %v1589
    %1608 = vmatpush1.bf16.msra.mxu0 %v1588
    %1609 = vmatprep.subr.bf16.mxu0 %v1591
    %1610 = vmatpush1.bf16.msra.mxu0 %v1590
    %1611 = vmatprep.subr.bf16.mxu0 0
    %1612 = vmatpush1.bf16.msra.mxu0 0
    %1613 = vmatprep.subr.bf16.mxu0 0
    %1614 = vmatpush1.bf16.msra.mxu0 0
    %1615 = vmatprep.subr.bf16.mxu0 0
    %1616 = vmatpush1.bf16.msra.mxu0 0
    %1617 = vmatprep.subr.bf16.mxu0 0
    %1618 = vmatpush1.bf16.msra.mxu0 0
    %1619 = vmatprep.subr.bf16.mxu0 0
    %1620 = vmatpush1.bf16.msra.mxu0 0
    %1621 = vmatprep.subr.bf16.mxu0 0
    %1622 = vmatpush1.bf16.msra.mxu0 0
    %1623 = vmatprep.subr.bf16.mxu0 0
    %1624 = vmatpush1.bf16.msra.mxu0 0
    %1625 = vmatprep.subr.bf16.mxu0 0
    %1626 = vmatpush1.bf16.msra.mxu0 0
    %1627 = vmatprep.subr.bf16.mxu0 0
    %1628 = vmatpush1.bf16.msra.mxu0 0
    %1629 = vmatprep.subr.bf16.mxu0 0
    %1630 = vmatpush1.bf16.msra.mxu0 0
    %1631 = vmatprep.subr.bf16.mxu0 0
    %1632 = vmatpush1.bf16.msra.mxu0 0
    %1633 = vmatprep.subr.bf16.mxu0 0
    %1634 = vmatpush1.bf16.msra.mxu0 0
    %1635 = vmatprep.mubr.bf16.mxu0 0
    %1636 = vmatmul.mubr.bf16.gmra.mrb[0].mxu0 %v1601
    %v1637 = vpop.f32.mrb[0].mxu0
    %v1638 = vadd.f32 %v1553, %v1637
    %v1639 = vpop.f32.mrb[0].mxu0
    %v1640 = vadd.f32 %v1557, %v1639
    %v1641 = vpop.f32.mrb[0].mxu0
    %v1642 = vadd.f32 %v1553, %v1641
    %v1643 = vpop.f32.mrb[0].mxu0
    %v1644 = vadd.f32 %v1557, %v1643
    %1645 = vdwg.mxu0
    %v1646 = vpack.c.bf16 %v1638, %v1638
    %1648 = vrot.lane.b32.xlu0 %v1646, 64
    %v1649 = vpop.permute.xlu0 %1648
    %v1651 = vsel %vm231, %v1646, 0
    %v1654 = vsel %vm231, %v1649, 0
    %1656 = vmatprep.subr.bf16.mxu0 0
    %1657 = vmatpush1.bf16.xpose.msra.mxu0 %v1654
    %1658 = vmatprep.subr.bf16.mxu0 0
    %1659 = vmatpush1.bf16.xpose.msra.mxu0 0
    %1660 = vmatprep.subr.bf16.mxu0 0
    %1661 = vmatpush1.bf16.xpose.msra.mxu0 0
    %1662 = vmatprep.subr.bf16.mxu0 0
    %1663 = vmatpush1.bf16.xpose.msra.mxu0 0
    %1664 = vmatprep.subr.bf16.mxu0 0
    %1665 = vmatpush1.bf16.xpose.msra.mxu0 0
    %1666 = vmatprep.subr.bf16.mxu0 0
    %1667 = vmatpush1.bf16.xpose.msra.mxu0 0
    %1668 = vmatprep.subr.bf16.mxu0 0
    %1669 = vmatpush1.bf16.xpose.msra.mxu0 0
    %1670 = vmatprep.subr.bf16.mxu0 0
    %1671 = vmatpush1.bf16.xpose.msra.mxu0 0
    %1672 = vmatprep.subr.bf16.mxu0 0
    %1673 = vmatpush1.bf16.xpose.msra.mxu0 0
    %1674 = vmatprep.subr.bf16.mxu0 0
    %1675 = vmatpush1.bf16.xpose.msra.mxu0 0
    %1676 = vmatprep.subr.bf16.mxu0 0
    %1677 = vmatpush1.bf16.xpose.msra.mxu0 0
    %1678 = vmatprep.subr.bf16.mxu0 0
    %1679 = vmatpush1.bf16.xpose.msra.mxu0 0
    %1680 = vmatprep.subr.bf16.mxu0 0
    %1681 = vmatpush1.bf16.xpose.msra.mxu0 0
    %1682 = vmatprep.subr.bf16.mxu0 0
    %1683 = vmatpush1.bf16.xpose.msra.mxu0 0
    %1684 = vmatprep.subr.bf16.mxu0 0
    %1685 = vmatpush1.bf16.xpose.msra.mxu0 0
    %1686 = vmatprep.subr.bf16.mxu0 0
    %1687 = vmatpush1.bf16.xpose.msra.mxu0 0
    %1688 = vmatprep.mubr.bf16.mxu0 0
    %1689 = vmatmul.mubr.bf16.gmra.mrb[0].mxu0 %v1651
    %v1690 = vpop.f32.mrb[0].mxu0
    %v1691 = vadd.f32 %v227, %v1690
    %v1692 = vpop.f32.mrb[0].mxu0
    %v1693 = vpop.f32.mrb[0].mxu0
    %v1694 = vpop.f32.mrb[0].mxu0
    %1695 = vdwg.mxu0
    %v1696 = vsel %vm278, %v1691, -inf
    %1697 = vmax.xlane.f32.xlu0 %v1696
    %v1698 = vpop.xlane.xlu0 %1697
    %v1699 = vsub.f32 %v1691, %v1698
    %v1700 = vmul.f32 %v1699, 1.442695
    %v1701 = vpow.pop %v1700
    %v1702 = vsel %vm278, %v1701, 0.0
    %1703 = vadd.xlane.f32.xlu0 %v1702
    %v1704 = vpop.xlane.xlu0 %1703
    %v1705 = vrcp.pop %v1704
    %v1706 = vmul.f32 %v1701, %v1705
    %v1707 = vpack.c.bf16 %v1706, %v1706
    %v1708 = vpack.c.bf16 %v1640, %v1640
    %v1710 = vsel %vm278, %v1707, 0
    %v1713 = vsel %vm295, %v1708, 0
    %1715 = vmatprep.subr.bf16.mxu0 0
    %1716 = vmatpush1.bf16.msra.mxu0 %v1713
    %1717 = vmatprep.subr.bf16.mxu0 0
    %1718 = vmatpush1.bf16.msra.mxu0 0
    %1719 = vmatprep.subr.bf16.mxu0 0
    %1720 = vmatpush1.bf16.msra.mxu0 0
    %1721 = vmatprep.subr.bf16.mxu0 0
    %1722 = vmatpush1.bf16.msra.mxu0 0
    %1723 = vmatprep.subr.bf16.mxu0 0
    %1724 = vmatpush1.bf16.msra.mxu0 0
    %1725 = vmatprep.subr.bf16.mxu0 0
    %1726 = vmatpush1.bf16.msra.mxu0 0
    %1727 = vmatprep.subr.bf16.mxu0 0
    %1728 = vmatpush1.bf16.msra.mxu0 0
    %1729 = vmatprep.subr.bf16.mxu0 0
    %1730 = vmatpush1.bf16.msra.mxu0 0
    %1731 = vmatprep.subr.bf16.mxu0 0
    %1732 = vmatpush1.bf16.msra.mxu0 0
    %1733 = vmatprep.subr.bf16.mxu0 0
    %1734 = vmatpush1.bf16.msra.mxu0 0
    %1735 = vmatprep.subr.bf16.mxu0 0
    %1736 = vmatpush1.bf16.msra.mxu0 0
    %1737 = vmatprep.subr.bf16.mxu0 0
    %1738 = vmatpush1.bf16.msra.mxu0 0
    %1739 = vmatprep.subr.bf16.mxu0 0
    %1740 = vmatpush1.bf16.msra.mxu0 0
    %1741 = vmatprep.subr.bf16.mxu0 0
    %1742 = vmatpush1.bf16.msra.mxu0 0
    %1743 = vmatprep.subr.bf16.mxu0 0
    %1744 = vmatpush1.bf16.msra.mxu0 0
    %1745 = vmatprep.subr.bf16.mxu0 0
    %1746 = vmatpush1.bf16.msra.mxu0 0
    %1747 = vmatprep.mubr.bf16.mxu0 0
    %1748 = vmatmul.mubr.bf16.gmra.mrb[0].mxu0 %v1710
    %v1749 = vpop.f32.mrb[0].mxu0
    %v1750 = vadd.f32 0.0, %v1749
    %v1751 = vpop.f32.mrb[0].mxu0
    %v1752 = vpop.f32.mrb[0].mxu0
    %v1753 = vpop.f32.mrb[0].mxu0
    %1754 = vdwg.mxu0
    %1755 = vrot.lane.b32.xlu0 %v1646, 112
    %v1756 = vpop.permute.xlu0 %1755
    %1757 = vrot.lane.b32.xlu0 %v1646, 48
    %v1758 = vpop.permute.xlu0 %1757
    %v1760 = vsel %vm231, %v1756, 0
    %v1763 = vsel %vm231, %v1758, 0
    %1765 = vmatprep.subr.bf16.mxu0 0
    %1766 = vmatpush1.bf16.xpose.msra.mxu0 %v1763
    %1767 = vmatprep.subr.bf16.mxu0 0
    %1768 = vmatpush1.bf16.xpose.msra.mxu0 0
    %1769 = vmatprep.subr.bf16.mxu0 0
    %1770 = vmatpush1.bf16.xpose.msra.mxu0 0
    %1771 = vmatprep.subr.bf16.mxu0 0
    %1772 = vmatpush1.bf16.xpose.msra.mxu0 0
    %1773 = vmatprep.subr.bf16.mxu0 0
    %1774 = vmatpush1.bf16.xpose.msra.mxu0 0
    %1775 = vmatprep.subr.bf16.mxu0 0
    %1776 = vmatpush1.bf16.xpose.msra.mxu0 0
    %1777 = vmatprep.subr.bf16.mxu0 0
    %1778 = vmatpush1.bf16.xpose.msra.mxu0 0
    %1779 = vmatprep.subr.bf16.mxu0 0
    %1780 = vmatpush1.bf16.xpose.msra.mxu0 0
    %1781 = vmatprep.subr.bf16.mxu0 0
    %1782 = vmatpush1.bf16.xpose.msra.mxu0 0
    %1783 = vmatprep.subr.bf16.mxu0 0
    %1784 = vmatpush1.bf16.xpose.msra.mxu0 0
    %1785 = vmatprep.subr.bf16.mxu0 0
    %1786 = vmatpush1.bf16.xpose.msra.mxu0 0
    %1787 = vmatprep.subr.bf16.mxu0 0
    %1788 = vmatpush1.bf16.xpose.msra.mxu0 0
    %1789 = vmatprep.subr.bf16.mxu0 0
    %1790 = vmatpush1.bf16.xpose.msra.mxu0 0
    %1791 = vmatprep.subr.bf16.mxu0 0
    %1792 = vmatpush1.bf16.xpose.msra.mxu0 0
    %1793 = vmatprep.subr.bf16.mxu0 0
    %1794 = vmatpush1.bf16.xpose.msra.mxu0 0
    %1795 = vmatprep.subr.bf16.mxu0 0
    %1796 = vmatpush1.bf16.xpose.msra.mxu0 0
    %1797 = vmatprep.mubr.bf16.mxu0 0
    %1798 = vmatmul.mubr.bf16.gmra.mrb[0].mxu0 %v1760
    %v1799 = vpop.f32.mrb[0].mxu0
    %v1800 = vadd.f32 %v227, %v1799
    %v1801 = vpop.f32.mrb[0].mxu0
    %v1802 = vpop.f32.mrb[0].mxu0
    %v1803 = vpop.f32.mrb[0].mxu0
    %1804 = vdwg.mxu0
    %v1805 = vsel %vm278, %v1800, -inf
    %1806 = vmax.xlane.f32.xlu0 %v1805
    %v1807 = vpop.xlane.xlu0 %1806
    %v1808 = vsub.f32 %v1800, %v1807
    %v1809 = vmul.f32 %v1808, 1.442695
    %v1810 = vpow.pop %v1809
    %v1811 = vsel %vm278, %v1810, 0.0
    %1812 = vadd.xlane.f32.xlu0 %v1811
    %v1813 = vpop.xlane.xlu0 %1812
    %v1814 = vrcp.pop %v1813
    %v1815 = vmul.f32 %v1810, %v1814
    %v1816 = vpack.c.bf16 %v1815, %v1815
    %1818 = vrot.lane.b32.xlu0 %v1708, 112
    %v1819 = vpop.permute.xlu0 %1818
    %v1821 = vsel %vm278, %v1816, 0
    %v1824 = vsel %vm295, %v1819, 0
    %1826 = vmatprep.subr.bf16.mxu0 0
    %1827 = vmatpush1.bf16.msra.mxu0 %v1824
    %1828 = vmatprep.subr.bf16.mxu0 0
    %1829 = vmatpush1.bf16.msra.mxu0 0
    %1830 = vmatprep.subr.bf16.mxu0 0
    %1831 = vmatpush1.bf16.msra.mxu0 0
    %1832 = vmatprep.subr.bf16.mxu0 0
    %1833 = vmatpush1.bf16.msra.mxu0 0
    %1834 = vmatprep.subr.bf16.mxu0 0
    %1835 = vmatpush1.bf16.msra.mxu0 0
    %1836 = vmatprep.subr.bf16.mxu0 0
    %1837 = vmatpush1.bf16.msra.mxu0 0
    %1838 = vmatprep.subr.bf16.mxu0 0
    %1839 = vmatpush1.bf16.msra.mxu0 0
    %1840 = vmatprep.subr.bf16.mxu0 0
    %1841 = vmatpush1.bf16.msra.mxu0 0
    %1842 = vmatprep.subr.bf16.mxu0 0
    %1843 = vmatpush1.bf16.msra.mxu0 0
    %1844 = vmatprep.subr.bf16.mxu0 0
    %1845 = vmatpush1.bf16.msra.mxu0 0
    %1846 = vmatprep.subr.bf16.mxu0 0
    %1847 = vmatpush1.bf16.msra.mxu0 0
    %1848 = vmatprep.subr.bf16.mxu0 0
    %1849 = vmatpush1.bf16.msra.mxu0 0
    %1850 = vmatprep.subr.bf16.mxu0 0
    %1851 = vmatpush1.bf16.msra.mxu0 0
    %1852 = vmatprep.subr.bf16.mxu0 0
    %1853 = vmatpush1.bf16.msra.mxu0 0
    %1854 = vmatprep.subr.bf16.mxu0 0
    %1855 = vmatpush1.bf16.msra.mxu0 0
    %1856 = vmatprep.subr.bf16.mxu0 0
    %1857 = vmatpush1.bf16.msra.mxu0 0
    %1858 = vmatprep.mubr.bf16.mxu0 0
    %1859 = vmatmul.mubr.bf16.gmra.mrb[0].mxu0 %v1821
    %v1860 = vpop.f32.mrb[0].mxu0
    %v1861 = vadd.f32 0.0, %v1860
    %v1862 = vpop.f32.mrb[0].mxu0
    %v1863 = vpop.f32.mrb[0].mxu0
    %v1864 = vpop.f32.mrb[0].mxu0
    %1865 = vdwg.mxu0
    %1866 = vrot.lane.b32.xlu0 %v1646, 96
    %v1867 = vpop.permute.xlu0 %1866
    %1868 = vrot.lane.b32.xlu0 %v1646, 32
    %v1869 = vpop.permute.xlu0 %1868
    %v1871 = vsel %vm231, %v1867, 0
    %v1874 = vsel %vm231, %v1869, 0
    %1876 = vmatprep.subr.bf16.mxu0 0
    %1877 = vmatpush1.bf16.xpose.msra.mxu0 %v1874
    %1878 = vmatprep.subr.bf16.mxu0 0
    %1879 = vmatpush1.bf16.xpose.msra.mxu0 0
    %1880 = vmatprep.subr.bf16.mxu0 0
    %1881 = vmatpush1.bf16.xpose.msra.mxu0 0
    %1882 = vmatprep.subr.bf16.mxu0 0
    %1883 = vmatpush1.bf16.xpose.msra.mxu0 0
    %1884 = vmatprep.subr.bf16.mxu0 0
    %1885 = vmatpush1.bf16.xpose.msra.mxu0 0
    %1886 = vmatprep.subr.bf16.mxu0 0
    %1887 = vmatpush1.bf16.xpose.msra.mxu0 0
    %1888 = vmatprep.subr.bf16.mxu0 0
    %1889 = vmatpush1.bf16.xpose.msra.mxu0 0
    %1890 = vmatprep.subr.bf16.mxu0 0
    %1891 = vmatpush1.bf16.xpose.msra.mxu0 0
    %1892 = vmatprep.subr.bf16.mxu0 0
    %1893 = vmatpush1.bf16.xpose.msra.mxu0 0
    %1894 = vmatprep.subr.bf16.mxu0 0
    %1895 = vmatpush1.bf16.xpose.msra.mxu0 0
    %1896 = vmatprep.subr.bf16.mxu0 0
    %1897 = vmatpush1.bf16.xpose.msra.mxu0 0
    %1898 = vmatprep.subr.bf16.mxu0 0
    %1899 = vmatpush1.bf16.xpose.msra.mxu0 0
    %1900 = vmatprep.subr.bf16.mxu0 0
    %1901 = vmatpush1.bf16.xpose.msra.mxu0 0
    %1902 = vmatprep.subr.bf16.mxu0 0
    %1903 = vmatpush1.bf16.xpose.msra.mxu0 0
    %1904 = vmatprep.subr.bf16.mxu0 0
    %1905 = vmatpush1.bf16.xpose.msra.mxu0 0
    %1906 = vmatprep.subr.bf16.mxu0 0
    %1907 = vmatpush1.bf16.xpose.msra.mxu0 0
    %1908 = vmatprep.mubr.bf16.mxu0 0
    %1909 = vmatmul.mubr.bf16.gmra.mrb[0].mxu0 %v1871
    %v1910 = vpop.f32.mrb[0].mxu0
    %v1911 = vadd.f32 %v227, %v1910
    %v1912 = vpop.f32.mrb[0].mxu0
    %v1913 = vpop.f32.mrb[0].mxu0
    %v1914 = vpop.f32.mrb[0].mxu0
    %1915 = vdwg.mxu0
    %v1916 = vsel %vm278, %v1911, -inf
    %1917 = vmax.xlane.f32.xlu0 %v1916
    %v1918 = vpop.xlane.xlu0 %1917
    %v1919 = vsub.f32 %v1911, %v1918
    %v1920 = vmul.f32 %v1919, 1.442695
    %v1921 = vpow.pop %v1920
    %v1922 = vsel %vm278, %v1921, 0.0
    %1923 = vadd.xlane.f32.xlu0 %v1922
    %v1924 = vpop.xlane.xlu0 %1923
    %v1925 = vrcp.pop %v1924
    %v1926 = vmul.f32 %v1921, %v1925
    %v1927 = vpack.c.bf16 %v1926, %v1926
    %1928 = vrot.lane.b32.xlu0 %v1708, 96
    %v1929 = vpop.permute.xlu0 %1928
    %v1931 = vsel %vm278, %v1927, 0
    %v1934 = vsel %vm295, %v1929, 0
    %1936 = vmatprep.subr.bf16.mxu0 0
    %1937 = vmatpush1.bf16.msra.mxu0 %v1934
    %1938 = vmatprep.subr.bf16.mxu0 0
    %1939 = vmatpush1.bf16.msra.mxu0 0
    %1940 = vmatprep.subr.bf16.mxu0 0
    %1941 = vmatpush1.bf16.msra.mxu0 0
    %1942 = vmatprep.subr.bf16.mxu0 0
    %1943 = vmatpush1.bf16.msra.mxu0 0
    %1944 = vmatprep.subr.bf16.mxu0 0
    %1945 = vmatpush1.bf16.msra.mxu0 0
    %1946 = vmatprep.subr.bf16.mxu0 0
    %1947 = vmatpush1.bf16.msra.mxu0 0
    %1948 = vmatprep.subr.bf16.mxu0 0
    %1949 = vmatpush1.bf16.msra.mxu0 0
    %1950 = vmatprep.subr.bf16.mxu0 0
    %1951 = vmatpush1.bf16.msra.mxu0 0
    %1952 = vmatprep.subr.bf16.mxu0 0
    %1953 = vmatpush1.bf16.msra.mxu0 0
    %1954 = vmatprep.subr.bf16.mxu0 0
    %1955 = vmatpush1.bf16.msra.mxu0 0
    %1956 = vmatprep.subr.bf16.mxu0 0
    %1957 = vmatpush1.bf16.msra.mxu0 0
    %1958 = vmatprep.subr.bf16.mxu0 0
    %1959 = vmatpush1.bf16.msra.mxu0 0
    %1960 = vmatprep.subr.bf16.mxu0 0
    %1961 = vmatpush1.bf16.msra.mxu0 0
    %1962 = vmatprep.subr.bf16.mxu0 0
    %1963 = vmatpush1.bf16.msra.mxu0 0
    %1964 = vmatprep.subr.bf16.mxu0 0
    %1965 = vmatpush1.bf16.msra.mxu0 0
    %1966 = vmatprep.subr.bf16.mxu0 0
    %1967 = vmatpush1.bf16.msra.mxu0 0
    %1968 = vmatprep.mubr.bf16.mxu0 0
    %1969 = vmatmul.mubr.bf16.gmra.mrb[0].mxu0 %v1931
    %v1970 = vpop.f32.mrb[0].mxu0
    %v1971 = vadd.f32 0.0, %v1970
    %v1972 = vpop.f32.mrb[0].mxu0
    %v1973 = vpop.f32.mrb[0].mxu0
    %v1974 = vpop.f32.mrb[0].mxu0
    %1975 = vdwg.mxu0
    %1976 = vrot.lane.b32.xlu0 %v1646, 80
    %v1977 = vpop.permute.xlu0 %1976
    %1978 = vrot.lane.b32.xlu0 %v1646, 16
    %v1979 = vpop.permute.xlu0 %1978
    %v1981 = vsel %vm231, %v1977, 0
    %v1984 = vsel %vm231, %v1979, 0
    %1986 = vmatprep.subr.bf16.mxu0 0
    %1987 = vmatpush1.bf16.xpose.msra.mxu0 %v1984
    %1988 = vmatprep.subr.bf16.mxu0 0
    %1989 = vmatpush1.bf16.xpose.msra.mxu0 0
    %1990 = vmatprep.subr.bf16.mxu0 0
    %1991 = vmatpush1.bf16.xpose.msra.mxu0 0
    %1992 = vmatprep.subr.bf16.mxu0 0
    %1993 = vmatpush1.bf16.xpose.msra.mxu0 0
    %1994 = vmatprep.subr.bf16.mxu0 0
    %1995 = vmatpush1.bf16.xpose.msra.mxu0 0
    %1996 = vmatprep.subr.bf16.mxu0 0
    %1997 = vmatpush1.bf16.xpose.msra.mxu0 0
    %1998 = vmatprep.subr.bf16.mxu0 0
    %1999 = vmatpush1.bf16.xpose.msra.mxu0 0
    %2000 = vmatprep.subr.bf16.mxu0 0
    %2001 = vmatpush1.bf16.xpose.msra.mxu0 0
    %2002 = vmatprep.subr.bf16.mxu0 0
    %2003 = vmatpush1.bf16.xpose.msra.mxu0 0
    %2004 = vmatprep.subr.bf16.mxu0 0
    %2005 = vmatpush1.bf16.xpose.msra.mxu0 0
    %2006 = vmatprep.subr.bf16.mxu0 0
    %2007 = vmatpush1.bf16.xpose.msra.mxu0 0
    %2008 = vmatprep.subr.bf16.mxu0 0
    %2009 = vmatpush1.bf16.xpose.msra.mxu0 0
    %2010 = vmatprep.subr.bf16.mxu0 0
    %2011 = vmatpush1.bf16.xpose.msra.mxu0 0
    %2012 = vmatprep.subr.bf16.mxu0 0
    %2013 = vmatpush1.bf16.xpose.msra.mxu0 0
    %2014 = vmatprep.subr.bf16.mxu0 0
    %2015 = vmatpush1.bf16.xpose.msra.mxu0 0
    %2016 = vmatprep.subr.bf16.mxu0 0
    %2017 = vmatpush1.bf16.xpose.msra.mxu0 0
    %2018 = vmatprep.mubr.bf16.mxu0 0
    %2019 = vmatmul.mubr.bf16.gmra.mrb[0].mxu0 %v1981
    %v2020 = vpop.f32.mrb[0].mxu0
    %v2021 = vadd.f32 %v227, %v2020
    %v2022 = vpop.f32.mrb[0].mxu0
    %v2023 = vpop.f32.mrb[0].mxu0
    %v2024 = vpop.f32.mrb[0].mxu0
    %2025 = vdwg.mxu0
    %v2026 = vsel %vm278, %v2021, -inf
    %2027 = vmax.xlane.f32.xlu0 %v2026
    %v2028 = vpop.xlane.xlu0 %2027
    %v2029 = vsub.f32 %v2021, %v2028
    %v2030 = vmul.f32 %v2029, 1.442695
    %v2031 = vpow.pop %v2030
    %v2032 = vsel %vm278, %v2031, 0.0
    %2033 = vadd.xlane.f32.xlu0 %v2032
    %v2034 = vpop.xlane.xlu0 %2033
    %v2035 = vrcp.pop %v2034
    %v2036 = vmul.f32 %v2031, %v2035
    %v2037 = vpack.c.bf16 %v2036, %v2036
    %2038 = vrot.lane.b32.xlu0 %v1708, 80
    %v2039 = vpop.permute.xlu0 %2038
    %v2041 = vsel %vm278, %v2037, 0
    %v2044 = vsel %vm295, %v2039, 0
    %2046 = vmatprep.subr.bf16.mxu0 0
    %2047 = vmatpush1.bf16.msra.mxu0 %v2044
    %2048 = vmatprep.subr.bf16.mxu0 0
    %2049 = vmatpush1.bf16.msra.mxu0 0
    %2050 = vmatprep.subr.bf16.mxu0 0
    %2051 = vmatpush1.bf16.msra.mxu0 0
    %2052 = vmatprep.subr.bf16.mxu0 0
    %2053 = vmatpush1.bf16.msra.mxu0 0
    %2054 = vmatprep.subr.bf16.mxu0 0
    %2055 = vmatpush1.bf16.msra.mxu0 0
    %2056 = vmatprep.subr.bf16.mxu0 0
    %2057 = vmatpush1.bf16.msra.mxu0 0
    %2058 = vmatprep.subr.bf16.mxu0 0
    %2059 = vmatpush1.bf16.msra.mxu0 0
    %2060 = vmatprep.subr.bf16.mxu0 0
    %2061 = vmatpush1.bf16.msra.mxu0 0
    %2062 = vmatprep.subr.bf16.mxu0 0
    %2063 = vmatpush1.bf16.msra.mxu0 0
    %2064 = vmatprep.subr.bf16.mxu0 0
    %2065 = vmatpush1.bf16.msra.mxu0 0
    %2066 = vmatprep.subr.bf16.mxu0 0
    %2067 = vmatpush1.bf16.msra.mxu0 0
    %2068 = vmatprep.subr.bf16.mxu0 0
    %2069 = vmatpush1.bf16.msra.mxu0 0
    %2070 = vmatprep.subr.bf16.mxu0 0
    %2071 = vmatpush1.bf16.msra.mxu0 0
    %2072 = vmatprep.subr.bf16.mxu0 0
    %2073 = vmatpush1.bf16.msra.mxu0 0
    %2074 = vmatprep.subr.bf16.mxu0 0
    %2075 = vmatpush1.bf16.msra.mxu0 0
    %2076 = vmatprep.subr.bf16.mxu0 0
    %2077 = vmatpush1.bf16.msra.mxu0 0
    %2078 = vmatprep.mubr.bf16.mxu0 0
    %2079 = vmatmul.mubr.bf16.gmra.mrb[0].mxu0 %v2041
    %v2080 = vpop.f32.mrb[0].mxu0
    %v2081 = vadd.f32 0.0, %v2080
    %v2082 = vpop.f32.mrb[0].mxu0
    %v2083 = vpop.f32.mrb[0].mxu0
    %v2084 = vpop.f32.mrb[0].mxu0
    %2085 = vdwg.mxu0
    %2087 = vrot.lane.b32.xlu0 %v1861, 16
    %v2088 = vpop.permute.xlu0 %2087
    %2091 = vrot.lane.b32.xlu0 %v1971, 32
    %v2092 = vpop.permute.xlu0 %2091
    %2095 = vrot.lane.b32.xlu0 %v2081, 48
    %v2096 = vpop.permute.xlu0 %2095
    %v2098 = vsel %vm231, %v1750, %v2088
    %v2099 = vsel %vm683, %v2098, %v2092
    %v2100 = vsel %vm685, %v2099, %v2096
    %v2101 = vpack.c.bf16 %v1642, %v1642
    %2103 = vrot.lane.b32.xlu0 %v2101, 64
    %v2104 = vpop.permute.xlu0 %2103
    %v2106 = vsel %vm231, %v2101, 0
    %v2109 = vsel %vm231, %v2104, 0
    %2111 = vmatprep.subr.bf16.mxu0 0
    %2112 = vmatpush1.bf16.xpose.msra.mxu0 %v2109
    %2113 = vmatprep.subr.bf16.mxu0 0
    %2114 = vmatpush1.bf16.xpose.msra.mxu0 0
    %2115 = vmatprep.subr.bf16.mxu0 0
    %2116 = vmatpush1.bf16.xpose.msra.mxu0 0
    %2117 = vmatprep.subr.bf16.mxu0 0
    %2118 = vmatpush1.bf16.xpose.msra.mxu0 0
    %2119 = vmatprep.subr.bf16.mxu0 0
    %2120 = vmatpush1.bf16.xpose.msra.mxu0 0
    %2121 = vmatprep.subr.bf16.mxu0 0
    %2122 = vmatpush1.bf16.xpose.msra.mxu0 0
    %2123 = vmatprep.subr.bf16.mxu0 0
    %2124 = vmatpush1.bf16.xpose.msra.mxu0 0
    %2125 = vmatprep.subr.bf16.mxu0 0
    %2126 = vmatpush1.bf16.xpose.msra.mxu0 0
    %2127 = vmatprep.subr.bf16.mxu0 0
    %2128 = vmatpush1.bf16.xpose.msra.mxu0 0
    %2129 = vmatprep.subr.bf16.mxu0 0
    %2130 = vmatpush1.bf16.xpose.msra.mxu0 0
    %2131 = vmatprep.subr.bf16.mxu0 0
    %2132 = vmatpush1.bf16.xpose.msra.mxu0 0
    %2133 = vmatprep.subr.bf16.mxu0 0
    %2134 = vmatpush1.bf16.xpose.msra.mxu0 0
    %2135 = vmatprep.subr.bf16.mxu0 0
    %2136 = vmatpush1.bf16.xpose.msra.mxu0 0
    %2137 = vmatprep.subr.bf16.mxu0 0
    %2138 = vmatpush1.bf16.xpose.msra.mxu0 0
    %2139 = vmatprep.subr.bf16.mxu0 0
    %2140 = vmatpush1.bf16.xpose.msra.mxu0 0
    %2141 = vmatprep.subr.bf16.mxu0 0
    %2142 = vmatpush1.bf16.xpose.msra.mxu0 0
    %2143 = vmatprep.mubr.bf16.mxu0 0
    %2144 = vmatmul.mubr.bf16.gmra.mrb[0].mxu0 %v2106
    %v2145 = vpop.f32.mrb[0].mxu0
    %v2146 = vadd.f32 %v691, %v2145
    %v2147 = vpop.f32.mrb[0].mxu0
    %v2148 = vpop.f32.mrb[0].mxu0
    %v2149 = vpop.f32.mrb[0].mxu0
    %2150 = vdwg.mxu0
    %v2151 = vsel %vm278, %v2146, -inf
    %2152 = vmax.xlane.f32.xlu0 %v2151
    %v2153 = vpop.xlane.xlu0 %2152
    %v2154 = vsub.f32 %v2146, %v2153
    %v2155 = vmul.f32 %v2154, 1.442695
    %v2156 = vpow.pop %v2155
    %v2157 = vsel %vm278, %v2156, 0.0
    %2158 = vadd.xlane.f32.xlu0 %v2157
    %v2159 = vpop.xlane.xlu0 %2158
    %v2160 = vrcp.pop %v2159
    %v2161 = vmul.f32 %v2156, %v2160
    %v2162 = vpack.c.bf16 %v2161, %v2161
    %v2163 = vpack.c.bf16 %v1644, %v1644
    %v2165 = vsel %vm278, %v2162, 0
    %v2168 = vsel %vm295, %v2163, 0
    %2170 = vmatprep.subr.bf16.mxu0 0
    %2171 = vmatpush1.bf16.msra.mxu0 %v2168
    %2172 = vmatprep.subr.bf16.mxu0 0
    %2173 = vmatpush1.bf16.msra.mxu0 0
    %2174 = vmatprep.subr.bf16.mxu0 0
    %2175 = vmatpush1.bf16.msra.mxu0 0
    %2176 = vmatprep.subr.bf16.mxu0 0
    %2177 = vmatpush1.bf16.msra.mxu0 0
    %2178 = vmatprep.subr.bf16.mxu0 0
    %2179 = vmatpush1.bf16.msra.mxu0 0
    %2180 = vmatprep.subr.bf16.mxu0 0
    %2181 = vmatpush1.bf16.msra.mxu0 0
    %2182 = vmatprep.subr.bf16.mxu0 0
    %2183 = vmatpush1.bf16.msra.mxu0 0
    %2184 = vmatprep.subr.bf16.mxu0 0
    %2185 = vmatpush1.bf16.msra.mxu0 0
    %2186 = vmatprep.subr.bf16.mxu0 0
    %2187 = vmatpush1.bf16.msra.mxu0 0
    %2188 = vmatprep.subr.bf16.mxu0 0
    %2189 = vmatpush1.bf16.msra.mxu0 0
    %2190 = vmatprep.subr.bf16.mxu0 0
    %2191 = vmatpush1.bf16.msra.mxu0 0
    %2192 = vmatprep.subr.bf16.mxu0 0
    %2193 = vmatpush1.bf16.msra.mxu0 0
    %2194 = vmatprep.subr.bf16.mxu0 0
    %2195 = vmatpush1.bf16.msra.mxu0 0
    %2196 = vmatprep.subr.bf16.mxu0 0
    %2197 = vmatpush1.bf16.msra.mxu0 0
    %2198 = vmatprep.subr.bf16.mxu0 0
    %2199 = vmatpush1.bf16.msra.mxu0 0
    %2200 = vmatprep.subr.bf16.mxu0 0
    %2201 = vmatpush1.bf16.msra.mxu0 0
    %2202 = vmatprep.mubr.bf16.mxu0 0
    %2203 = vmatmul.mubr.bf16.gmra.mrb[0].mxu0 %v2165
    %v2204 = vpop.f32.mrb[0].mxu0
    %v2205 = vadd.f32 0.0, %v2204
    %v2206 = vpop.f32.mrb[0].mxu0
    %v2207 = vpop.f32.mrb[0].mxu0
    %v2208 = vpop.f32.mrb[0].mxu0
    %2209 = vdwg.mxu0
    %2210 = vrot.lane.b32.xlu0 %v2101, 112
    %v2211 = vpop.permute.xlu0 %2210
    %2212 = vrot.lane.b32.xlu0 %v2101, 48
    %v2213 = vpop.permute.xlu0 %2212
    %v2215 = vsel %vm231, %v2211, 0
    %v2218 = vsel %vm231, %v2213, 0
    %2220 = vmatprep.subr.bf16.mxu0 0
    %2221 = vmatpush1.bf16.xpose.msra.mxu0 %v2218
    %2222 = vmatprep.subr.bf16.mxu0 0
    %2223 = vmatpush1.bf16.xpose.msra.mxu0 0
    %2224 = vmatprep.subr.bf16.mxu0 0
    %2225 = vmatpush1.bf16.xpose.msra.mxu0 0
    %2226 = vmatprep.subr.bf16.mxu0 0
    %2227 = vmatpush1.bf16.xpose.msra.mxu0 0
    %2228 = vmatprep.subr.bf16.mxu0 0
    %2229 = vmatpush1.bf16.xpose.msra.mxu0 0
    %2230 = vmatprep.subr.bf16.mxu0 0
    %2231 = vmatpush1.bf16.xpose.msra.mxu0 0
    %2232 = vmatprep.subr.bf16.mxu0 0
    %2233 = vmatpush1.bf16.xpose.msra.mxu0 0
    %2234 = vmatprep.subr.bf16.mxu0 0
    %2235 = vmatpush1.bf16.xpose.msra.mxu0 0
    %2236 = vmatprep.subr.bf16.mxu0 0
    %2237 = vmatpush1.bf16.xpose.msra.mxu0 0
    %2238 = vmatprep.subr.bf16.mxu0 0
    %2239 = vmatpush1.bf16.xpose.msra.mxu0 0
    %2240 = vmatprep.subr.bf16.mxu0 0
    %2241 = vmatpush1.bf16.xpose.msra.mxu0 0
    %2242 = vmatprep.subr.bf16.mxu0 0
    %2243 = vmatpush1.bf16.xpose.msra.mxu0 0
    %2244 = vmatprep.subr.bf16.mxu0 0
    %2245 = vmatpush1.bf16.xpose.msra.mxu0 0
    %2246 = vmatprep.subr.bf16.mxu0 0
    %2247 = vmatpush1.bf16.xpose.msra.mxu0 0
    %2248 = vmatprep.subr.bf16.mxu0 0
    %2249 = vmatpush1.bf16.xpose.msra.mxu0 0
    %2250 = vmatprep.subr.bf16.mxu0 0
    %2251 = vmatpush1.bf16.xpose.msra.mxu0 0
    %2252 = vmatprep.mubr.bf16.mxu0 0
    %2253 = vmatmul.mubr.bf16.gmra.mrb[0].mxu0 %v2215
    %v2254 = vpop.f32.mrb[0].mxu0
    %v2255 = vadd.f32 %v691, %v2254
    %v2256 = vpop.f32.mrb[0].mxu0
    %v2257 = vpop.f32.mrb[0].mxu0
    %v2258 = vpop.f32.mrb[0].mxu0
    %2259 = vdwg.mxu0
    %v2260 = vsel %vm278, %v2255, -inf
    %2261 = vmax.xlane.f32.xlu0 %v2260
    %v2262 = vpop.xlane.xlu0 %2261
    %v2263 = vsub.f32 %v2255, %v2262
    %v2264 = vmul.f32 %v2263, 1.442695
    %v2265 = vpow.pop %v2264
    %v2266 = vsel %vm278, %v2265, 0.0
    %2267 = vadd.xlane.f32.xlu0 %v2266
    %v2268 = vpop.xlane.xlu0 %2267
    %v2269 = vrcp.pop %v2268
    %v2270 = vmul.f32 %v2265, %v2269
    %v2271 = vpack.c.bf16 %v2270, %v2270
    %2273 = vrot.lane.b32.xlu0 %v2163, 112
    %v2274 = vpop.permute.xlu0 %2273
    %v2276 = vsel %vm278, %v2271, 0
    %v2279 = vsel %vm295, %v2274, 0
    %2281 = vmatprep.subr.bf16.mxu0 0
    %2282 = vmatpush1.bf16.msra.mxu0 %v2279
    %2283 = vmatprep.subr.bf16.mxu0 0
    %2284 = vmatpush1.bf16.msra.mxu0 0
    %2285 = vmatprep.subr.bf16.mxu0 0
    %2286 = vmatpush1.bf16.msra.mxu0 0
    %2287 = vmatprep.subr.bf16.mxu0 0
    %2288 = vmatpush1.bf16.msra.mxu0 0
    %2289 = vmatprep.subr.bf16.mxu0 0
    %2290 = vmatpush1.bf16.msra.mxu0 0
    %2291 = vmatprep.subr.bf16.mxu0 0
    %2292 = vmatpush1.bf16.msra.mxu0 0
    %2293 = vmatprep.subr.bf16.mxu0 0
    %2294 = vmatpush1.bf16.msra.mxu0 0
    %2295 = vmatprep.subr.bf16.mxu0 0
    %2296 = vmatpush1.bf16.msra.mxu0 0
    %2297 = vmatprep.subr.bf16.mxu0 0
    %2298 = vmatpush1.bf16.msra.mxu0 0
    %2299 = vmatprep.subr.bf16.mxu0 0
    %2300 = vmatpush1.bf16.msra.mxu0 0
    %2301 = vmatprep.subr.bf16.mxu0 0
    %2302 = vmatpush1.bf16.msra.mxu0 0
    %2303 = vmatprep.subr.bf16.mxu0 0
    %2304 = vmatpush1.bf16.msra.mxu0 0
    %2305 = vmatprep.subr.bf16.mxu0 0
    %2306 = vmatpush1.bf16.msra.mxu0 0
    %2307 = vmatprep.subr.bf16.mxu0 0
    %2308 = vmatpush1.bf16.msra.mxu0 0
    %2309 = vmatprep.subr.bf16.mxu0 0
    %2310 = vmatpush1.bf16.msra.mxu0 0
    %2311 = vmatprep.subr.bf16.mxu0 0
    %2312 = vmatpush1.bf16.msra.mxu0 0
    %2313 = vmatprep.mubr.bf16.mxu0 0
    %2314 = vmatmul.mubr.bf16.gmra.mrb[0].mxu0 %v2276
    %v2315 = vpop.f32.mrb[0].mxu0
    %v2316 = vadd.f32 0.0, %v2315
    %v2317 = vpop.f32.mrb[0].mxu0
    %v2318 = vpop.f32.mrb[0].mxu0
    %v2319 = vpop.f32.mrb[0].mxu0
    %2320 = vdwg.mxu0
    %2321 = vrot.lane.b32.xlu0 %v2101, 96
    %v2322 = vpop.permute.xlu0 %2321
    %2323 = vrot.lane.b32.xlu0 %v2101, 32
    %v2324 = vpop.permute.xlu0 %2323
    %v2326 = vsel %vm231, %v2322, 0
    %v2329 = vsel %vm231, %v2324, 0
    %2331 = vmatprep.subr.bf16.mxu0 0
    %2332 = vmatpush1.bf16.xpose.msra.mxu0 %v2329
    %2333 = vmatprep.subr.bf16.mxu0 0
    %2334 = vmatpush1.bf16.xpose.msra.mxu0 0
    %2335 = vmatprep.subr.bf16.mxu0 0
    %2336 = vmatpush1.bf16.xpose.msra.mxu0 0
    %2337 = vmatprep.subr.bf16.mxu0 0
    %2338 = vmatpush1.bf16.xpose.msra.mxu0 0
    %2339 = vmatprep.subr.bf16.mxu0 0
    %2340 = vmatpush1.bf16.xpose.msra.mxu0 0
    %2341 = vmatprep.subr.bf16.mxu0 0
    %2342 = vmatpush1.bf16.xpose.msra.mxu0 0
    %2343 = vmatprep.subr.bf16.mxu0 0
    %2344 = vmatpush1.bf16.xpose.msra.mxu0 0
    %2345 = vmatprep.subr.bf16.mxu0 0
    %2346 = vmatpush1.bf16.xpose.msra.mxu0 0
    %2347 = vmatprep.subr.bf16.mxu0 0
    %2348 = vmatpush1.bf16.xpose.msra.mxu0 0
    %2349 = vmatprep.subr.bf16.mxu0 0
    %2350 = vmatpush1.bf16.xpose.msra.mxu0 0
    %2351 = vmatprep.subr.bf16.mxu0 0
    %2352 = vmatpush1.bf16.xpose.msra.mxu0 0
    %2353 = vmatprep.subr.bf16.mxu0 0
    %2354 = vmatpush1.bf16.xpose.msra.mxu0 0
    %2355 = vmatprep.subr.bf16.mxu0 0
    %2356 = vmatpush1.bf16.xpose.msra.mxu0 0
    %2357 = vmatprep.subr.bf16.mxu0 0
    %2358 = vmatpush1.bf16.xpose.msra.mxu0 0
    %2359 = vmatprep.subr.bf16.mxu0 0
    %2360 = vmatpush1.bf16.xpose.msra.mxu0 0
    %2361 = vmatprep.subr.bf16.mxu0 0
    %2362 = vmatpush1.bf16.xpose.msra.mxu0 0
    %2363 = vmatprep.mubr.bf16.mxu0 0
    %2364 = vmatmul.mubr.bf16.gmra.mrb[0].mxu0 %v2326
    %v2365 = vpop.f32.mrb[0].mxu0
    %v2366 = vadd.f32 %v691, %v2365
    %v2367 = vpop.f32.mrb[0].mxu0
    %v2368 = vpop.f32.mrb[0].mxu0
    %v2369 = vpop.f32.mrb[0].mxu0
    %2370 = vdwg.mxu0
    %v2371 = vsel %vm278, %v2366, -inf
    %2372 = vmax.xlane.f32.xlu0 %v2371
    %v2373 = vpop.xlane.xlu0 %2372
    %v2374 = vsub.f32 %v2366, %v2373
    %v2375 = vmul.f32 %v2374, 1.442695
    %v2376 = vpow.pop %v2375
    %v2377 = vsel %vm278, %v2376, 0.0
    %2378 = vadd.xlane.f32.xlu0 %v2377
    %v2379 = vpop.xlane.xlu0 %2378
    %v2380 = vrcp.pop %v2379
    %v2381 = vmul.f32 %v2376, %v2380
    %v2382 = vpack.c.bf16 %v2381, %v2381
    %2383 = vrot.lane.b32.xlu0 %v2163, 96
    %v2384 = vpop.permute.xlu0 %2383
    %v2386 = vsel %vm278, %v2382, 0
    %v2389 = vsel %vm295, %v2384, 0
    %2391 = vmatprep.subr.bf16.mxu0 0
    %2392 = vmatpush1.bf16.msra.mxu0 %v2389
    %2393 = vmatprep.subr.bf16.mxu0 0
    %2394 = vmatpush1.bf16.msra.mxu0 0
    %2395 = vmatprep.subr.bf16.mxu0 0
    %2396 = vmatpush1.bf16.msra.mxu0 0
    %2397 = vmatprep.subr.bf16.mxu0 0
    %2398 = vmatpush1.bf16.msra.mxu0 0
    %2399 = vmatprep.subr.bf16.mxu0 0
    %2400 = vmatpush1.bf16.msra.mxu0 0
    %2401 = vmatprep.subr.bf16.mxu0 0
    %2402 = vmatpush1.bf16.msra.mxu0 0
    %2403 = vmatprep.subr.bf16.mxu0 0
    %2404 = vmatpush1.bf16.msra.mxu0 0
    %2405 = vmatprep.subr.bf16.mxu0 0
    %2406 = vmatpush1.bf16.msra.mxu0 0
    %2407 = vmatprep.subr.bf16.mxu0 0
    %2408 = vmatpush1.bf16.msra.mxu0 0
    %2409 = vmatprep.subr.bf16.mxu0 0
    %2410 = vmatpush1.bf16.msra.mxu0 0
    %2411 = vmatprep.subr.bf16.mxu0 0
    %2412 = vmatpush1.bf16.msra.mxu0 0
    %2413 = vmatprep.subr.bf16.mxu0 0
    %2414 = vmatpush1.bf16.msra.mxu0 0
    %2415 = vmatprep.subr.bf16.mxu0 0
    %2416 = vmatpush1.bf16.msra.mxu0 0
    %2417 = vmatprep.subr.bf16.mxu0 0
    %2418 = vmatpush1.bf16.msra.mxu0 0
    %2419 = vmatprep.subr.bf16.mxu0 0
    %2420 = vmatpush1.bf16.msra.mxu0 0
    %2421 = vmatprep.subr.bf16.mxu0 0
    %2422 = vmatpush1.bf16.msra.mxu0 0
    %2423 = vmatprep.mubr.bf16.mxu0 0
    %2424 = vmatmul.mubr.bf16.gmra.mrb[0].mxu0 %v2386
    %v2425 = vpop.f32.mrb[0].mxu0
    %v2426 = vadd.f32 0.0, %v2425
    %v2427 = vpop.f32.mrb[0].mxu0
    %v2428 = vpop.f32.mrb[0].mxu0
    %v2429 = vpop.f32.mrb[0].mxu0
    %2430 = vdwg.mxu0
    %2431 = vrot.lane.b32.xlu0 %v2101, 80
    %v2432 = vpop.permute.xlu0 %2431
    %2433 = vrot.lane.b32.xlu0 %v2101, 16
    %v2434 = vpop.permute.xlu0 %2433
    %v2436 = vsel %vm231, %v2432, 0
    %v2439 = vsel %vm231, %v2434, 0
    %2441 = vmatprep.subr.bf16.mxu0 0
    %2442 = vmatpush1.bf16.xpose.msra.mxu0 %v2439
    %2443 = vmatprep.subr.bf16.mxu0 0
    %2444 = vmatpush1.bf16.xpose.msra.mxu0 0
    %2445 = vmatprep.subr.bf16.mxu0 0
    %2446 = vmatpush1.bf16.xpose.msra.mxu0 0
    %2447 = vmatprep.subr.bf16.mxu0 0
    %2448 = vmatpush1.bf16.xpose.msra.mxu0 0
    %2449 = vmatprep.subr.bf16.mxu0 0
    %2450 = vmatpush1.bf16.xpose.msra.mxu0 0
    %2451 = vmatprep.subr.bf16.mxu0 0
    %2452 = vmatpush1.bf16.xpose.msra.mxu0 0
    %2453 = vmatprep.subr.bf16.mxu0 0
    %2454 = vmatpush1.bf16.xpose.msra.mxu0 0
    %2455 = vmatprep.subr.bf16.mxu0 0
    %2456 = vmatpush1.bf16.xpose.msra.mxu0 0
    %2457 = vmatprep.subr.bf16.mxu0 0
    %2458 = vmatpush1.bf16.xpose.msra.mxu0 0
    %2459 = vmatprep.subr.bf16.mxu0 0
    %2460 = vmatpush1.bf16.xpose.msra.mxu0 0
    %2461 = vmatprep.subr.bf16.mxu0 0
    %2462 = vmatpush1.bf16.xpose.msra.mxu0 0
    %2463 = vmatprep.subr.bf16.mxu0 0
    %2464 = vmatpush1.bf16.xpose.msra.mxu0 0
    %2465 = vmatprep.subr.bf16.mxu0 0
    %2466 = vmatpush1.bf16.xpose.msra.mxu0 0
    %2467 = vmatprep.subr.bf16.mxu0 0
    %2468 = vmatpush1.bf16.xpose.msra.mxu0 0
    %2469 = vmatprep.subr.bf16.mxu0 0
    %2470 = vmatpush1.bf16.xpose.msra.mxu0 0
    %2471 = vmatprep.subr.bf16.mxu0 0
    %2472 = vmatpush1.bf16.xpose.msra.mxu0 0
    %2473 = vmatprep.mubr.bf16.mxu0 0
    %2474 = vmatmul.mubr.bf16.gmra.mrb[0].mxu0 %v2436
    %v2475 = vpop.f32.mrb[0].mxu0
    %v2476 = vadd.f32 %v691, %v2475
    %v2477 = vpop.f32.mrb[0].mxu0
    %v2478 = vpop.f32.mrb[0].mxu0
    %v2479 = vpop.f32.mrb[0].mxu0
    %2480 = vdwg.mxu0
    %v2481 = vsel %vm278, %v2476, -inf
    %2482 = vmax.xlane.f32.xlu0 %v2481
    %v2483 = vpop.xlane.xlu0 %2482
    %v2484 = vsub.f32 %v2476, %v2483
    %v2485 = vmul.f32 %v2484, 1.442695
    %v2486 = vpow.pop %v2485
    %v2487 = vsel %vm278, %v2486, 0.0
    %2488 = vadd.xlane.f32.xlu0 %v2487
    %v2489 = vpop.xlane.xlu0 %2488
    %v2490 = vrcp.pop %v2489
    %v2491 = vmul.f32 %v2486, %v2490
    %v2492 = vpack.c.bf16 %v2491, %v2491
    %2493 = vrot.lane.b32.xlu0 %v2163, 80
    %v2494 = vpop.permute.xlu0 %2493
    %v2496 = vsel %vm278, %v2492, 0
    %v2499 = vsel %vm295, %v2494, 0
    %2501 = vmatprep.subr.bf16.mxu0 0
    %2502 = vmatpush1.bf16.msra.mxu0 %v2499
    %2503 = vmatprep.subr.bf16.mxu0 0
    %2504 = vmatpush1.bf16.msra.mxu0 0
    %2505 = vmatprep.subr.bf16.mxu0 0
    %2506 = vmatpush1.bf16.msra.mxu0 0
    %2507 = vmatprep.subr.bf16.mxu0 0
    %2508 = vmatpush1.bf16.msra.mxu0 0
    %2509 = vmatprep.subr.bf16.mxu0 0
    %2510 = vmatpush1.bf16.msra.mxu0 0
    %2511 = vmatprep.subr.bf16.mxu0 0
    %2512 = vmatpush1.bf16.msra.mxu0 0
    %2513 = vmatprep.subr.bf16.mxu0 0
    %2514 = vmatpush1.bf16.msra.mxu0 0
    %2515 = vmatprep.subr.bf16.mxu0 0
    %2516 = vmatpush1.bf16.msra.mxu0 0
    %2517 = vmatprep.subr.bf16.mxu0 0
    %2518 = vmatpush1.bf16.msra.mxu0 0
    %2519 = vmatprep.subr.bf16.mxu0 0
    %2520 = vmatpush1.bf16.msra.mxu0 0
    %2521 = vmatprep.subr.bf16.mxu0 0
    %2522 = vmatpush1.bf16.msra.mxu0 0
    %2523 = vmatprep.subr.bf16.mxu0 0
    %2524 = vmatpush1.bf16.msra.mxu0 0
    %2525 = vmatprep.subr.bf16.mxu0 0
    %2526 = vmatpush1.bf16.msra.mxu0 0
    %2527 = vmatprep.subr.bf16.mxu0 0
    %2528 = vmatpush1.bf16.msra.mxu0 0
    %2529 = vmatprep.subr.bf16.mxu0 0
    %2530 = vmatpush1.bf16.msra.mxu0 0
    %2531 = vmatprep.subr.bf16.mxu0 0
    %2532 = vmatpush1.bf16.msra.mxu0 0
    %2533 = vmatprep.mubr.bf16.mxu0 0
    %2534 = vmatmul.mubr.bf16.gmra.mrb[0].mxu0 %v2496
    %v2535 = vpop.f32.mrb[0].mxu0
    %v2536 = vadd.f32 0.0, %v2535
    %v2537 = vpop.f32.mrb[0].mxu0
    %v2538 = vpop.f32.mrb[0].mxu0
    %v2539 = vpop.f32.mrb[0].mxu0
    %2540 = vdwg.mxu0
    %2542 = vrot.lane.b32.xlu0 %v2316, 16
    %v2543 = vpop.permute.xlu0 %2542
    %2546 = vrot.lane.b32.xlu0 %v2426, 32
    %v2547 = vpop.permute.xlu0 %2546
    %2550 = vrot.lane.b32.xlu0 %v2536, 48
    %v2551 = vpop.permute.xlu0 %2550
    %v2553 = vsel %vm231, %v2205, %v2543
    %v2554 = vsel %vm683, %v2553, %v2547
    %v2555 = vsel %vm685, %v2554, %v2551
    %s2556 = scalar_lea.vmem %s7, 32
    %v2557 = vld [vmem:[%s2556] sm:$0xf]
    %v2558 = vld [vmem:[%s2556 + $0x4] sm:$0xf]
    %v2559 = vld [vmem:[%s2556 + $0x8] sm:$0xf]
    %v2560 = vld [vmem:[%s2556 + $0xc] sm:$0xf]
    %v2561 = vld [vmem:[%s2556 + $0x10] sm:$0xf]
    %v2562 = vld [vmem:[%s2556 + $0x14] sm:$0xf]
    %v2563 = vld [vmem:[%s2556 + $0x18] sm:$0xf]
    %v2564 = vld [vmem:[%s2556 + $0x1c] sm:$0xf]
    %v2565 = vpack.c.bf16 %v2555, %v2100
    %s2566 = scalar_lea.vmem %s8, 1
    %v2567 = vld [vmem:[%s2566] sm:$0x1]
    %v2569 = vlaneseq
    %v2570 = vshrl.u32 %v2569, 7
    %v2571 = vsub.s32 0, %v2570
    %v2572 = vrot.slane %v2567, %v2571
    %v2582 = vunpack.c.l.b16 %v2557
    %v2583 = vunpack.c.l.b16 %v2558
    %v2584 = vunpack.c.l.b16 %v2559
    %v2585 = vunpack.c.l.b16 %v2560
    %v2586 = vunpack.c.l.b16 %v2561
    %v2587 = vunpack.c.l.b16 %v2562
    %v2588 = vunpack.c.l.b16 %v2563
    %v2589 = vunpack.c.l.b16 %v2564
    %v2590 = vpack.c.b16 %v2583, %v2582
    %v2591 = vpack.c.b16 %v2585, %v2584
    %v2592 = vpack.c.b16 %v2587, %v2586
    %v2593 = vpack.c.b16 %v2589, %v2588
    %v2599 = vsel %vm71, %v2565, 0
    %2601 = vmatprep.subr.bf16.mxu0 0
    %2602 = vmatpush1.bf16.msra.mxu0 %v2590
    %2603 = vmatprep.subr.bf16.mxu0 0
    %2604 = vmatpush1.bf16.msra.mxu0 %v2591
    %2605 = vmatprep.subr.bf16.mxu0 0
    %2606 = vmatpush1.bf16.msra.mxu0 %v2592
    %2607 = vmatprep.subr.bf16.mxu0 0
    %2608 = vmatpush1.bf16.msra.mxu0 %v2593
    %2609 = vmatprep.subr.bf16.mxu0 0
    %2610 = vmatpush1.bf16.msra.mxu0 0
    %2611 = vmatprep.subr.bf16.mxu0 0
    %2612 = vmatpush1.bf16.msra.mxu0 0
    %2613 = vmatprep.subr.bf16.mxu0 0
    %2614 = vmatpush1.bf16.msra.mxu0 0
    %2615 = vmatprep.subr.bf16.mxu0 0
    %2616 = vmatpush1.bf16.msra.mxu0 0
    %2617 = vmatprep.subr.bf16.mxu0 0
    %2618 = vmatpush1.bf16.msra.mxu0 0
    %2619 = vmatprep.subr.bf16.mxu0 0
    %2620 = vmatpush1.bf16.msra.mxu0 0
    %2621 = vmatprep.subr.bf16.mxu0 0
    %2622 = vmatpush1.bf16.msra.mxu0 0
    %2623 = vmatprep.subr.bf16.mxu0 0
    %2624 = vmatpush1.bf16.msra.mxu0 0
    %2625 = vmatprep.subr.bf16.mxu0 0
    %2626 = vmatpush1.bf16.msra.mxu0 0
    %2627 = vmatprep.subr.bf16.mxu0 0
    %2628 = vmatpush1.bf16.msra.mxu0 0
    %2629 = vmatprep.subr.bf16.mxu0 0
    %2630 = vmatpush1.bf16.msra.mxu0 0
    %2631 = vmatprep.subr.bf16.mxu0 0
    %2632 = vmatpush1.bf16.msra.mxu0 0
    %2633 = vmatprep.mubr.bf16.mxu0 0
    %2634 = vmatmul.mubr.bf16.gmra.mrb[0].mxu0 %v2599
    %v2635 = vpop.f32.mrb[0].mxu0
    %v2636 = vadd.f32 %v2572, %v2635
    %v2637 = vpop.f32.mrb[0].mxu0
    %v2638 = vpop.f32.mrb[0].mxu0
    %v2639 = vadd.f32 %v2572, %v2638
    %v2640 = vpop.f32.mrb[0].mxu0
    %2641 = vdwg.mxu0
    %v2642 = vadd.f32 %v2636, %v1535
    %v2643 = vadd.f32 %v2639, %v1536
    %s2644 = scalar_lea.vmem %s9, 1
    %v2645 = vld [vmem:[%s2644] sm:$0x1]
    %s2646 = scalar_lea.vmem %s10, 1
    %v2647 = vld [vmem:[%s2646] sm:$0x1]
    %v2648 = vsel %vm71, %v2642, 0.0
    %2649 = vadd.xlane.f32.xlu0 %v2648
    %v2650 = vpop.xlane.xlu0 %2649
    %v2651 = vsel %vm71, %v2643, 0.0
    %2652 = vadd.xlane.f32.xlu0 %v2651
    %v2653 = vpop.xlane.xlu0 %2652
    %v2654 = vmul.f32 %v2650, %v78
    %v2655 = vmul.f32 %v2653, %v78
    %v2656 = vsub.f32 %v2642, %v2654
    %v2657 = vsub.f32 %v2643, %v2655
    %v2658 = vmul.f32 %v2656, %v2656
    %v2659 = vmul.f32 %v2657, %v2657
    %v2660 = vsel %vm71, %v2658, 0.0
    %2661 = vadd.xlane.f32.xlu0 %v2660
    %v2662 = vpop.xlane.xlu0 %2661
    %v2663 = vsel %vm71, %v2659, 0.0
    %2664 = vadd.xlane.f32.xlu0 %v2663
    %v2665 = vpop.xlane.xlu0 %2664
    %v2666 = vmul.f32 %v2662, %v78
    %v2667 = vmul.f32 %v2665, %v78
    %v2668 = vadd.f32 %v2666, 1e-12
    %v2669 = vadd.f32 %v2667, 1e-12
    %v2670 = vrsqrt.pop %v2668
    %v2671 = vrsqrt.pop %v2669
    %v2672 = vmul.f32 %v2656, %v2670
    %v2673 = vmul.f32 %v2657, %v2671
    %v2675 = vlaneseq
    %v2676 = vshrl.u32 %v2675, 7
    %v2677 = vsub.s32 0, %v2676
    %v2678 = vrot.slane %v2645, %v2677
    %v2680 = vmul.f32 %v2672, %v2678
    %v2681 = vmul.f32 %v2673, %v2678
    %v2683 = vlaneseq
    %v2684 = vshrl.u32 %v2683, 7
    %v2685 = vsub.s32 0, %v2684
    %v2686 = vrot.slane %v2647, %v2685
    %v2688 = vadd.f32 %v2680, %v2686
    %v2689 = vadd.f32 %v2681, %v2686
    %s2690 = scalar_lea.vmem %s11, 32
    %v2691 = vld [vmem:[%s2690] sm:$0xf]
    %v2692 = vld [vmem:[%s2690 + $0x4] sm:$0xf]
    %v2693 = vld [vmem:[%s2690 + $0x8] sm:$0xf]
    %v2694 = vld [vmem:[%s2690 + $0xc] sm:$0xf]
    %v2695 = vld [vmem:[%s2690 + $0x10] sm:$0xf]
    %v2696 = vld [vmem:[%s2690 + $0x14] sm:$0xf]
    %v2697 = vld [vmem:[%s2690 + $0x18] sm:$0xf]
    %v2698 = vld [vmem:[%s2690 + $0x1c] sm:$0xf]
    %v2699 = vpack.c.bf16 %v2689, %v2688
    %s2700 = scalar_lea.vmem %s12, 1
    %v2701 = vld [vmem:[%s2700] sm:$0x1]
    %v2703 = vlaneseq
    %v2704 = vshrl.u32 %v2703, 7
    %v2705 = vsub.s32 0, %v2704
    %v2706 = vrot.slane %v2701, %v2705
    %v2716 = vunpack.c.l.b16 %v2691
    %v2717 = vunpack.c.l.b16 %v2692
    %v2718 = vunpack.c.l.b16 %v2693
    %v2719 = vunpack.c.l.b16 %v2694
    %v2720 = vunpack.c.l.b16 %v2695
    %v2721 = vunpack.c.l.b16 %v2696
    %v2722 = vunpack.c.l.b16 %v2697
    %v2723 = vunpack.c.l.b16 %v2698
    %v2724 = vpack.c.b16 %v2717, %v2716
    %v2725 = vpack.c.b16 %v2719, %v2718
    %v2726 = vpack.c.b16 %v2721, %v2720
    %v2727 = vpack.c.b16 %v2723, %v2722
    %v2733 = vsel %vm71, %v2699, 0
    %2735 = vmatprep.subr.bf16.mxu0 0
    %2736 = vmatpush1.bf16.msra.mxu0 %v2724
    %2737 = vmatprep.subr.bf16.mxu0 0
    %2738 = vmatpush1.bf16.msra.mxu0 %v2725
    %2739 = vmatprep.subr.bf16.mxu0 0
    %2740 = vmatpush1.bf16.msra.mxu0 %v2726
    %2741 = vmatprep.subr.bf16.mxu0 0
    %2742 = vmatpush1.bf16.msra.mxu0 %v2727
    %2743 = vmatprep.subr.bf16.mxu0 0
    %2744 = vmatpush1.bf16.msra.mxu0 0
    %2745 = vmatprep.subr.bf16.mxu0 0
    %2746 = vmatpush1.bf16.msra.mxu0 0
    %2747 = vmatprep.subr.bf16.mxu0 0
    %2748 = vmatpush1.bf16.msra.mxu0 0
    %2749 = vmatprep.subr.bf16.mxu0 0
    %2750 = vmatpush1.bf16.msra.mxu0 0
    %2751 = vmatprep.subr.bf16.mxu0 0
    %2752 = vmatpush1.bf16.msra.mxu0 0
    %2753 = vmatprep.subr.bf16.mxu0 0
    %2754 = vmatpush1.bf16.msra.mxu0 0
    %2755 = vmatprep.subr.bf16.mxu0 0
    %2756 = vmatpush1.bf16.msra.mxu0 0
    %2757 = vmatprep.subr.bf16.mxu0 0
    %2758 = vmatpush1.bf16.msra.mxu0 0
    %2759 = vmatprep.subr.bf16.mxu0 0
    %2760 = vmatpush1.bf16.msra.mxu0 0
    %2761 = vmatprep.subr.bf16.mxu0 0
    %2762 = vmatpush1.bf16.msra.mxu0 0
    %2763 = vmatprep.subr.bf16.mxu0 0
    %2764 = vmatpush1.bf16.msra.mxu0 0
    %2765 = vmatprep.subr.bf16.mxu0 0
    %2766 = vmatpush1.bf16.msra.mxu0 0
    %2767 = vmatprep.mubr.bf16.mxu0 0
    %2768 = vmatmul.mubr.bf16.gmra.mrb[0].mxu0 %v2733
    %v2769 = vpop.f32.mrb[0].mxu0
    %v2770 = vadd.f32 %v2706, %v2769
    %v2771 = vpop.f32.mrb[0].mxu0
    %v2772 = vpop.f32.mrb[0].mxu0
    %v2773 = vadd.f32 %v2706, %v2772
    %v2774 = vpop.f32.mrb[0].mxu0
    %2775 = vdwg.mxu0
    %v2776 = vmul.f32 %v2770, 0.5
    %v2777 = vmul.f32 %v2773, 0.5
    %v2778 = vmul.f32 %v2770, 0.044715
    %v2779 = vmul.f32 %v2773, 0.044715
    %v2780 = vmul.f32 %v2778, %v2770
    %v2781 = vmul.f32 %v2779, %v2773
    %v2782 = vmul.f32 %v2780, %v2770
    %v2783 = vmul.f32 %v2781, %v2773
    %v2784 = vadd.f32 %v2770, %v2782
    %v2785 = vadd.f32 %v2773, %v2783
    %v2786 = vmul.f32 %v2784, 0.7978846
    %v2787 = vmul.f32 %v2785, 0.7978846
    %v2788 = vtanh.pop %v2786
    %v2789 = vtanh.pop %v2787
    %v2790 = vadd.f32 %v2788, 1.0
    %v2791 = vadd.f32 %v2789, 1.0
    %v2792 = vmul.f32 %v2776, %v2790
    %v2793 = vmul.f32 %v2777, %v2791
    %s2794 = scalar_lea.vmem %s13, 64
    %v2795 = vld [vmem:[%s2794] sm:$0xf]
    %v2796 = vld [vmem:[%s2794 + $0x4] sm:$0xf]
    %v2797 = vld [vmem:[%s2794 + $0x8] sm:$0xf]
    %v2798 = vld [vmem:[%s2794 + $0xc] sm:$0xf]
    %v2799 = vld [vmem:[%s2794 + $0x10] sm:$0xf]
    %v2800 = vld [vmem:[%s2794 + $0x14] sm:$0xf]
    %v2801 = vld [vmem:[%s2794 + $0x18] sm:$0xf]
    %v2802 = vld [vmem:[%s2794 + $0x1c] sm:$0xf]
    %v2803 = vld [vmem:[%s2794 + $0x20] sm:$0xf]
    %v2804 = vld [vmem:[%s2794 + $0x24] sm:$0xf]
    %v2805 = vld [vmem:[%s2794 + $0x28] sm:$0xf]
    %v2806 = vld [vmem:[%s2794 + $0x2c] sm:$0xf]
    %v2807 = vld [vmem:[%s2794 + $0x30] sm:$0xf]
    %v2808 = vld [vmem:[%s2794 + $0x34] sm:$0xf]
    %v2809 = vld [vmem:[%s2794 + $0x38] sm:$0xf]
    %v2810 = vld [vmem:[%s2794 + $0x3c] sm:$0xf]
    %v2811 = vpack.c.bf16 %v2793, %v2792
    %s2812 = scalar_lea.vmem %s14, 1
    %v2813 = vld [vmem:[%s2812] sm:$0x1]
    %v2815 = vlaneseq
    %v2816 = vshrl.u32 %v2815, 7
    %v2817 = vsub.s32 0, %v2816
    %v2818 = vrot.slane %v2813, %v2817
    %v2836 = vunpack.c.l.b16 %v2795
    %v2837 = vunpack.c.l.b16 %v2796
    %v2838 = vunpack.c.l.b16 %v2797
    %v2839 = vunpack.c.l.b16 %v2798
    %v2840 = vunpack.c.l.b16 %v2799
    %v2841 = vunpack.c.l.b16 %v2800
    %v2842 = vunpack.c.l.b16 %v2801
    %v2843 = vunpack.c.l.b16 %v2802
    %v2844 = vunpack.c.l.b16 %v2803
    %v2845 = vunpack.c.l.b16 %v2804
    %v2846 = vunpack.c.l.b16 %v2805
    %v2847 = vunpack.c.l.b16 %v2806
    %v2848 = vunpack.c.l.b16 %v2807
    %v2849 = vunpack.c.l.b16 %v2808
    %v2850 = vunpack.c.l.b16 %v2809
    %v2851 = vunpack.c.l.b16 %v2810
    %v2852 = vpack.c.b16 %v2837, %v2836
    %v2853 = vpack.c.b16 %v2839, %v2838
    %v2854 = vpack.c.b16 %v2841, %v2840
    %v2855 = vpack.c.b16 %v2843, %v2842
    %v2856 = vpack.c.b16 %v2845, %v2844
    %v2857 = vpack.c.b16 %v2847, %v2846
    %v2858 = vpack.c.b16 %v2849, %v2848
    %v2859 = vpack.c.b16 %v2851, %v2850
    %2868 = vmatprep.subr.bf16.mxu0 0
    %2869 = vmatpush1.bf16.msra.mxu0 %v2852
    %2870 = vmatprep.subr.bf16.mxu0 0
    %2871 = vmatpush1.bf16.msra.mxu0 %v2853
    %2872 = vmatprep.subr.bf16.mxu0 0
    %2873 = vmatpush1.bf16.msra.mxu0 %v2854
    %2874 = vmatprep.subr.bf16.mxu0 0
    %2875 = vmatpush1.bf16.msra.mxu0 %v2855
    %2876 = vmatprep.subr.bf16.mxu0 0
    %2877 = vmatpush1.bf16.msra.mxu0 %v2856
    %2878 = vmatprep.subr.bf16.mxu0 0
    %2879 = vmatpush1.bf16.msra.mxu0 %v2857
    %2880 = vmatprep.subr.bf16.mxu0 0
    %2881 = vmatpush1.bf16.msra.mxu0 %v2858
    %2882 = vmatprep.subr.bf16.mxu0 0
    %2883 = vmatpush1.bf16.msra.mxu0 %v2859
    %2884 = vmatprep.subr.bf16.mxu0 0
    %2885 = vmatpush1.bf16.msra.mxu0 0
    %2886 = vmatprep.subr.bf16.mxu0 0
    %2887 = vmatpush1.bf16.msra.mxu0 0
    %2888 = vmatprep.subr.bf16.mxu0 0
    %2889 = vmatpush1.bf16.msra.mxu0 0
    %2890 = vmatprep.subr.bf16.mxu0 0
    %2891 = vmatpush1.bf16.msra.mxu0 0
    %2892 = vmatprep.subr.bf16.mxu0 0
    %2893 = vmatpush1.bf16.msra.mxu0 0
    %2894 = vmatprep.subr.bf16.mxu0 0
    %2895 = vmatpush1.bf16.msra.mxu0 0
    %2896 = vmatprep.subr.bf16.mxu0 0
    %2897 = vmatpush1.bf16.msra.mxu0 0
    %2898 = vmatprep.subr.bf16.mxu0 0
    %2899 = vmatpush1.bf16.msra.mxu0 0
    %2900 = vmatprep.mubr.bf16.mxu0 0
    %2901 = vmatmul.mubr.bf16.gmra.mrb[0].mxu0 %v2811
    %v2902 = vpop.f32.mrb[0].mxu0
    %v2903 = vadd.f32 %v2818, %v2902
    %v2904 = vpop.f32.mrb[0].mxu0
    %v2905 = vpop.f32.mrb[0].mxu0
    %v2906 = vadd.f32 %v2818, %v2905
    %v2907 = vpop.f32.mrb[0].mxu0
    %2908 = vdwg.mxu0
    %v2909 = vadd.f32 %v2903, %v2688
    %v2910 = vadd.f32 %v2906, %v2689
    %s2911 = scalar_lea.vmem %s15, 1
    %v2912 = vld [vmem:[%s2911] sm:$0x1]
    %s2913 = scalar_lea.vmem %s16, 1
    %v2914 = vld [vmem:[%s2913] sm:$0x1]
    %v2915 = vsel %vm71, %v2909, 0.0
    %2916 = vadd.xlane.f32.xlu0 %v2915
    %v2917 = vpop.xlane.xlu0 %2916
    %v2918 = vsel %vm71, %v2910, 0.0
    %2919 = vadd.xlane.f32.xlu0 %v2918
    %v2920 = vpop.xlane.xlu0 %2919
    %v2921 = vmul.f32 %v2917, %v78
    %v2922 = vmul.f32 %v2920, %v78
    %v2923 = vsub.f32 %v2909, %v2921
    %v2924 = vsub.f32 %v2910, %v2922
    %v2925 = vmul.f32 %v2923, %v2923
    %v2926 = vmul.f32 %v2924, %v2924
    %v2927 = vsel %vm71, %v2925, 0.0
    %2928 = vadd.xlane.f32.xlu0 %v2927
    %v2929 = vpop.xlane.xlu0 %2928
    %v2930 = vsel %vm71, %v2926, 0.0
    %2931 = vadd.xlane.f32.xlu0 %v2930
    %v2932 = vpop.xlane.xlu0 %2931
    %v2933 = vmul.f32 %v2929, %v78
    %v2934 = vmul.f32 %v2932, %v78
    %v2935 = vadd.f32 %v2933, 1e-12
    %v2936 = vadd.f32 %v2934, 1e-12
    %v2937 = vrsqrt.pop %v2935
    %v2938 = vrsqrt.pop %v2936
    %v2939 = vmul.f32 %v2923, %v2937
    %v2940 = vmul.f32 %v2924, %v2938
    %v2942 = vlaneseq
    %v2943 = vshrl.u32 %v2942, 7
    %v2944 = vsub.s32 0, %v2943
    %v2945 = vrot.slane %v2912, %v2944
    %v2947 = vmul.f32 %v2939, %v2945
    %v2948 = vmul.f32 %v2940, %v2945
    %v2950 = vlaneseq
    %v2951 = vshrl.u32 %v2950, 7
    %v2952 = vsub.s32 0, %v2951
    %v2953 = vrot.slane %v2914, %v2952
    %v2955 = vadd.f32 %v2947, %v2953
    %v2956 = vadd.f32 %v2948, %v2953
    %v2958 = vrot.slane %v2956, 7
    %vm2960 = vcmask 1040384
    %v2961 = vsel %vm2960, %v2955, %v2958
    %v2962 = vld [vmem:[%s17] sm:$0xf]
    %v2963 = vld [vmem:[%s17 + $0x4] sm:$0xf]
    %v2964 = vld [vmem:[%s17 + $0x8] sm:$0xf]
    %v2965 = vld [vmem:[%s17 + $0xc] sm:$0xf]
    %v2966 = vld [vmem:[%s17 + $0x10] sm:$0xf]
    %v2967 = vld [vmem:[%s17 + $0x14] sm:$0xf]
    %v2968 = vld [vmem:[%s17 + $0x18] sm:$0xf]
    %v2969 = vld [vmem:[%s17 + $0x1c] sm:$0xf]
    %v2970 = vpack.c.bf16 %v2961, %v2961
    %v2971 = vld [vmem:[%s18] sm:$0x1]
    %v2973 = vlaneseq
    %v2974 = vshrl.u32 %v2973, 7
    %v2975 = vsub.s32 0, %v2974
    %v2976 = vrot.slane %v2971, %v2975
    %v2986 = vunpack.c.l.b16 %v2962
    %v2987 = vunpack.c.l.b16 %v2963
    %v2988 = vunpack.c.l.b16 %v2964
    %v2989 = vunpack.c.l.b16 %v2965
    %v2990 = vunpack.c.l.b16 %v2966
    %v2991 = vunpack.c.l.b16 %v2967
    %v2992 = vunpack.c.l.b16 %v2968
    %v2993 = vunpack.c.l.b16 %v2969
    %v2994 = vpack.c.b16 %v2987, %v2986
    %v2995 = vpack.c.b16 %v2989, %v2988
    %v2996 = vpack.c.b16 %v2991, %v2990
    %v2997 = vpack.c.b16 %v2993, %v2992
    %v3003 = vsel %vm71, %v2970, 0
    %3005 = vmatprep.subr.bf16.mxu0 0
    %3006 = vmatpush1.bf16.msra.mxu0 %v2994
    %3007 = vmatprep.subr.bf16.mxu0 0
    %3008 = vmatpush1.bf16.msra.mxu0 %v2995
    %3009 = vmatprep.subr.bf16.mxu0 0
    %3010 = vmatpush1.bf16.msra.mxu0 %v2996
    %3011 = vmatprep.subr.bf16.mxu0 0
    %3012 = vmatpush1.bf16.msra.mxu0 %v2997
    %3013 = vmatprep.subr.bf16.mxu0 0
    %3014 = vmatpush1.bf16.msra.mxu0 0
    %3015 = vmatprep.subr.bf16.mxu0 0
    %3016 = vmatpush1.bf16.msra.mxu0 0
    %3017 = vmatprep.subr.bf16.mxu0 0
    %3018 = vmatpush1.bf16.msra.mxu0 0
    %3019 = vmatprep.subr.bf16.mxu0 0
    %3020 = vmatpush1.bf16.msra.mxu0 0
    %3021 = vmatprep.subr.bf16.mxu0 0
    %3022 = vmatpush1.bf16.msra.mxu0 0
    %3023 = vmatprep.subr.bf16.mxu0 0
    %3024 = vmatpush1.bf16.msra.mxu0 0
    %3025 = vmatprep.subr.bf16.mxu0 0
    %3026 = vmatpush1.bf16.msra.mxu0 0
    %3027 = vmatprep.subr.bf16.mxu0 0
    %3028 = vmatpush1.bf16.msra.mxu0 0
    %3029 = vmatprep.subr.bf16.mxu0 0
    %3030 = vmatpush1.bf16.msra.mxu0 0
    %3031 = vmatprep.subr.bf16.mxu0 0
    %3032 = vmatpush1.bf16.msra.mxu0 0
    %3033 = vmatprep.subr.bf16.mxu0 0
    %3034 = vmatpush1.bf16.msra.mxu0 0
    %3035 = vmatprep.subr.bf16.mxu0 0
    %3036 = vmatpush1.bf16.msra.mxu0 0
    %3037 = vmatprep.mubr.bf16.mxu0 0
    %3038 = vmatmul.mubr.bf16.gmra.mrb[0].mxu0 %v3003
    %v3039 = vpop.f32.mrb[0].mxu0
    %v3040 = vadd.f32 %v2976, %v3039
    %v3041 = vpop.f32.mrb[0].mxu0
    %v3042 = vpop.f32.mrb[0].mxu0
    %v3043 = vpop.f32.mrb[0].mxu0
    %3044 = vdwg.mxu0
    %vm3045 = vcmask 25600
    %3046 = vst.msk [vmem:[#allocation2] sm:$0x3] %vm3045, %v3040
    // Predicated region
    $region78: #{forward.1} parent=1 // pred_check
      _
    $region79: #{forward.1} parent=1 // pred_check_branch
      %3048 = sbr.rel (0) target = $region81
    $region80: #{forward.1} parent=1 // pred_region
      %s3050 = ssub.s32 32, 32
      %3051 = vsyncadd [#allocation3], %s3050
      %s3053 = sshll.u32 [#allocation2], 4
      %s3054 = int_to_ptr.vmem [resolvable:$true] %s3053
      %3056 = dma.vmem_to_hbm [thread:$0]  %s3054, 32, %s19, [#allocation3]
    $region81: #{forward.1} parent=1 // pred_fallthru
      _
    // Predicated region
    $region82: #{forward.1} parent=1 // pred_check
      _
    $region83: #{forward.1} parent=1 // pred_check_branch
      %3058 = sbr.rel (0) target = $region85
    $region84: #{forward.1} parent=1 // pred_region
      %3059 = dma.done [#allocation3], 32
    $region85: #{forward.1} parent=1 // pred_fallthru
      _
    %3060 = vsyncpa [#allocation3], 1

</llo_original>
